<compile_context>
chip_gen: v5e
topology: v5e:2x2
jax: 0.10.0
libtpu: 0.0.40
codegen_flags: <defaults>
</compile_context>

<pallas_src>
import jax
import jax.numpy as jnp
from jax import lax
from jax.experimental import pallas as pl
from jax.experimental.pallas import tpu as pltpu

EPS = 1e-5
LANES = 128


def _round_up(x, m):
    return (x + m - 1) // m * m


def basic_block_kernel(x_ref, w1_ref, g1_ref, b1_ref, w2_ref, g2_ref, b2_ref,
                       o_ref, buf_ref):
    # x_ref  : (N, H, W, C)       f32   input / residual
    # w*_ref : (9, C, C)          bf16  conv taps, row-major over (kh, kw)
    # g*/b*  : (1, C)             f32   BN gamma / beta
    # o_ref  : (N, H, W, C)       f32   output
    # buf_ref: (N, H+2, Wbuf, C)  f32   zero-padded conv-input slab (reused by both convs)
    N, H, W, C = x_ref.shape
    Wfull = _round_up(W, 8)              # conv operand width (cols >= W are junk)
    M = N * H * Wfull                    # batched matmul M dimension
    cnt = float(N * H * W)

    def conv3x3(w_ref):
        """3x3/s1/p1 conv of the whole batch: 9 MXU dots total.

        Each dw-shifted window of the padded slab is loaded once and shared by
        the three kh taps via free leading-dim slices; the operand is flattened
        to (N*H*Wfull, C) so every (C, C) weight tap sees the full batch in one
        matmul. Tap partial sums accumulate in f32 vregs (no VMEM accumulator)."""
        acc = None
        for dw in range(3):
            win = buf_ref[:, :, dw:dw + Wfull, :]          # (N, H+2, Wfull, C) f32
            for dh in range(3):
                op = win[:, dh:dh + H].reshape(M, C)       # free slice + reshape
                d = jnp.dot(op.astype(jnp.bfloat16), w_ref[3 * dh + dw],
                            preferred_element_type=jnp.float32)
                acc = d if acc is None else acc + d
        return acc.reshape(N, H, Wfull, C)

    def bn_affine(t, g_ref, b_ref):
        """BN scale/shift from two-pass (mean-centred) batch statistics."""
        v = t[:, :, :W, :]
        s = jnp.sum(jnp.sum(jnp.sum(v, axis=0, keepdims=True),
                            axis=1, keepdims=True), axis=2, keepdims=True)
        mean = s / cnt
        c = v - mean
        q = jnp.sum(jnp.sum(jnp.sum(c * c, axis=0, keepdims=True),
                            axis=1, keepdims=True), axis=2, keepdims=True)
        var = q / cnt                                      # biased batch variance
        scale = g_ref[...].reshape(1, 1, 1, C) * lax.rsqrt(var + EPS)
        shift = b_ref[...].reshape(1, 1, 1, C) - mean * scale
        return scale, shift

    # ---- stage the zero-padded input slab -----------------------------------
    # One full-width unmasked zero pass (halo rows, pad columns, junk columns),
    # then a single interior store of the activation.
    buf_ref[...] = jnp.zeros(buf_ref.shape, jnp.float32)
    buf_ref[:, 1:H + 1, 1:W + 1, :] = x_ref[...]

    # ---- conv1 -> bn1 -> relu ------------------------------------------------
    t1 = conv3x3(w1_ref)
    sc1, sh1 = bn_affine(t1, g1_ref, b1_ref)
    y1 = jnp.maximum(t1[:, :, :W, :] * sc1 + sh1, 0.0)
    buf_ref[:, 1:H + 1, 1:W + 1, :] = y1                   # halo/pad cols stay zero

    # ---- conv2 -> bn2 -> +residual -> relu -----------------------------------
    t2 = conv3x3(w2_ref)
    sc2, sh2 = bn_affine(t2, g2_ref, b2_ref)
    o_ref[...] = jnp.maximum(t2[:, :, :W, :] * sc2 + sh2 + x_ref[...], 0.0)


@jax.jit
def basic_block(x_nchw, w1, g1, b1, w2, g2, b2):
    """Fused BasicBlock forward.

    x_nchw: (N, C, H, W); w*: (C, C, 3, 3) PyTorch layout; g*/b*: (C,).
    Supports the stride=1 / in_planes == planes configuration of the module.
    """
    N, C, H, W = x_nchw.shape
    assert w1.shape == (C, C, 3, 3) and w2.shape == (C, C, 3, 3), \
        "kernel supports stride=1 BasicBlock with in_planes == planes"

    Cp = _round_up(C, LANES)             # lane-dense channel count
    Wfull = _round_up(W, 8)              # conv operand width
    Wbuf = _round_up(Wfull + 2, 8)       # padded-slab width (>= W + 2)

    x = jnp.transpose(x_nchw, (0, 2, 3, 1)).astype(jnp.float32)      # NHWC
    if Cp != C:
        x = jnp.pad(x, ((0, 0), (0, 0), (0, 0), (0, Cp - C)))

    def prep_w(w):
        wk = jnp.transpose(w, (2, 3, 1, 0)).reshape(9, C, C)  # (kh*3+kw, Cin, Cout)
        if Cp != C:
            wk = jnp.pad(wk, ((0, 0), (0, Cp - C), (0, Cp - C)))
        return wk.astype(jnp.bfloat16)

    def prep_v(v):
        v = v.astype(jnp.float32).reshape(1, C)
        if Cp != C:
            v = jnp.pad(v, ((0, 0), (0, Cp - C)))
        return v

    # Whole batch is VMEM-resident in one grid step; derive the scoped VMEM
    # budget from the actual buffer sizes instead of hardcoding it.
    buf_bytes = N * (H + 2) * Wbuf * Cp * 4
    io_bytes = 2 * N * H * W * Cp * 4
    w_bytes = 2 * 9 * Cp * Cp * 2
    vmem_limit = min(int(1.5 * (buf_bytes + io_bytes + w_bytes)) + (8 << 20),
                     100 << 20)

    out = pl.pallas_call(
        basic_block_kernel,
        out_shape=jax.ShapeDtypeStruct((N, H, W, Cp), jnp.float32),
        in_specs=[pl.BlockSpec(memory_space=pltpu.MemorySpace.VMEM)] * 7,
        out_specs=pl.BlockSpec(memory_space=pltpu.MemorySpace.VMEM),
        scratch_shapes=[
            pltpu.VMEM((N, H + 2, Wbuf, Cp), jnp.float32),   # padded conv input slab
        ],
        compiler_params=pltpu.CompilerParams(vmem_limit_bytes=vmem_limit),
    )(x, prep_w(w1), prep_v(g1), prep_v(b1), prep_w(w2), prep_v(g2), prep_v(b2))

    if Cp != C:
        out = out[..., :C]
    return jnp.transpose(out, (0, 3, 1, 2))                          # back to NCHW


def _reference(x, w1, g1, b1, w2, g2, b2):
    """Pure-JAX f32 reference of the BasicBlock forward (training-mode BN)."""
    def conv(a, w):
        return lax.conv_general_dilated(a, w, (1, 1), ((1, 1), (1, 1)),
                                        dimension_numbers=("NCHW", "OIHW", "NCHW"))

    def bn(a, g, b):
        mean = jnp.mean(a, axis=(0, 2, 3), keepdims=True)
        var = jnp.mean((a - mean) ** 2, axis=(0, 2, 3), keepdims=True)
        return (a - mean) * lax.rsqrt(var + EPS) * g.reshape(1, -1, 1, 1) \
            + b.reshape(1, -1, 1, 1)

    out = jax.nn.relu(bn(conv(x, w1), g1, b1))
    out = bn(conv(out, w2), g2, b2) + x
    return jax.nn.relu(out)


if __name__ == "__main__":
    key = jax.random.PRNGKey(0)
    # Small board-game-sized demo; channels match the module default (128) so
    # the lane axis is fully dense.
    N, C, H, W = 2, 128, 8, 8
    k_x, k_w1, k_w2 = jax.random.split(key, 3)

    x = jax.random.normal(k_x, (N, C, H, W), jnp.float32)

    bound = (1.0 / (C * 9)) ** 0.5       # kaiming-uniform-style bound
    w1 = jax.random.uniform(k_w1, (C, C, 3, 3), jnp.float32, -bound, bound)
    w2 = jax.random.uniform(k_w2, (C, C, 3, 3), jnp.float32, -bound, bound)
    g1 = jnp.ones((C,), jnp.float32)     # BatchNorm2d default weight
    b1 = jnp.zeros((C,), jnp.float32)    # BatchNorm2d default bias
    g2 = jnp.ones((C,), jnp.float32)
    b2 = jnp.zeros((C,), jnp.float32)

    out = basic_block(x, w1, g1, b1, w2, g2, b2)
    jax.block_until_ready(out)
    assert out.shape == (N, C, H, W) and out.dtype == jnp.float32
    assert bool(jnp.all(jnp.isfinite(out)))

    ref = _reference(x, w1, g1, b1, w2, g2, b2)
    err = float(jnp.max(jnp.abs(out - ref) / (jnp.abs(ref) + 1.0)))
    assert err < 6e-2, f"mismatch vs f32 reference: {err}"
    print("KERNEL_OK")
</pallas_src>

<mosaic_0001>
module attributes {stable_mosaic.version = 11 : i64} {
  func.func @basic_block_kernel(%arg0: memref<2x8x8x128xf32, #tpu.memory_space<vmem>>, %arg1: memref<9x128x128xbf16, #tpu.memory_space<vmem>>, %arg2: memref<1x128xf32, #tpu.memory_space<vmem>>, %arg3: memref<1x128xf32, #tpu.memory_space<vmem>>, %arg4: memref<9x128x128xbf16, #tpu.memory_space<vmem>>, %arg5: memref<1x128xf32, #tpu.memory_space<vmem>>, %arg6: memref<1x128xf32, #tpu.memory_space<vmem>>, %arg7: memref<2x8x8x128xf32, #tpu.memory_space<vmem>>, %arg8: memref<2x10x16x128xf32, #tpu.memory_space<vmem>>) attributes {dimension_semantics = [], scalar_prefetch = 0 : i64, scratch_operands = 1 : i64, tpu.core_type = #tpu.core_type<tc>} {
    %cst = arith.constant 0.000000e+00 : f32
    %0 = vector.broadcast %cst : f32 to vector<2x10x16x128xf32>
    %c0 = arith.constant 0 : index
    %c0_0 = arith.constant 0 : index
    %c0_1 = arith.constant 0 : index
    %c0_2 = arith.constant 0 : index
    %1 = vector.load %arg8[%c0, %c0_0, %c0_1, %c0_2] : memref<2x10x16x128xf32, #tpu.memory_space<vmem>>, vector<2x10x16x128xf32>
    tpu.vector_store %arg8[%c0, %c0_0, %c0_1, %c0_2], %0 {strides = array<i32>} : memref<2x10x16x128xf32, #tpu.memory_space<vmem>>, vector<2x10x16x128xf32>,
    %c0_3 = arith.constant 0 : index
    %c0_4 = arith.constant 0 : index
    %c0_5 = arith.constant 0 : index
    %c0_6 = arith.constant 0 : index
    %2 = vector.load %arg0[%c0_3, %c0_4, %c0_5, %c0_6] : memref<2x8x8x128xf32, #tpu.memory_space<vmem>>, vector<2x8x8x128xf32>
    %c0_7 = arith.constant 0 : index
    %c1 = arith.constant 1 : index
    %c1_8 = arith.constant 1 : index
    %c0_9 = arith.constant 0 : index
    %3 = vector.load %arg8[%c0_7, %c1, %c1_8, %c0_9] : memref<2x10x16x128xf32, #tpu.memory_space<vmem>>, vector<2x8x8x128xf32>
    tpu.vector_store %arg8[%c0_7, %c1, %c1_8, %c0_9], %2 {strides = array<i32>} : memref<2x10x16x128xf32, #tpu.memory_space<vmem>>, vector<2x8x8x128xf32>,
    %c0_10 = arith.constant 0 : index
    %c0_11 = arith.constant 0 : index
    %c0_12 = arith.constant 0 : index
    %c0_13 = arith.constant 0 : index
    %4 = vector.load %arg8[%c0_10, %c0_11, %c0_12, %c0_13] : memref<2x10x16x128xf32, #tpu.memory_space<vmem>>, vector<2x10x8x128xf32>
    %5 = vector.extract_strided_slice %4 {offsets = [0, 0, 0, 0], sizes = [2, 8, 8, 128], strides = [1, 1, 1, 1]} : vector<2x10x8x128xf32> to vector<2x8x8x128xf32>
    %6 = vector.shape_cast %5 : vector<2x8x8x128xf32> to vector<128x128xf32>
    %7 = arith.truncf %6 : vector<128x128xf32> to vector<128x128xbf16>
    %c0_14 = arith.constant 0 : index
    %c0_15 = arith.constant 0 : index
    %c0_16 = arith.constant 0 : index
    %8 = vector.load %arg1[%c0_14, %c0_15, %c0_16] : memref<9x128x128xbf16, #tpu.memory_space<vmem>>, vector<1x128x128xbf16>
    %9 = vector.shape_cast %8 : vector<1x128x128xbf16> to vector<128x128xbf16>
    %cst_17 = arith.constant dense<0.000000e+00> : vector<128x128xf32>
    %10 = tpu.matmul %7, %9, %cst_17 {dimension_numbers = #tpu.dot_dimension_numbers<[1], [0], [0], [1], [0, 0, 1, 1], [], []>} : vector<128x128xbf16>, vector<128x128xbf16>, vector<128x128xf32> -> vector<128x128xf32>
    %11 = vector.extract_strided_slice %4 {offsets = [0, 1, 0, 0], sizes = [2, 8, 8, 128], strides = [1, 1, 1, 1]} : vector<2x10x8x128xf32> to vector<2x8x8x128xf32>
    %12 = vector.shape_cast %11 : vector<2x8x8x128xf32> to vector<128x128xf32>
    %13 = arith.truncf %12 : vector<128x128xf32> to vector<128x128xbf16>
    %c3 = arith.constant 3 : index
    %c0_18 = arith.constant 0 : index
    %c0_19 = arith.constant 0 : index
    %14 = vector.load %arg1[%c3, %c0_18, %c0_19] : memref<9x128x128xbf16, #tpu.memory_space<vmem>>, vector<1x128x128xbf16>
    %15 = vector.shape_cast %14 : vector<1x128x128xbf16> to vector<128x128xbf16>
    %cst_20 = arith.constant dense<0.000000e+00> : vector<128x128xf32>
    %16 = tpu.matmul %13, %15, %cst_20 {dimension_numbers = #tpu.dot_dimension_numbers<[1], [0], [0], [1], [0, 0, 1, 1], [], []>} : vector<128x128xbf16>, vector<128x128xbf16>, vector<128x128xf32> -> vector<128x128xf32>
    %17 = arith.addf %10, %16 : vector<128x128xf32>
    %18 = vector.extract_strided_slice %4 {offsets = [0, 2, 0, 0], sizes = [2, 8, 8, 128], strides = [1, 1, 1, 1]} : vector<2x10x8x128xf32> to vector<2x8x8x128xf32>
    %19 = vector.shape_cast %18 : vector<2x8x8x128xf32> to vector<128x128xf32>
    %20 = arith.truncf %19 : vector<128x128xf32> to vector<128x128xbf16>
    %c6 = arith.constant 6 : index
    %c0_21 = arith.constant 0 : index
    %c0_22 = arith.constant 0 : index
    %21 = vector.load %arg1[%c6, %c0_21, %c0_22] : memref<9x128x128xbf16, #tpu.memory_space<vmem>>, vector<1x128x128xbf16>
    %22 = vector.shape_cast %21 : vector<1x128x128xbf16> to vector<128x128xbf16>
    %cst_23 = arith.constant dense<0.000000e+00> : vector<128x128xf32>
    %23 = tpu.matmul %20, %22, %cst_23 {dimension_numbers = #tpu.dot_dimension_numbers<[1], [0], [0], [1], [0, 0, 1, 1], [], []>} : vector<128x128xbf16>, vector<128x128xbf16>, vector<128x128xf32> -> vector<128x128xf32>
    %24 = arith.addf %17, %23 : vector<128x128xf32>
    %c0_24 = arith.constant 0 : index
    %c0_25 = arith.constant 0 : index
    %c1_26 = arith.constant 1 : index
    %c0_27 = arith.constant 0 : index
    %25 = vector.load %arg8[%c0_24, %c0_25, %c1_26, %c0_27] : memref<2x10x16x128xf32, #tpu.memory_space<vmem>>, vector<2x10x8x128xf32>
    %26 = vector.extract_strided_slice %25 {offsets = [0, 0, 0, 0], sizes = [2, 8, 8, 128], strides = [1, 1, 1, 1]} : vector<2x10x8x128xf32> to vector<2x8x8x128xf32>
    %27 = vector.shape_cast %26 : vector<2x8x8x128xf32> to vector<128x128xf32>
    %28 = arith.truncf %27 : vector<128x128xf32> to vector<128x128xbf16>
    %c1_28 = arith.constant 1 : index
    %c0_29 = arith.constant 0 : index
    %c0_30 = arith.constant 0 : index
    %29 = vector.load %arg1[%c1_28, %c0_29, %c0_30] : memref<9x128x128xbf16, #tpu.memory_space<vmem>>, vector<1x128x128xbf16>
    %30 = vector.shape_cast %29 : vector<1x128x128xbf16> to vector<128x128xbf16>
    %cst_31 = arith.constant dense<0.000000e+00> : vector<128x128xf32>
    %31 = tpu.matmul %28, %30, %cst_31 {dimension_numbers = #tpu.dot_dimension_numbers<[1], [0], [0], [1], [0, 0, 1, 1], [], []>} : vector<128x128xbf16>, vector<128x128xbf16>, vector<128x128xf32> -> vector<128x128xf32>
    %32 = arith.addf %24, %31 : vector<128x128xf32>
    %33 = vector.extract_strided_slice %25 {offsets = [0, 1, 0, 0], sizes = [2, 8, 8, 128], strides = [1, 1, 1, 1]} : vector<2x10x8x128xf32> to vector<2x8x8x128xf32>
    %34 = vector.shape_cast %33 : vector<2x8x8x128xf32> to vector<128x128xf32>
    %35 = arith.truncf %34 : vector<128x128xf32> to vector<128x128xbf16>
    %c4 = arith.constant 4 : index
    %c0_32 = arith.constant 0 : index
    %c0_33 = arith.constant 0 : index
    %36 = vector.load %arg1[%c4, %c0_32, %c0_33] : memref<9x128x128xbf16, #tpu.memory_space<vmem>>, vector<1x128x128xbf16>
    %37 = vector.shape_cast %36 : vector<1x128x128xbf16> to vector<128x128xbf16>
    %cst_34 = arith.constant dense<0.000000e+00> : vector<128x128xf32>
    %38 = tpu.matmul %35, %37, %cst_34 {dimension_numbers = #tpu.dot_dimension_numbers<[1], [0], [0], [1], [0, 0, 1, 1], [], []>} : vector<128x128xbf16>, vector<128x128xbf16>, vector<128x128xf32> -> vector<128x128xf32>
    %39 = arith.addf %32, %38 : vector<128x128xf32>
    %40 = vector.extract_strided_slice %25 {offsets = [0, 2, 0, 0], sizes = [2, 8, 8, 128], strides = [1, 1, 1, 1]} : vector<2x10x8x128xf32> to vector<2x8x8x128xf32>
    %41 = vector.shape_cast %40 : vector<2x8x8x128xf32> to vector<128x128xf32>
    %42 = arith.truncf %41 : vector<128x128xf32> to vector<128x128xbf16>
    %c7 = arith.constant 7 : index
    %c0_35 = arith.constant 0 : index
    %c0_36 = arith.constant 0 : index
    %43 = vector.load %arg1[%c7, %c0_35, %c0_36] : memref<9x128x128xbf16, #tpu.memory_space<vmem>>, vector<1x128x128xbf16>
    %44 = vector.shape_cast %43 : vector<1x128x128xbf16> to vector<128x128xbf16>
    %cst_37 = arith.constant dense<0.000000e+00> : vector<128x128xf32>
    %45 = tpu.matmul %42, %44, %cst_37 {dimension_numbers = #tpu.dot_dimension_numbers<[1], [0], [0], [1], [0, 0, 1, 1], [], []>} : vector<128x128xbf16>, vector<128x128xbf16>, vector<128x128xf32> -> vector<128x128xf32>
    %46 = arith.addf %39, %45 : vector<128x128xf32>
    %c0_38 = arith.constant 0 : index
    %c0_39 = arith.constant 0 : index
    %c2 = arith.constant 2 : index
    %c0_40 = arith.constant 0 : index
    %47 = vector.load %arg8[%c0_38, %c0_39, %c2, %c0_40] : memref<2x10x16x128xf32, #tpu.memory_space<vmem>>, vector<2x10x8x128xf32>
    %48 = vector.extract_strided_slice %47 {offsets = [0, 0, 0, 0], sizes = [2, 8, 8, 128], strides = [1, 1, 1, 1]} : vector<2x10x8x128xf32> to vector<2x8x8x128xf32>
    %49 = vector.shape_cast %48 : vector<2x8x8x128xf32> to vector<128x128xf32>
    %50 = arith.truncf %49 : vector<128x128xf32> to vector<128x128xbf16>
    %c2_41 = arith.constant 2 : index
    %c0_42 = arith.constant 0 : index
    %c0_43 = arith.constant 0 : index
    %51 = vector.load %arg1[%c2_41, %c0_42, %c0_43] : memref<9x128x128xbf16, #tpu.memory_space<vmem>>, vector<1x128x128xbf16>
    %52 = vector.shape_cast %51 : vector<1x128x128xbf16> to vector<128x128xbf16>
    %cst_44 = arith.constant dense<0.000000e+00> : vector<128x128xf32>
    %53 = tpu.matmul %50, %52, %cst_44 {dimension_numbers = #tpu.dot_dimension_numbers<[1], [0], [0], [1], [0, 0, 1, 1], [], []>} : vector<128x128xbf16>, vector<128x128xbf16>, vector<128x128xf32> -> vector<128x128xf32>
    %54 = arith.addf %46, %53 : vector<128x128xf32>
    %55 = vector.extract_strided_slice %47 {offsets = [0, 1, 0, 0], sizes = [2, 8, 8, 128], strides = [1, 1, 1, 1]} : vector<2x10x8x128xf32> to vector<2x8x8x128xf32>
    %56 = vector.shape_cast %55 : vector<2x8x8x128xf32> to vector<128x128xf32>
    %57 = arith.truncf %56 : vector<128x128xf32> to vector<128x128xbf16>
    %c5 = arith.constant 5 : index
    %c0_45 = arith.constant 0 : index
    %c0_46 = arith.constant 0 : index
    %58 = vector.load %arg1[%c5, %c0_45, %c0_46] : memref<9x128x128xbf16, #tpu.memory_space<vmem>>, vector<1x128x128xbf16>
    %59 = vector.shape_cast %58 : vector<1x128x128xbf16> to vector<128x128xbf16>
    %cst_47 = arith.constant dense<0.000000e+00> : vector<128x128xf32>
    %60 = tpu.matmul %57, %59, %cst_47 {dimension_numbers = #tpu.dot_dimension_numbers<[1], [0], [0], [1], [0, 0, 1, 1], [], []>} : vector<128x128xbf16>, vector<128x128xbf16>, vector<128x128xf32> -> vector<128x128xf32>
    %61 = arith.addf %54, %60 : vector<128x128xf32>
    %62 = vector.extract_strided_slice %47 {offsets = [0, 2, 0, 0], sizes = [2, 8, 8, 128], strides = [1, 1, 1, 1]} : vector<2x10x8x128xf32> to vector<2x8x8x128xf32>
    %63 = vector.shape_cast %62 : vector<2x8x8x128xf32> to vector<128x128xf32>
    %64 = arith.truncf %63 : vector<128x128xf32> to vector<128x128xbf16>
    %c8 = arith.constant 8 : index
    %c0_48 = arith.constant 0 : index
    %c0_49 = arith.constant 0 : index
    %65 = vector.load %arg1[%c8, %c0_48, %c0_49] : memref<9x128x128xbf16, #tpu.memory_space<vmem>>, vector<1x128x128xbf16>
    %66 = vector.shape_cast %65 : vector<1x128x128xbf16> to vector<128x128xbf16>
    %cst_50 = arith.constant dense<0.000000e+00> : vector<128x128xf32>
    %67 = tpu.matmul %64, %66, %cst_50 {dimension_numbers = #tpu.dot_dimension_numbers<[1], [0], [0], [1], [0, 0, 1, 1], [], []>} : vector<128x128xbf16>, vector<128x128xbf16>, vector<128x128xf32> -> vector<128x128xf32>
    %68 = arith.addf %61, %67 : vector<128x128xf32>
    %69 = vector.shape_cast %68 : vector<128x128xf32> to vector<2x8x8x128xf32>
    %cst_51 = arith.constant dense<0.000000e+00> : vector<8x8x128xf32>
    %70 = vector.multi_reduction <add>, %69, %cst_51 [0] : vector<2x8x8x128xf32> to vector<8x8x128xf32>
    %71 = vector.shape_cast %70 : vector<8x8x128xf32> to vector<1x8x8x128xf32>
    %cst_52 = arith.constant dense<0.000000e+00> : vector<1x8x128xf32>
    %72 = vector.multi_reduction <add>, %71, %cst_52 [1] : vector<1x8x8x128xf32> to vector<1x8x128xf32>
    %73 = vector.shape_cast %72 : vector<1x8x128xf32> to vector<1x1x8x128xf32>
    %cst_53 = arith.constant dense<0.000000e+00> : vector<1x1x128xf32>
    %74 = vector.multi_reduction <add>, %73, %cst_53 [2] : vector<1x1x8x128xf32> to vector<1x1x128xf32>
    %75 = vector.shape_cast %74 : vector<1x1x128xf32> to vector<1x1x1x128xf32>
    %cst_54 = arith.constant 1.280000e+02 : f32
    %76 = vector.broadcast %cst_54 : f32 to vector<1x1x1x128xf32>
    %77 = arith.divf %75, %76 : vector<1x1x1x128xf32>
    %78 = vector.broadcast %77 : vector<1x1x1x128xf32> to vector<2x8x8x128xf32>
    %79 = arith.subf %69, %78 : vector<2x8x8x128xf32>
    %80 = arith.mulf %79, %79 : vector<2x8x8x128xf32>
    %cst_55 = arith.constant dense<0.000000e+00> : vector<8x8x128xf32>
    %81 = vector.multi_reduction <add>, %80, %cst_55 [0] : vector<2x8x8x128xf32> to vector<8x8x128xf32>
    %82 = vector.shape_cast %81 : vector<8x8x128xf32> to vector<1x8x8x128xf32>
    %cst_56 = arith.constant dense<0.000000e+00> : vector<1x8x128xf32>
    %83 = vector.multi_reduction <add>, %82, %cst_56 [1] : vector<1x8x8x128xf32> to vector<1x8x128xf32>
    %84 = vector.shape_cast %83 : vector<1x8x128xf32> to vector<1x1x8x128xf32>
    %cst_57 = arith.constant dense<0.000000e+00> : vector<1x1x128xf32>
    %85 = vector.multi_reduction <add>, %84, %cst_57 [2] : vector<1x1x8x128xf32> to vector<1x1x128xf32>
    %86 = vector.shape_cast %85 : vector<1x1x128xf32> to vector<1x1x1x128xf32>
    %cst_58 = arith.constant 1.280000e+02 : f32
    %87 = vector.broadcast %cst_58 : f32 to vector<1x1x1x128xf32>
    %88 = arith.divf %86, %87 : vector<1x1x1x128xf32>
    %c0_59 = arith.constant 0 : index
    %c0_60 = arith.constant 0 : index
    %89 = vector.load %arg2[%c0_59, %c0_60] : memref<1x128xf32, #tpu.memory_space<vmem>>, vector<1x128xf32>
    %90 = vector.shape_cast %89 : vector<1x128xf32> to vector<1x1x1x128xf32>
    %cst_61 = arith.constant 9.99999974E-6 : f32
    %91 = vector.broadcast %cst_61 : f32 to vector<1x1x1x128xf32>
    %92 = arith.addf %88, %91 : vector<1x1x1x128xf32>
    %93 = math.rsqrt %92 : vector<1x1x1x128xf32>
    %94 = arith.mulf %90, %93 : vector<1x1x1x128xf32>
    %c0_62 = arith.constant 0 : index
    %c0_63 = arith.constant 0 : index
    %95 = vector.load %arg3[%c0_62, %c0_63] : memref<1x128xf32, #tpu.memory_space<vmem>>, vector<1x128xf32>
    %96 = vector.shape_cast %95 : vector<1x128xf32> to vector<1x1x1x128xf32>
    %97 = arith.mulf %77, %94 : vector<1x1x1x128xf32>
    %98 = arith.subf %96, %97 : vector<1x1x1x128xf32>
    %99 = vector.broadcast %94 : vector<1x1x1x128xf32> to vector<2x8x8x128xf32>
    %100 = arith.mulf %69, %99 : vector<2x8x8x128xf32>
    %101 = vector.broadcast %98 : vector<1x1x1x128xf32> to vector<2x8x8x128xf32>
    %102 = arith.addf %100, %101 : vector<2x8x8x128xf32>
    %cst_64 = arith.constant 0.000000e+00 : f32
    %103 = vector.broadcast %cst_64 : f32 to vector<2x8x8x128xf32>
    %104 = arith.maximumf %102, %103 : vector<2x8x8x128xf32>
    %c0_65 = arith.constant 0 : index
    %c1_66 = arith.constant 1 : index
    %c1_67 = arith.constant 1 : index
    %c0_68 = arith.constant 0 : index
    %105 = vector.load %arg8[%c0_65, %c1_66, %c1_67, %c0_68] : memref<2x10x16x128xf32, #tpu.memory_space<vmem>>, vector<2x8x8x128xf32>
    tpu.vector_store %arg8[%c0_65, %c1_66, %c1_67, %c0_68], %104 {strides = array<i32>} : memref<2x10x16x128xf32, #tpu.memory_space<vmem>>, vector<2x8x8x128xf32>,
    %c0_69 = arith.constant 0 : index
    %c0_70 = arith.constant 0 : index
    %c0_71 = arith.constant 0 : index
    %c0_72 = arith.constant 0 : index
    %106 = vector.load %arg8[%c0_69, %c0_70, %c0_71, %c0_72] : memref<2x10x16x128xf32, #tpu.memory_space<vmem>>, vector<2x10x8x128xf32>
    %107 = vector.extract_strided_slice %106 {offsets = [0, 0, 0, 0], sizes = [2, 8, 8, 128], strides = [1, 1, 1, 1]} : vector<2x10x8x128xf32> to vector<2x8x8x128xf32>
    %108 = vector.shape_cast %107 : vector<2x8x8x128xf32> to vector<128x128xf32>
    %109 = arith.truncf %108 : vector<128x128xf32> to vector<128x128xbf16>
    %c0_73 = arith.constant 0 : index
    %c0_74 = arith.constant 0 : index
    %c0_75 = arith.constant 0 : index
    %110 = vector.load %arg4[%c0_73, %c0_74, %c0_75] : memref<9x128x128xbf16, #tpu.memory_space<vmem>>, vector<1x128x128xbf16>
    %111 = vector.shape_cast %110 : vector<1x128x128xbf16> to vector<128x128xbf16>
    %cst_76 = arith.constant dense<0.000000e+00> : vector<128x128xf32>
    %112 = tpu.matmul %109, %111, %cst_76 {dimension_numbers = #tpu.dot_dimension_numbers<[1], [0], [0], [1], [0, 0, 1, 1], [], []>} : vector<128x128xbf16>, vector<128x128xbf16>, vector<128x128xf32> -> vector<128x128xf32>
    %113 = vector.extract_strided_slice %106 {offsets = [0, 1, 0, 0], sizes = [2, 8, 8, 128], strides = [1, 1, 1, 1]} : vector<2x10x8x128xf32> to vector<2x8x8x128xf32>
    %114 = vector.shape_cast %113 : vector<2x8x8x128xf32> to vector<128x128xf32>
    %115 = arith.truncf %114 : vector<128x128xf32> to vector<128x128xbf16>
    %c3_77 = arith.constant 3 : index
    %c0_78 = arith.constant 0 : index
    %c0_79 = arith.constant 0 : index
    %116 = vector.load %arg4[%c3_77, %c0_78, %c0_79] : memref<9x128x128xbf16, #tpu.memory_space<vmem>>, vector<1x128x128xbf16>
    %117 = vector.shape_cast %116 : vector<1x128x128xbf16> to vector<128x128xbf16>
    %cst_80 = arith.constant dense<0.000000e+00> : vector<128x128xf32>
    %118 = tpu.matmul %115, %117, %cst_80 {dimension_numbers = #tpu.dot_dimension_numbers<[1], [0], [0], [1], [0, 0, 1, 1], [], []>} : vector<128x128xbf16>, vector<128x128xbf16>, vector<128x128xf32> -> vector<128x128xf32>
    %119 = arith.addf %112, %118 : vector<128x128xf32>
    %120 = vector.extract_strided_slice %106 {offsets = [0, 2, 0, 0], sizes = [2, 8, 8, 128], strides = [1, 1, 1, 1]} : vector<2x10x8x128xf32> to vector<2x8x8x128xf32>
    %121 = vector.shape_cast %120 : vector<2x8x8x128xf32> to vector<128x128xf32>
    %122 = arith.truncf %121 : vector<128x128xf32> to vector<128x128xbf16>
    %c6_81 = arith.constant 6 : index
    %c0_82 = arith.constant 0 : index
    %c0_83 = arith.constant 0 : index
    %123 = vector.load %arg4[%c6_81, %c0_82, %c0_83] : memref<9x128x128xbf16, #tpu.memory_space<vmem>>, vector<1x128x128xbf16>
    %124 = vector.shape_cast %123 : vector<1x128x128xbf16> to vector<128x128xbf16>
    %cst_84 = arith.constant dense<0.000000e+00> : vector<128x128xf32>
    %125 = tpu.matmul %122, %124, %cst_84 {dimension_numbers = #tpu.dot_dimension_numbers<[1], [0], [0], [1], [0, 0, 1, 1], [], []>} : vector<128x128xbf16>, vector<128x128xbf16>, vector<128x128xf32> -> vector<128x128xf32>
    %126 = arith.addf %119, %125 : vector<128x128xf32>
    %c0_85 = arith.constant 0 : index
    %c0_86 = arith.constant 0 : index
    %c1_87 = arith.constant 1 : index
    %c0_88 = arith.constant 0 : index
    %127 = vector.load %arg8[%c0_85, %c0_86, %c1_87, %c0_88] : memref<2x10x16x128xf32, #tpu.memory_space<vmem>>, vector<2x10x8x128xf32>
    %128 = vector.extract_strided_slice %127 {offsets = [0, 0, 0, 0], sizes = [2, 8, 8, 128], strides = [1, 1, 1, 1]} : vector<2x10x8x128xf32> to vector<2x8x8x128xf32>
    %129 = vector.shape_cast %128 : vector<2x8x8x128xf32> to vector<128x128xf32>
    %130 = arith.truncf %129 : vector<128x128xf32> to vector<128x128xbf16>
    %c1_89 = arith.constant 1 : index
    %c0_90 = arith.constant 0 : index
    %c0_91 = arith.constant 0 : index
    %131 = vector.load %arg4[%c1_89, %c0_90, %c0_91] : memref<9x128x128xbf16, #tpu.memory_space<vmem>>, vector<1x128x128xbf16>
    %132 = vector.shape_cast %131 : vector<1x128x128xbf16> to vector<128x128xbf16>
    %cst_92 = arith.constant dense<0.000000e+00> : vector<128x128xf32>
    %133 = tpu.matmul %130, %132, %cst_92 {dimension_numbers = #tpu.dot_dimension_numbers<[1], [0], [0], [1], [0, 0, 1, 1], [], []>} : vector<128x128xbf16>, vector<128x128xbf16>, vector<128x128xf32> -> vector<128x128xf32>
    %134 = arith.addf %126, %133 : vector<128x128xf32>
    %135 = vector.extract_strided_slice %127 {offsets = [0, 1, 0, 0], sizes = [2, 8, 8, 128], strides = [1, 1, 1, 1]} : vector<2x10x8x128xf32> to vector<2x8x8x128xf32>
    %136 = vector.shape_cast %135 : vector<2x8x8x128xf32> to vector<128x128xf32>
    %137 = arith.truncf %136 : vector<128x128xf32> to vector<128x128xbf16>
    %c4_93 = arith.constant 4 : index
    %c0_94 = arith.constant 0 : index
    %c0_95 = arith.constant 0 : index
    %138 = vector.load %arg4[%c4_93, %c0_94, %c0_95] : memref<9x128x128xbf16, #tpu.memory_space<vmem>>, vector<1x128x128xbf16>
    %139 = vector.shape_cast %138 : vector<1x128x128xbf16> to vector<128x128xbf16>
    %cst_96 = arith.constant dense<0.000000e+00> : vector<128x128xf32>
    %140 = tpu.matmul %137, %139, %cst_96 {dimension_numbers = #tpu.dot_dimension_numbers<[1], [0], [0], [1], [0, 0, 1, 1], [], []>} : vector<128x128xbf16>, vector<128x128xbf16>, vector<128x128xf32> -> vector<128x128xf32>
    %141 = arith.addf %134, %140 : vector<128x128xf32>
    %142 = vector.extract_strided_slice %127 {offsets = [0, 2, 0, 0], sizes = [2, 8, 8, 128], strides = [1, 1, 1, 1]} : vector<2x10x8x128xf32> to vector<2x8x8x128xf32>
    %143 = vector.shape_cast %142 : vector<2x8x8x128xf32> to vector<128x128xf32>
    %144 = arith.truncf %143 : vector<128x128xf32> to vector<128x128xbf16>
    %c7_97 = arith.constant 7 : index
    %c0_98 = arith.constant 0 : index
    %c0_99 = arith.constant 0 : index
    %145 = vector.load %arg4[%c7_97, %c0_98, %c0_99] : memref<9x128x128xbf16, #tpu.memory_space<vmem>>, vector<1x128x128xbf16>
    %146 = vector.shape_cast %145 : vector<1x128x128xbf16> to vector<128x128xbf16>
    %cst_100 = arith.constant dense<0.000000e+00> : vector<128x128xf32>
    %147 = tpu.matmul %144, %146, %cst_100 {dimension_numbers = #tpu.dot_dimension_numbers<[1], [0], [0], [1], [0, 0, 1, 1], [], []>} : vector<128x128xbf16>, vector<128x128xbf16>, vector<128x128xf32> -> vector<128x128xf32>
    %148 = arith.addf %141, %147 : vector<128x128xf32>
    %c0_101 = arith.constant 0 : index
    %c0_102 = arith.constant 0 : index
    %c2_103 = arith.constant 2 : index
    %c0_104 = arith.constant 0 : index
    %149 = vector.load %arg8[%c0_101, %c0_102, %c2_103, %c0_104] : memref<2x10x16x128xf32, #tpu.memory_space<vmem>>, vector<2x10x8x128xf32>
    %150 = vector.extract_strided_slice %149 {offsets = [0, 0, 0, 0], sizes = [2, 8, 8, 128], strides = [1, 1, 1, 1]} : vector<2x10x8x128xf32> to vector<2x8x8x128xf32>
    %151 = vector.shape_cast %150 : vector<2x8x8x128xf32> to vector<128x128xf32>
    %152 = arith.truncf %151 : vector<128x128xf32> to vector<128x128xbf16>
    %c2_105 = arith.constant 2 : index
    %c0_106 = arith.constant 0 : index
    %c0_107 = arith.constant 0 : index
    %153 = vector.load %arg4[%c2_105, %c0_106, %c0_107] : memref<9x128x128xbf16, #tpu.memory_space<vmem>>, vector<1x128x128xbf16>
    %154 = vector.shape_cast %153 : vector<1x128x128xbf16> to vector<128x128xbf16>
    %cst_108 = arith.constant dense<0.000000e+00> : vector<128x128xf32>
    %155 = tpu.matmul %152, %154, %cst_108 {dimension_numbers = #tpu.dot_dimension_numbers<[1], [0], [0], [1], [0, 0, 1, 1], [], []>} : vector<128x128xbf16>, vector<128x128xbf16>, vector<128x128xf32> -> vector<128x128xf32>
    %156 = arith.addf %148, %155 : vector<128x128xf32>
    %157 = vector.extract_strided_slice %149 {offsets = [0, 1, 0, 0], sizes = [2, 8, 8, 128], strides = [1, 1, 1, 1]} : vector<2x10x8x128xf32> to vector<2x8x8x128xf32>
    %158 = vector.shape_cast %157 : vector<2x8x8x128xf32> to vector<128x128xf32>
    %159 = arith.truncf %158 : vector<128x128xf32> to vector<128x128xbf16>
    %c5_109 = arith.constant 5 : index
    %c0_110 = arith.constant 0 : index
    %c0_111 = arith.constant 0 : index
    %160 = vector.load %arg4[%c5_109, %c0_110, %c0_111] : memref<9x128x128xbf16, #tpu.memory_space<vmem>>, vector<1x128x128xbf16>
    %161 = vector.shape_cast %160 : vector<1x128x128xbf16> to vector<128x128xbf16>
    %cst_112 = arith.constant dense<0.000000e+00> : vector<128x128xf32>
    %162 = tpu.matmul %159, %161, %cst_112 {dimension_numbers = #tpu.dot_dimension_numbers<[1], [0], [0], [1], [0, 0, 1, 1], [], []>} : vector<128x128xbf16>, vector<128x128xbf16>, vector<128x128xf32> -> vector<128x128xf32>
    %163 = arith.addf %156, %162 : vector<128x128xf32>
    %164 = vector.extract_strided_slice %149 {offsets = [0, 2, 0, 0], sizes = [2, 8, 8, 128], strides = [1, 1, 1, 1]} : vector<2x10x8x128xf32> to vector<2x8x8x128xf32>
    %165 = vector.shape_cast %164 : vector<2x8x8x128xf32> to vector<128x128xf32>
    %166 = arith.truncf %165 : vector<128x128xf32> to vector<128x128xbf16>
    %c8_113 = arith.constant 8 : index
    %c0_114 = arith.constant 0 : index
    %c0_115 = arith.constant 0 : index
    %167 = vector.load %arg4[%c8_113, %c0_114, %c0_115] : memref<9x128x128xbf16, #tpu.memory_space<vmem>>, vector<1x128x128xbf16>
    %168 = vector.shape_cast %167 : vector<1x128x128xbf16> to vector<128x128xbf16>
    %cst_116 = arith.constant dense<0.000000e+00> : vector<128x128xf32>
    %169 = tpu.matmul %166, %168, %cst_116 {dimension_numbers = #tpu.dot_dimension_numbers<[1], [0], [0], [1], [0, 0, 1, 1], [], []>} : vector<128x128xbf16>, vector<128x128xbf16>, vector<128x128xf32> -> vector<128x128xf32>
    %170 = arith.addf %163, %169 : vector<128x128xf32>
    %171 = vector.shape_cast %170 : vector<128x128xf32> to vector<2x8x8x128xf32>
    %cst_117 = arith.constant dense<0.000000e+00> : vector<8x8x128xf32>
    %172 = vector.multi_reduction <add>, %171, %cst_117 [0] : vector<2x8x8x128xf32> to vector<8x8x128xf32>
    %173 = vector.shape_cast %172 : vector<8x8x128xf32> to vector<1x8x8x128xf32>
    %cst_118 = arith.constant dense<0.000000e+00> : vector<1x8x128xf32>
    %174 = vector.multi_reduction <add>, %173, %cst_118 [1] : vector<1x8x8x128xf32> to vector<1x8x128xf32>
    %175 = vector.shape_cast %174 : vector<1x8x128xf32> to vector<1x1x8x128xf32>
    %cst_119 = arith.constant dense<0.000000e+00> : vector<1x1x128xf32>
    %176 = vector.multi_reduction <add>, %175, %cst_119 [2] : vector<1x1x8x128xf32> to vector<1x1x128xf32>
    %177 = vector.shape_cast %176 : vector<1x1x128xf32> to vector<1x1x1x128xf32>
    %cst_120 = arith.constant 1.280000e+02 : f32
    %178 = vector.broadcast %cst_120 : f32 to vector<1x1x1x128xf32>
    %179 = arith.divf %177, %178 : vector<1x1x1x128xf32>
    %180 = vector.broadcast %179 : vector<1x1x1x128xf32> to vector<2x8x8x128xf32>
    %181 = arith.subf %171, %180 : vector<2x8x8x128xf32>
    %182 = arith.mulf %181, %181 : vector<2x8x8x128xf32>
    %cst_121 = arith.constant dense<0.000000e+00> : vector<8x8x128xf32>
    %183 = vector.multi_reduction <add>, %182, %cst_121 [0] : vector<2x8x8x128xf32> to vector<8x8x128xf32>
    %184 = vector.shape_cast %183 : vector<8x8x128xf32> to vector<1x8x8x128xf32>
    %cst_122 = arith.constant dense<0.000000e+00> : vector<1x8x128xf32>
    %185 = vector.multi_reduction <add>, %184, %cst_122 [1] : vector<1x8x8x128xf32> to vector<1x8x128xf32>
    %186 = vector.shape_cast %185 : vector<1x8x128xf32> to vector<1x1x8x128xf32>
    %cst_123 = arith.constant dense<0.000000e+00> : vector<1x1x128xf32>
    %187 = vector.multi_reduction <add>, %186, %cst_123 [2] : vector<1x1x8x128xf32> to vector<1x1x128xf32>
    %188 = vector.shape_cast %187 : vector<1x1x128xf32> to vector<1x1x1x128xf32>
    %cst_124 = arith.constant 1.280000e+02 : f32
    %189 = vector.broadcast %cst_124 : f32 to vector<1x1x1x128xf32>
    %190 = arith.divf %188, %189 : vector<1x1x1x128xf32>
    %c0_125 = arith.constant 0 : index
    %c0_126 = arith.constant 0 : index
    %191 = vector.load %arg5[%c0_125, %c0_126] : memref<1x128xf32, #tpu.memory_space<vmem>>, vector<1x128xf32>
    %192 = vector.shape_cast %191 : vector<1x128xf32> to vector<1x1x1x128xf32>
    %cst_127 = arith.constant 9.99999974E-6 : f32
    %193 = vector.broadcast %cst_127 : f32 to vector<1x1x1x128xf32>
    %194 = arith.addf %190, %193 : vector<1x1x1x128xf32>
    %195 = math.rsqrt %194 : vector<1x1x1x128xf32>
    %196 = arith.mulf %192, %195 : vector<1x1x1x128xf32>
    %c0_128 = arith.constant 0 : index
    %c0_129 = arith.constant 0 : index
    %197 = vector.load %arg6[%c0_128, %c0_129] : memref<1x128xf32, #tpu.memory_space<vmem>>, vector<1x128xf32>
    %198 = vector.shape_cast %197 : vector<1x128xf32> to vector<1x1x1x128xf32>
    %199 = arith.mulf %179, %196 : vector<1x1x1x128xf32>
    %200 = arith.subf %198, %199 : vector<1x1x1x128xf32>
    %201 = vector.broadcast %196 : vector<1x1x1x128xf32> to vector<2x8x8x128xf32>
    %202 = arith.mulf %171, %201 : vector<2x8x8x128xf32>
    %203 = vector.broadcast %200 : vector<1x1x1x128xf32> to vector<2x8x8x128xf32>
    %204 = arith.addf %202, %203 : vector<2x8x8x128xf32>
    %c0_130 = arith.constant 0 : index
    %c0_131 = arith.constant 0 : index
    %c0_132 = arith.constant 0 : index
    %c0_133 = arith.constant 0 : index
    %205 = vector.load %arg0[%c0_130, %c0_131, %c0_132, %c0_133] : memref<2x8x8x128xf32, #tpu.memory_space<vmem>>, vector<2x8x8x128xf32>
    %206 = arith.addf %204, %205 : vector<2x8x8x128xf32>
    %cst_134 = arith.constant 0.000000e+00 : f32
    %207 = vector.broadcast %cst_134 : f32 to vector<2x8x8x128xf32>
    %208 = arith.maximumf %206, %207 : vector<2x8x8x128xf32>
    %c0_135 = arith.constant 0 : index
    %c0_136 = arith.constant 0 : index
    %c0_137 = arith.constant 0 : index
    %c0_138 = arith.constant 0 : index
    %209 = vector.load %arg7[%c0_135, %c0_136, %c0_137, %c0_138] : memref<2x8x8x128xf32, #tpu.memory_space<vmem>>, vector<2x8x8x128xf32>
    tpu.vector_store %arg7[%c0_135, %c0_136, %c0_137, %c0_138], %208 {strides = array<i32>} : memref<2x8x8x128xf32, #tpu.memory_space<vmem>>, vector<2x8x8x128xf32>,
    return
  }
}

</mosaic_0001>

<llo_original>
// kernel: basic_block.1
$region0: #{basic_block.1}
  #allocation0 [shape = 'u32[]', space=smem, size = 0x4, offset = 0x4, fixed_abs, tag = 'smem constant byte address 0x4 - core index']
  #allocation1 [shape = 'u32[72,128]{1,0:T(1,128)}', space=vmem, size = 0x9000, scoped, tag = 'internal scratch']
  #allocation2 [shape = 'f32[2,10,16,128]{3,2,1,0:T(8,128)}', space=vmem, size = 0x28000, scoped, tag = 'scratch operand']
  %s0 = inlined_call_operand.vmem [shape: f32[2,8,8,128], index: 0, kind: input, shape index: {}]
  %s1 = inlined_call_operand.vmem [shape: bf16[9,128,128], index: 1, kind: input, shape index: {}]
  %s2 = inlined_call_operand.vmem [shape: f32[1,128], index: 2, kind: input, shape index: {}]
  %s3 = inlined_call_operand.vmem [shape: f32[1,128], index: 3, kind: input, shape index: {}]
  %s4 = inlined_call_operand.vmem [shape: bf16[9,128,128], index: 4, kind: input, shape index: {}]
  %s5 = inlined_call_operand.vmem [shape: f32[1,128], index: 5, kind: input, shape index: {}]
  %s6 = inlined_call_operand.vmem [shape: f32[1,128], index: 6, kind: input, shape index: {}]
  %s7 = inlined_call_operand.hbm [shape: f32[2,8,8,128], index: 7, kind: output, shape index: {}]
  %s8 = sld [smem:[#allocation0]]
  $region38: #{basic_block.1} parent=0
    _
  %s10 = ssub.s32 1, %s8
  %s11 = scalar_select 0, %s10, %s8
  $region1: #{basic_block.1} parent=0
    #allocation3 [shape = 'u8[65536]{0}', space=vmem, size = 0x10000, scoped, tag = 'output window, operand 0, single buffered']
    #allocation4 [shape = 's32[1]{0}', space=sflag, size = 0x4, scoped, tag = 'scoped memory for basic_block.1']
    %12 = vsyncpa [#allocation4], 0
    // Predicated region
    $region2: #{basic_block.1} parent=1 // pred_check
      _
    $region3: #{basic_block.1} parent=1 // pred_check_branch
      %14 = sbr.rel (0) target = $region5
    $region4: #{basic_block.1} parent=1 // pred_region
      _
    $region5: #{basic_block.1} parent=1 // pred_fallthru
      _
    // Predicated region
    $region6: #{basic_block.1} parent=1 // pred_check
      _
    $region7: #{basic_block.1} parent=1 // pred_check_branch
      %16 = sbr.rel (0) target = $region9
    $region8: #{basic_block.1} parent=1 // pred_region
      _
    $region9: #{basic_block.1} parent=1 // pred_fallthru
      _
    // Predicated region
    $region10: #{basic_block.1} parent=1 // pred_check
      _
    $region11: #{basic_block.1} parent=1 // pred_check_branch
      %18 = sbr.rel (0) target = $region13
    $region12: #{basic_block.1} parent=1 // pred_region
      _
    $region13: #{basic_block.1} parent=1 // pred_fallthru
      _
    // Predicated region
    $region14: #{basic_block.1} parent=1 // pred_check
      _
    $region15: #{basic_block.1} parent=1 // pred_check_branch
      %20 = sbr.rel (0) target = $region17
    $region16: #{basic_block.1} parent=1 // pred_region
      _
    $region17: #{basic_block.1} parent=1 // pred_fallthru
      _
    // Predicated region
    $region18: #{basic_block.1} parent=1 // pred_check
      _
    $region19: #{basic_block.1} parent=1 // pred_check_branch
      %22 = sbr.rel (0) target = $region21
    $region20: #{basic_block.1} parent=1 // pred_region
      _
    $region21: #{basic_block.1} parent=1 // pred_fallthru
      _
    // Predicated region
    $region22: #{basic_block.1} parent=1 // pred_check
      _
    $region23: #{basic_block.1} parent=1 // pred_check_branch
      %24 = sbr.rel (0) target = $region25
    $region24: #{basic_block.1} parent=1 // pred_region
      _
    $region25: #{basic_block.1} parent=1 // pred_fallthru
      _
    // Predicated region
    $region26: #{basic_block.1} parent=1 // pred_check
      _
    $region27: #{basic_block.1} parent=1 // pred_check_branch
      %26 = sbr.rel (0) target = $region29
    $region28: #{basic_block.1} parent=1 // pred_region
      _
    $region29: #{basic_block.1} parent=1 // pred_fallthru
      _
    %27 = vst [vmem:[#allocation2] sm:$0xff] 0.0
    %28 = vst [vmem:[#allocation2 + $0x8] sm:$0xff] 0.0
    %29 = vst [vmem:[#allocation2 + $0x10] sm:$0xff] 0.0
    %30 = vst [vmem:[#allocation2 + $0x18] sm:$0xff] 0.0
    %31 = vst [vmem:[#allocation2 + $0x20] sm:$0xff] 0.0
    %32 = vst [vmem:[#allocation2 + $0x28] sm:$0xff] 0.0
    %33 = vst [vmem:[#allocation2 + $0x30] sm:$0xff] 0.0
    %34 = vst [vmem:[#allocation2 + $0x38] sm:$0xff] 0.0
    %35 = vst [vmem:[#allocation2 + $0x40] sm:$0xff] 0.0
    %36 = vst [vmem:[#allocation2 + $0x48] sm:$0xff] 0.0
    %37 = vst [vmem:[#allocation2 + $0x50] sm:$0xff] 0.0
    %38 = vst [vmem:[#allocation2 + $0x58] sm:$0xff] 0.0
    %39 = vst [vmem:[#allocation2 + $0x60] sm:$0xff] 0.0
    %40 = vst [vmem:[#allocation2 + $0x68] sm:$0xff] 0.0
    %41 = vst [vmem:[#allocation2 + $0x70] sm:$0xff] 0.0
    %42 = vst [vmem:[#allocation2 + $0x78] sm:$0xff] 0.0
    %43 = vst [vmem:[#allocation2 + $0x80] sm:$0xff] 0.0
    %44 = vst [vmem:[#allocation2 + $0x88] sm:$0xff] 0.0
    %45 = vst [vmem:[#allocation2 + $0x90] sm:$0xff] 0.0
    %46 = vst [vmem:[#allocation2 + $0x98] sm:$0xff] 0.0
    %47 = vst [vmem:[#allocation2 + $0xa0] sm:$0xff] 0.0
    %48 = vst [vmem:[#allocation2 + $0xa8] sm:$0xff] 0.0
    %49 = vst [vmem:[#allocation2 + $0xb0] sm:$0xff] 0.0
    %50 = vst [vmem:[#allocation2 + $0xb8] sm:$0xff] 0.0
    %51 = vst [vmem:[#allocation2 + $0xc0] sm:$0xff] 0.0
    %52 = vst [vmem:[#allocation2 + $0xc8] sm:$0xff] 0.0
    %53 = vst [vmem:[#allocation2 + $0xd0] sm:$0xff] 0.0
    %54 = vst [vmem:[#allocation2 + $0xd8] sm:$0xff] 0.0
    %55 = vst [vmem:[#allocation2 + $0xe0] sm:$0xff] 0.0
    %56 = vst [vmem:[#allocation2 + $0xe8] sm:$0xff] 0.0
    %57 = vst [vmem:[#allocation2 + $0xf0] sm:$0xff] 0.0
    %58 = vst [vmem:[#allocation2 + $0xf8] sm:$0xff] 0.0
    %59 = vst [vmem:[#allocation2 + $0x100] sm:$0xff] 0.0
    %60 = vst [vmem:[#allocation2 + $0x108] sm:$0xff] 0.0
    %61 = vst [vmem:[#allocation2 + $0x110] sm:$0xff] 0.0
    %62 = vst [vmem:[#allocation2 + $0x118] sm:$0xff] 0.0
    %63 = vst [vmem:[#allocation2 + $0x120] sm:$0xff] 0.0
    %64 = vst [vmem:[#allocation2 + $0x128] sm:$0xff] 0.0
    %65 = vst [vmem:[#allocation2 + $0x130] sm:$0xff] 0.0
    %66 = vst [vmem:[#allocation2 + $0x138] sm:$0xff] 0.0
    %v67 = vld [vmem:[%s0] sm:$0xff]
    %v68 = vld [vmem:[%s0 + $0x8] sm:$0xff]
    %v69 = vld [vmem:[%s0 + $0x10] sm:$0xff]
    %v70 = vld [vmem:[%s0 + $0x18] sm:$0xff]
    %v71 = vld [vmem:[%s0 + $0x20] sm:$0xff]
    %v72 = vld [vmem:[%s0 + $0x28] sm:$0xff]
    %v73 = vld [vmem:[%s0 + $0x30] sm:$0xff]
    %v74 = vld [vmem:[%s0 + $0x38] sm:$0xff]
    %v75 = vld [vmem:[%s0 + $0x40] sm:$0xff]
    %v76 = vld [vmem:[%s0 + $0x48] sm:$0xff]
    %v77 = vld [vmem:[%s0 + $0x50] sm:$0xff]
    %v78 = vld [vmem:[%s0 + $0x58] sm:$0xff]
    %v79 = vld [vmem:[%s0 + $0x60] sm:$0xff]
    %v80 = vld [vmem:[%s0 + $0x68] sm:$0xff]
    %v81 = vld [vmem:[%s0 + $0x70] sm:$0xff]
    %v82 = vld [vmem:[%s0 + $0x78] sm:$0xff]
    %s83 = scalar_lea.vmem [#allocation2], 16
    %84 = vst [vmem:[%s83 + $0x1] sm:$0xff] %v67
    %85 = vst [vmem:[%s83 + $0x11] sm:$0xff] %v68
    %86 = vst [vmem:[%s83 + $0x21] sm:$0xff] %v69
    %87 = vst [vmem:[%s83 + $0x31] sm:$0xff] %v70
    %88 = vst [vmem:[%s83 + $0x41] sm:$0xff] %v71
    %89 = vst [vmem:[%s83 + $0x51] sm:$0xff] %v72
    %90 = vst [vmem:[%s83 + $0x61] sm:$0xff] %v73
    %91 = vst [vmem:[%s83 + $0x71] sm:$0xff] %v74
    %92 = vst [vmem:[%s83 + $0xa1] sm:$0xff] %v75
    %93 = vst [vmem:[%s83 + $0xb1] sm:$0xff] %v76
    %94 = vst [vmem:[%s83 + $0xc1] sm:$0xff] %v77
    %95 = vst [vmem:[%s83 + $0xd1] sm:$0xff] %v78
    %96 = vst [vmem:[%s83 + $0xe1] sm:$0xff] %v79
    %97 = vst [vmem:[%s83 + $0xf1] sm:$0xff] %v80
    %98 = vst [vmem:[%s83 + $0x101] sm:$0xff] %v81
    %99 = vst [vmem:[%s83 + $0x111] sm:$0xff] %v82
    %v100 = vld [vmem:[#allocation2] sm:$0xff]
    %v101 = vld [vmem:[#allocation2 + $0x10] sm:$0xff]
    %v102 = vld [vmem:[#allocation2 + $0x20] sm:$0xff]
    %v103 = vld [vmem:[#allocation2 + $0x30] sm:$0xff]
    %v104 = vld [vmem:[#allocation2 + $0x40] sm:$0xff]
    %v105 = vld [vmem:[#allocation2 + $0x50] sm:$0xff]
    %v106 = vld [vmem:[#allocation2 + $0x60] sm:$0xff]
    %v107 = vld [vmem:[#allocation2 + $0x70] sm:$0xff]
    %v108 = vld [vmem:[#allocation2 + $0x80] sm:$0xff]
    %v109 = vld [vmem:[#allocation2 + $0x90] sm:$0xff]
    %v110 = vld [vmem:[#allocation2 + $0xa0] sm:$0xff]
    %v111 = vld [vmem:[#allocation2 + $0xb0] sm:$0xff]
    %v112 = vld [vmem:[#allocation2 + $0xc0] sm:$0xff]
    %v113 = vld [vmem:[#allocation2 + $0xd0] sm:$0xff]
    %v114 = vld [vmem:[#allocation2 + $0xe0] sm:$0xff]
    %v115 = vld [vmem:[#allocation2 + $0xf0] sm:$0xff]
    %v116 = vld [vmem:[#allocation2 + $0x100] sm:$0xff]
    %v117 = vld [vmem:[#allocation2 + $0x110] sm:$0xff]
    %v118 = vld [vmem:[#allocation2 + $0x120] sm:$0xff]
    %v119 = vld [vmem:[#allocation2 + $0x130] sm:$0xff]
    %v120 = vpack.c.bf16 %v101, %v100
    %v121 = vpack.c.bf16 %v103, %v102
    %v122 = vpack.c.bf16 %v105, %v104
    %v123 = vpack.c.bf16 %v107, %v106
    %v124 = vpack.c.bf16 %v111, %v110
    %v125 = vpack.c.bf16 %v113, %v112
    %v126 = vpack.c.bf16 %v115, %v114
    %v127 = vpack.c.bf16 %v117, %v116
    %v128 = vld [vmem:[%s1] sm:$0xf]
    %v129 = vld [vmem:[%s1 + $0x4] sm:$0xf]
    %v130 = vld [vmem:[%s1 + $0x8] sm:$0xf]
    %v131 = vld [vmem:[%s1 + $0xc] sm:$0xf]
    %v132 = vld [vmem:[%s1 + $0x10] sm:$0xf]
    %v133 = vld [vmem:[%s1 + $0x14] sm:$0xf]
    %v134 = vld [vmem:[%s1 + $0x18] sm:$0xf]
    %v135 = vld [vmem:[%s1 + $0x1c] sm:$0xf]
    %v136 = vld [vmem:[%s1 + $0x20] sm:$0xf]
    %v137 = vld [vmem:[%s1 + $0x24] sm:$0xf]
    %v138 = vld [vmem:[%s1 + $0x28] sm:$0xf]
    %v139 = vld [vmem:[%s1 + $0x2c] sm:$0xf]
    %v140 = vld [vmem:[%s1 + $0x30] sm:$0xf]
    %v141 = vld [vmem:[%s1 + $0x34] sm:$0xf]
    %v142 = vld [vmem:[%s1 + $0x38] sm:$0xf]
    %v143 = vld [vmem:[%s1 + $0x3c] sm:$0xf]
    %v144 = vpack.c.bf16 %v102, %v101
    %v145 = vpack.c.bf16 %v104, %v103
    %v146 = vpack.c.bf16 %v106, %v105
    %v147 = vpack.c.bf16 %v108, %v107
    %v148 = vpack.c.bf16 %v112, %v111
    %v149 = vpack.c.bf16 %v114, %v113
    %v150 = vpack.c.bf16 %v116, %v115
    %v151 = vpack.c.bf16 %v118, %v117
    %s152 = scalar_lea.vmem %s1, 192
    %v153 = vld [vmem:[%s152] sm:$0xf]
    %v154 = vld [vmem:[%s152 + $0x4] sm:$0xf]
    %v155 = vld [vmem:[%s152 + $0x8] sm:$0xf]
    %v156 = vld [vmem:[%s152 + $0xc] sm:$0xf]
    %v157 = vld [vmem:[%s152 + $0x10] sm:$0xf]
    %v158 = vld [vmem:[%s152 + $0x14] sm:$0xf]
    %v159 = vld [vmem:[%s152 + $0x18] sm:$0xf]
    %v160 = vld [vmem:[%s152 + $0x1c] sm:$0xf]
    %v161 = vld [vmem:[%s152 + $0x20] sm:$0xf]
    %v162 = vld [vmem:[%s152 + $0x24] sm:$0xf]
    %v163 = vld [vmem:[%s152 + $0x28] sm:$0xf]
    %v164 = vld [vmem:[%s152 + $0x2c] sm:$0xf]
    %v165 = vld [vmem:[%s152 + $0x30] sm:$0xf]
    %v166 = vld [vmem:[%s152 + $0x34] sm:$0xf]
    %v167 = vld [vmem:[%s152 + $0x38] sm:$0xf]
    %v168 = vld [vmem:[%s152 + $0x3c] sm:$0xf]
    %v185 = vunpack.c.l.b16 %v153
    %v186 = vunpack.c.l.b16 %v154
    %v187 = vunpack.c.l.b16 %v155
    %v188 = vunpack.c.l.b16 %v156
    %v189 = vunpack.c.l.b16 %v157
    %v190 = vunpack.c.l.b16 %v158
    %v191 = vunpack.c.l.b16 %v159
    %v192 = vunpack.c.l.b16 %v160
    %v193 = vunpack.c.l.b16 %v161
    %v194 = vunpack.c.l.b16 %v162
    %v195 = vunpack.c.l.b16 %v163
    %v196 = vunpack.c.l.b16 %v164
    %v197 = vunpack.c.l.b16 %v165
    %v198 = vunpack.c.l.b16 %v166
    %v199 = vunpack.c.l.b16 %v167
    %v200 = vunpack.c.l.b16 %v168
    %v201 = vpack.c.b16 %v186, %v185
    %v202 = vpack.c.b16 %v188, %v187
    %v203 = vpack.c.b16 %v190, %v189
    %v204 = vpack.c.b16 %v192, %v191
    %v205 = vpack.c.b16 %v194, %v193
    %v206 = vpack.c.b16 %v196, %v195
    %v207 = vpack.c.b16 %v198, %v197
    %v208 = vpack.c.b16 %v200, %v199
    %217 = vmatpush.bf16.msra.mxu0 %v208
    %218 = vmatpush.bf16.msra.mxu0 %v207
    %219 = vmatpush.bf16.msra.mxu0 %v206
    %220 = vmatpush.bf16.msra.mxu0 %v205
    %221 = vmatpush.bf16.msra.mxu0 %v204
    %222 = vmatpush.bf16.msra.mxu0 %v203
    %223 = vmatpush.bf16.msra.mxu0 %v202
    %224 = vmatpush.bf16.msra.mxu0 %v201
    %225 = vmatmul.bf16.gmra.mxu0 %v144
    %v226 = vpop.f32.mrf.mxu0
    %v227 = vadd.f32 0.0, %v226
    %v228 = vpop.f32.mrf.mxu0
    %v229 = vadd.f32 0.0, %v228
    %230 = vmatmul.bf16.gmra.mxu0 %v145
    %v231 = vpop.f32.mrf.mxu0
    %v232 = vadd.f32 0.0, %v231
    %v233 = vpop.f32.mrf.mxu0
    %v234 = vadd.f32 0.0, %v233
    %235 = vmatmul.bf16.gmra.mxu0 %v146
    %v236 = vpop.f32.mrf.mxu0
    %v237 = vadd.f32 0.0, %v236
    %v238 = vpop.f32.mrf.mxu0
    %v239 = vadd.f32 0.0, %v238
    %240 = vmatmul.bf16.gmra.mxu0 %v147
    %v241 = vpop.f32.mrf.mxu0
    %v242 = vadd.f32 0.0, %v241
    %v243 = vpop.f32.mrf.mxu0
    %v244 = vadd.f32 0.0, %v243
    %245 = vmatmul.bf16.gmra.mxu0 %v148
    %v246 = vpop.f32.mrf.mxu0
    %v247 = vadd.f32 0.0, %v246
    %v248 = vpop.f32.mrf.mxu0
    %v249 = vadd.f32 0.0, %v248
    %250 = vmatmul.bf16.gmra.mxu0 %v149
    %v251 = vpop.f32.mrf.mxu0
    %v252 = vadd.f32 0.0, %v251
    %v253 = vpop.f32.mrf.mxu0
    %v254 = vadd.f32 0.0, %v253
    %255 = vmatmul.bf16.gmra.mxu0 %v150
    %v256 = vpop.f32.mrf.mxu0
    %v257 = vadd.f32 0.0, %v256
    %v258 = vpop.f32.mrf.mxu0
    %v259 = vadd.f32 0.0, %v258
    %260 = vmatmul.bf16.gmra.mxu0 %v151
    %v261 = vpop.f32.mrf.mxu0
    %v262 = vadd.f32 0.0, %v261
    %v263 = vpop.f32.mrf.mxu0
    %v264 = vadd.f32 0.0, %v263
    %265 = vdwg.mxu0
    %v282 = vunpack.c.l.b16 %v128
    %v283 = vunpack.c.l.b16 %v129
    %v284 = vunpack.c.l.b16 %v130
    %v285 = vunpack.c.l.b16 %v131
    %v286 = vunpack.c.l.b16 %v132
    %v287 = vunpack.c.l.b16 %v133
    %v288 = vunpack.c.l.b16 %v134
    %v289 = vunpack.c.l.b16 %v135
    %v290 = vunpack.c.l.b16 %v136
    %v291 = vunpack.c.l.b16 %v137
    %v292 = vunpack.c.l.b16 %v138
    %v293 = vunpack.c.l.b16 %v139
    %v294 = vunpack.c.l.b16 %v140
    %v295 = vunpack.c.l.b16 %v141
    %v296 = vunpack.c.l.b16 %v142
    %v297 = vunpack.c.l.b16 %v143
    %v298 = vpack.c.b16 %v283, %v282
    %v299 = vpack.c.b16 %v285, %v284
    %v300 = vpack.c.b16 %v287, %v286
    %v301 = vpack.c.b16 %v289, %v288
    %v302 = vpack.c.b16 %v291, %v290
    %v303 = vpack.c.b16 %v293, %v292
    %v304 = vpack.c.b16 %v295, %v294
    %v305 = vpack.c.b16 %v297, %v296
    %314 = vmatpush.bf16.msra.mxu0 %v305
    %315 = vmatpush.bf16.msra.mxu0 %v304
    %316 = vmatpush.bf16.msra.mxu0 %v303
    %317 = vmatpush.bf16.msra.mxu0 %v302
    %318 = vmatpush.bf16.msra.mxu0 %v301
    %319 = vmatpush.bf16.msra.mxu0 %v300
    %320 = vmatpush.bf16.msra.mxu0 %v299
    %321 = vmatpush.bf16.msra.mxu0 %v298
    %322 = vmatmul.bf16.gmra.mxu0 %v120
    %v323 = vpop.f32.mrf.mxu0
    %v324 = vadd.f32 %v227, %v323
    %v325 = vpop.f32.mrf.mxu0
    %v326 = vadd.f32 %v229, %v325
    %327 = vmatmul.bf16.gmra.mxu0 %v121
    %v328 = vpop.f32.mrf.mxu0
    %v329 = vadd.f32 %v232, %v328
    %v330 = vpop.f32.mrf.mxu0
    %v331 = vadd.f32 %v234, %v330
    %332 = vmatmul.bf16.gmra.mxu0 %v122
    %v333 = vpop.f32.mrf.mxu0
    %v334 = vadd.f32 %v237, %v333
    %v335 = vpop.f32.mrf.mxu0
    %v336 = vadd.f32 %v239, %v335
    %337 = vmatmul.bf16.gmra.mxu0 %v123
    %v338 = vpop.f32.mrf.mxu0
    %v339 = vadd.f32 %v242, %v338
    %v340 = vpop.f32.mrf.mxu0
    %v341 = vadd.f32 %v244, %v340
    %342 = vmatmul.bf16.gmra.mxu0 %v124
    %v343 = vpop.f32.mrf.mxu0
    %v344 = vadd.f32 %v247, %v343
    %v345 = vpop.f32.mrf.mxu0
    %v346 = vadd.f32 %v249, %v345
    %347 = vmatmul.bf16.gmra.mxu0 %v125
    %v348 = vpop.f32.mrf.mxu0
    %v349 = vadd.f32 %v252, %v348
    %v350 = vpop.f32.mrf.mxu0
    %v351 = vadd.f32 %v254, %v350
    %352 = vmatmul.bf16.gmra.mxu0 %v126
    %v353 = vpop.f32.mrf.mxu0
    %v354 = vadd.f32 %v257, %v353
    %v355 = vpop.f32.mrf.mxu0
    %v356 = vadd.f32 %v259, %v355
    %357 = vmatmul.bf16.gmra.mxu0 %v127
    %v358 = vpop.f32.mrf.mxu0
    %v359 = vadd.f32 %v262, %v358
    %v360 = vpop.f32.mrf.mxu0
    %v361 = vadd.f32 %v264, %v360
    %362 = vdwg.mxu0
    %v363 = vpack.c.bf16 %v109, %v108
    %v364 = vpack.c.bf16 %v119, %v118
    %s365 = scalar_lea.vmem %s1, 384
    %v366 = vld [vmem:[%s365] sm:$0xf]
    %v367 = vld [vmem:[%s365 + $0x4] sm:$0xf]
    %v368 = vld [vmem:[%s365 + $0x8] sm:$0xf]
    %v369 = vld [vmem:[%s365 + $0xc] sm:$0xf]
    %v370 = vld [vmem:[%s365 + $0x10] sm:$0xf]
    %v371 = vld [vmem:[%s365 + $0x14] sm:$0xf]
    %v372 = vld [vmem:[%s365 + $0x18] sm:$0xf]
    %v373 = vld [vmem:[%s365 + $0x1c] sm:$0xf]
    %v374 = vld [vmem:[%s365 + $0x20] sm:$0xf]
    %v375 = vld [vmem:[%s365 + $0x24] sm:$0xf]
    %v376 = vld [vmem:[%s365 + $0x28] sm:$0xf]
    %v377 = vld [vmem:[%s365 + $0x2c] sm:$0xf]
    %v378 = vld [vmem:[%s365 + $0x30] sm:$0xf]
    %v379 = vld [vmem:[%s365 + $0x34] sm:$0xf]
    %v380 = vld [vmem:[%s365 + $0x38] sm:$0xf]
    %v381 = vld [vmem:[%s365 + $0x3c] sm:$0xf]
    %v398 = vunpack.c.l.b16 %v366
    %v399 = vunpack.c.l.b16 %v367
    %v400 = vunpack.c.l.b16 %v368
    %v401 = vunpack.c.l.b16 %v369
    %v402 = vunpack.c.l.b16 %v370
    %v403 = vunpack.c.l.b16 %v371
    %v404 = vunpack.c.l.b16 %v372
    %v405 = vunpack.c.l.b16 %v373
    %v406 = vunpack.c.l.b16 %v374
    %v407 = vunpack.c.l.b16 %v375
    %v408 = vunpack.c.l.b16 %v376
    %v409 = vunpack.c.l.b16 %v377
    %v410 = vunpack.c.l.b16 %v378
    %v411 = vunpack.c.l.b16 %v379
    %v412 = vunpack.c.l.b16 %v380
    %v413 = vunpack.c.l.b16 %v381
    %v414 = vpack.c.b16 %v399, %v398
    %v415 = vpack.c.b16 %v401, %v400
    %v416 = vpack.c.b16 %v403, %v402
    %v417 = vpack.c.b16 %v405, %v404
    %v418 = vpack.c.b16 %v407, %v406
    %v419 = vpack.c.b16 %v409, %v408
    %v420 = vpack.c.b16 %v411, %v410
    %v421 = vpack.c.b16 %v413, %v412
    %430 = vmatpush.bf16.msra.mxu0 %v421
    %431 = vmatpush.bf16.msra.mxu0 %v420
    %432 = vmatpush.bf16.msra.mxu0 %v419
    %433 = vmatpush.bf16.msra.mxu0 %v418
    %434 = vmatpush.bf16.msra.mxu0 %v417
    %435 = vmatpush.bf16.msra.mxu0 %v416
    %436 = vmatpush.bf16.msra.mxu0 %v415
    %437 = vmatpush.bf16.msra.mxu0 %v414
    %438 = vmatmul.bf16.gmra.mxu0 %v121
    %v439 = vpop.f32.mrf.mxu0
    %v440 = vadd.f32 0.0, %v439
    %v441 = vpop.f32.mrf.mxu0
    %v442 = vadd.f32 0.0, %v441
    %443 = vmatmul.bf16.gmra.mxu0 %v122
    %v444 = vpop.f32.mrf.mxu0
    %v445 = vadd.f32 0.0, %v444
    %v446 = vpop.f32.mrf.mxu0
    %v447 = vadd.f32 0.0, %v446
    %448 = vmatmul.bf16.gmra.mxu0 %v123
    %v449 = vpop.f32.mrf.mxu0
    %v450 = vadd.f32 0.0, %v449
    %v451 = vpop.f32.mrf.mxu0
    %v452 = vadd.f32 0.0, %v451
    %453 = vmatmul.bf16.gmra.mxu0 %v363
    %v454 = vpop.f32.mrf.mxu0
    %v455 = vadd.f32 0.0, %v454
    %v456 = vpop.f32.mrf.mxu0
    %v457 = vadd.f32 0.0, %v456
    %458 = vmatmul.bf16.gmra.mxu0 %v125
    %v459 = vpop.f32.mrf.mxu0
    %v460 = vadd.f32 0.0, %v459
    %v461 = vpop.f32.mrf.mxu0
    %v462 = vadd.f32 0.0, %v461
    %463 = vmatmul.bf16.gmra.mxu0 %v126
    %v464 = vpop.f32.mrf.mxu0
    %v465 = vadd.f32 0.0, %v464
    %v466 = vpop.f32.mrf.mxu0
    %v467 = vadd.f32 0.0, %v466
    %468 = vmatmul.bf16.gmra.mxu0 %v127
    %v469 = vpop.f32.mrf.mxu0
    %v470 = vadd.f32 0.0, %v469
    %v471 = vpop.f32.mrf.mxu0
    %v472 = vadd.f32 0.0, %v471
    %473 = vmatmul.bf16.gmra.mxu0 %v364
    %v474 = vpop.f32.mrf.mxu0
    %v475 = vadd.f32 0.0, %v474
    %v476 = vpop.f32.mrf.mxu0
    %v477 = vadd.f32 0.0, %v476
    %478 = vdwg.mxu0
    %v479 = vadd.f32 %v324, %v440
    %v480 = vadd.f32 %v326, %v442
    %v481 = vadd.f32 %v329, %v445
    %v482 = vadd.f32 %v331, %v447
    %v483 = vadd.f32 %v334, %v450
    %v484 = vadd.f32 %v336, %v452
    %v485 = vadd.f32 %v339, %v455
    %v486 = vadd.f32 %v341, %v457
    %v487 = vadd.f32 %v344, %v460
    %v488 = vadd.f32 %v346, %v462
    %v489 = vadd.f32 %v349, %v465
    %v490 = vadd.f32 %v351, %v467
    %v491 = vadd.f32 %v354, %v470
    %v492 = vadd.f32 %v356, %v472
    %v493 = vadd.f32 %v359, %v475
    %v494 = vadd.f32 %v361, %v477
    %v495 = vld [vmem:[#allocation2 + $0x1] sm:$0xff]
    %v496 = vld [vmem:[#allocation2 + $0x11] sm:$0xff]
    %v497 = vld [vmem:[#allocation2 + $0x21] sm:$0xff]
    %v498 = vld [vmem:[#allocation2 + $0x31] sm:$0xff]
    %v499 = vld [vmem:[#allocation2 + $0x41] sm:$0xff]
    %v500 = vld [vmem:[#allocation2 + $0x51] sm:$0xff]
    %v501 = vld [vmem:[#allocation2 + $0x61] sm:$0xff]
    %v502 = vld [vmem:[#allocation2 + $0x71] sm:$0xff]
    %v503 = vld [vmem:[#allocation2 + $0x81] sm:$0xff]
    %v504 = vld [vmem:[#allocation2 + $0x91] sm:$0xff]
    %v505 = vld [vmem:[#allocation2 + $0xa1] sm:$0xff]
    %v506 = vld [vmem:[#allocation2 + $0xb1] sm:$0xff]
    %v507 = vld [vmem:[#allocation2 + $0xc1] sm:$0xff]
    %v508 = vld [vmem:[#allocation2 + $0xd1] sm:$0xff]
    %v509 = vld [vmem:[#allocation2 + $0xe1] sm:$0xff]
    %v510 = vld [vmem:[#allocation2 + $0xf1] sm:$0xff]
    %v511 = vld [vmem:[#allocation2 + $0x101] sm:$0xff]
    %v512 = vld [vmem:[#allocation2 + $0x111] sm:$0xff]
    %v513 = vld [vmem:[#allocation2 + $0x121] sm:$0xff]
    %v514 = vld [vmem:[#allocation2 + $0x131] sm:$0xff]
    %v515 = vpack.c.bf16 %v496, %v495
    %v516 = vpack.c.bf16 %v498, %v497
    %v517 = vpack.c.bf16 %v500, %v499
    %v518 = vpack.c.bf16 %v502, %v501
    %v519 = vpack.c.bf16 %v506, %v505
    %v520 = vpack.c.bf16 %v508, %v507
    %v521 = vpack.c.bf16 %v510, %v509
    %v522 = vpack.c.bf16 %v512, %v511
    %s523 = scalar_lea.vmem %s1, 64
    %v524 = vld [vmem:[%s523] sm:$0xf]
    %v525 = vld [vmem:[%s523 + $0x4] sm:$0xf]
    %v526 = vld [vmem:[%s523 + $0x8] sm:$0xf]
    %v527 = vld [vmem:[%s523 + $0xc] sm:$0xf]
    %v528 = vld [vmem:[%s523 + $0x10] sm:$0xf]
    %v529 = vld [vmem:[%s523 + $0x14] sm:$0xf]
    %v530 = vld [vmem:[%s523 + $0x18] sm:$0xf]
    %v531 = vld [vmem:[%s523 + $0x1c] sm:$0xf]
    %v532 = vld [vmem:[%s523 + $0x20] sm:$0xf]
    %v533 = vld [vmem:[%s523 + $0x24] sm:$0xf]
    %v534 = vld [vmem:[%s523 + $0x28] sm:$0xf]
    %v535 = vld [vmem:[%s523 + $0x2c] sm:$0xf]
    %v536 = vld [vmem:[%s523 + $0x30] sm:$0xf]
    %v537 = vld [vmem:[%s523 + $0x34] sm:$0xf]
    %v538 = vld [vmem:[%s523 + $0x38] sm:$0xf]
    %v539 = vld [vmem:[%s523 + $0x3c] sm:$0xf]
    %v556 = vunpack.c.l.b16 %v524
    %v557 = vunpack.c.l.b16 %v525
    %v558 = vunpack.c.l.b16 %v526
    %v559 = vunpack.c.l.b16 %v527
    %v560 = vunpack.c.l.b16 %v528
    %v561 = vunpack.c.l.b16 %v529
    %v562 = vunpack.c.l.b16 %v530
    %v563 = vunpack.c.l.b16 %v531
    %v564 = vunpack.c.l.b16 %v532
    %v565 = vunpack.c.l.b16 %v533
    %v566 = vunpack.c.l.b16 %v534
    %v567 = vunpack.c.l.b16 %v535
    %v568 = vunpack.c.l.b16 %v536
    %v569 = vunpack.c.l.b16 %v537
    %v570 = vunpack.c.l.b16 %v538
    %v571 = vunpack.c.l.b16 %v539
    %v572 = vpack.c.b16 %v557, %v556
    %v573 = vpack.c.b16 %v559, %v558
    %v574 = vpack.c.b16 %v561, %v560
    %v575 = vpack.c.b16 %v563, %v562
    %v576 = vpack.c.b16 %v565, %v564
    %v577 = vpack.c.b16 %v567, %v566
    %v578 = vpack.c.b16 %v569, %v568
    %v579 = vpack.c.b16 %v571, %v570
    %588 = vmatpush.bf16.msra.mxu0 %v579
    %589 = vmatpush.bf16.msra.mxu0 %v578
    %590 = vmatpush.bf16.msra.mxu0 %v577
    %591 = vmatpush.bf16.msra.mxu0 %v576
    %592 = vmatpush.bf16.msra.mxu0 %v575
    %593 = vmatpush.bf16.msra.mxu0 %v574
    %594 = vmatpush.bf16.msra.mxu0 %v573
    %595 = vmatpush.bf16.msra.mxu0 %v572
    %596 = vmatmul.bf16.gmra.mxu0 %v515
    %v597 = vpop.f32.mrf.mxu0
    %v598 = vadd.f32 0.0, %v597
    %v599 = vpop.f32.mrf.mxu0
    %v600 = vadd.f32 0.0, %v599
    %601 = vmatmul.bf16.gmra.mxu0 %v516
    %v602 = vpop.f32.mrf.mxu0
    %v603 = vadd.f32 0.0, %v602
    %v604 = vpop.f32.mrf.mxu0
    %v605 = vadd.f32 0.0, %v604
    %606 = vmatmul.bf16.gmra.mxu0 %v517
    %v607 = vpop.f32.mrf.mxu0
    %v608 = vadd.f32 0.0, %v607
    %v609 = vpop.f32.mrf.mxu0
    %v610 = vadd.f32 0.0, %v609
    %611 = vmatmul.bf16.gmra.mxu0 %v518
    %v612 = vpop.f32.mrf.mxu0
    %v613 = vadd.f32 0.0, %v612
    %v614 = vpop.f32.mrf.mxu0
    %v615 = vadd.f32 0.0, %v614
    %616 = vmatmul.bf16.gmra.mxu0 %v519
    %v617 = vpop.f32.mrf.mxu0
    %v618 = vadd.f32 0.0, %v617
    %v619 = vpop.f32.mrf.mxu0
    %v620 = vadd.f32 0.0, %v619
    %621 = vmatmul.bf16.gmra.mxu0 %v520
    %v622 = vpop.f32.mrf.mxu0
    %v623 = vadd.f32 0.0, %v622
    %v624 = vpop.f32.mrf.mxu0
    %v625 = vadd.f32 0.0, %v624
    %626 = vmatmul.bf16.gmra.mxu0 %v521
    %v627 = vpop.f32.mrf.mxu0
    %v628 = vadd.f32 0.0, %v627
    %v629 = vpop.f32.mrf.mxu0
    %v630 = vadd.f32 0.0, %v629
    %631 = vmatmul.bf16.gmra.mxu0 %v522
    %v632 = vpop.f32.mrf.mxu0
    %v633 = vadd.f32 0.0, %v632
    %v634 = vpop.f32.mrf.mxu0
    %v635 = vadd.f32 0.0, %v634
    %636 = vdwg.mxu0
    %v637 = vadd.f32 %v479, %v598
    %v638 = vadd.f32 %v480, %v600
    %v639 = vadd.f32 %v481, %v603
    %v640 = vadd.f32 %v482, %v605
    %v641 = vadd.f32 %v483, %v608
    %v642 = vadd.f32 %v484, %v610
    %v643 = vadd.f32 %v485, %v613
    %v644 = vadd.f32 %v486, %v615
    %v645 = vadd.f32 %v487, %v618
    %v646 = vadd.f32 %v488, %v620
    %v647 = vadd.f32 %v489, %v623
    %v648 = vadd.f32 %v490, %v625
    %v649 = vadd.f32 %v491, %v628
    %v650 = vadd.f32 %v492, %v630
    %v651 = vadd.f32 %v493, %v633
    %v652 = vadd.f32 %v494, %v635
    %v653 = vpack.c.bf16 %v497, %v496
    %v654 = vpack.c.bf16 %v499, %v498
    %v655 = vpack.c.bf16 %v501, %v500
    %v656 = vpack.c.bf16 %v503, %v502
    %v657 = vpack.c.bf16 %v507, %v506
    %v658 = vpack.c.bf16 %v509, %v508
    %v659 = vpack.c.bf16 %v511, %v510
    %v660 = vpack.c.bf16 %v513, %v512
    %s661 = scalar_lea.vmem %s1, 256
    %v662 = vld [vmem:[%s661] sm:$0xf]
    %v663 = vld [vmem:[%s661 + $0x4] sm:$0xf]
    %v664 = vld [vmem:[%s661 + $0x8] sm:$0xf]
    %v665 = vld [vmem:[%s661 + $0xc] sm:$0xf]
    %v666 = vld [vmem:[%s661 + $0x10] sm:$0xf]
    %v667 = vld [vmem:[%s661 + $0x14] sm:$0xf]
    %v668 = vld [vmem:[%s661 + $0x18] sm:$0xf]
    %v669 = vld [vmem:[%s661 + $0x1c] sm:$0xf]
    %v670 = vld [vmem:[%s661 + $0x20] sm:$0xf]
    %v671 = vld [vmem:[%s661 + $0x24] sm:$0xf]
    %v672 = vld [vmem:[%s661 + $0x28] sm:$0xf]
    %v673 = vld [vmem:[%s661 + $0x2c] sm:$0xf]
    %v674 = vld [vmem:[%s661 + $0x30] sm:$0xf]
    %v675 = vld [vmem:[%s661 + $0x34] sm:$0xf]
    %v676 = vld [vmem:[%s661 + $0x38] sm:$0xf]
    %v677 = vld [vmem:[%s661 + $0x3c] sm:$0xf]
    %v694 = vunpack.c.l.b16 %v662
    %v695 = vunpack.c.l.b16 %v663
    %v696 = vunpack.c.l.b16 %v664
    %v697 = vunpack.c.l.b16 %v665
    %v698 = vunpack.c.l.b16 %v666
    %v699 = vunpack.c.l.b16 %v667
    %v700 = vunpack.c.l.b16 %v668
    %v701 = vunpack.c.l.b16 %v669
    %v702 = vunpack.c.l.b16 %v670
    %v703 = vunpack.c.l.b16 %v671
    %v704 = vunpack.c.l.b16 %v672
    %v705 = vunpack.c.l.b16 %v673
    %v706 = vunpack.c.l.b16 %v674
    %v707 = vunpack.c.l.b16 %v675
    %v708 = vunpack.c.l.b16 %v676
    %v709 = vunpack.c.l.b16 %v677
    %v710 = vpack.c.b16 %v695, %v694
    %v711 = vpack.c.b16 %v697, %v696
    %v712 = vpack.c.b16 %v699, %v698
    %v713 = vpack.c.b16 %v701, %v700
    %v714 = vpack.c.b16 %v703, %v702
    %v715 = vpack.c.b16 %v705, %v704
    %v716 = vpack.c.b16 %v707, %v706
    %v717 = vpack.c.b16 %v709, %v708
    %726 = vmatpush.bf16.msra.mxu0 %v717
    %727 = vmatpush.bf16.msra.mxu0 %v716
    %728 = vmatpush.bf16.msra.mxu0 %v715
    %729 = vmatpush.bf16.msra.mxu0 %v714
    %730 = vmatpush.bf16.msra.mxu0 %v713
    %731 = vmatpush.bf16.msra.mxu0 %v712
    %732 = vmatpush.bf16.msra.mxu0 %v711
    %733 = vmatpush.bf16.msra.mxu0 %v710
    %734 = vmatmul.bf16.gmra.mxu0 %v653
    %v735 = vpop.f32.mrf.mxu0
    %v736 = vadd.f32 0.0, %v735
    %v737 = vpop.f32.mrf.mxu0
    %v738 = vadd.f32 0.0, %v737
    %739 = vmatmul.bf16.gmra.mxu0 %v654
    %v740 = vpop.f32.mrf.mxu0
    %v741 = vadd.f32 0.0, %v740
    %v742 = vpop.f32.mrf.mxu0
    %v743 = vadd.f32 0.0, %v742
    %744 = vmatmul.bf16.gmra.mxu0 %v655
    %v745 = vpop.f32.mrf.mxu0
    %v746 = vadd.f32 0.0, %v745
    %v747 = vpop.f32.mrf.mxu0
    %v748 = vadd.f32 0.0, %v747
    %749 = vmatmul.bf16.gmra.mxu0 %v656
    %v750 = vpop.f32.mrf.mxu0
    %v751 = vadd.f32 0.0, %v750
    %v752 = vpop.f32.mrf.mxu0
    %v753 = vadd.f32 0.0, %v752
    %754 = vmatmul.bf16.gmra.mxu0 %v657
    %v755 = vpop.f32.mrf.mxu0
    %v756 = vadd.f32 0.0, %v755
    %v757 = vpop.f32.mrf.mxu0
    %v758 = vadd.f32 0.0, %v757
    %759 = vmatmul.bf16.gmra.mxu0 %v658
    %v760 = vpop.f32.mrf.mxu0
    %v761 = vadd.f32 0.0, %v760
    %v762 = vpop.f32.mrf.mxu0
    %v763 = vadd.f32 0.0, %v762
    %764 = vmatmul.bf16.gmra.mxu0 %v659
    %v765 = vpop.f32.mrf.mxu0
    %v766 = vadd.f32 0.0, %v765
    %v767 = vpop.f32.mrf.mxu0
    %v768 = vadd.f32 0.0, %v767
    %769 = vmatmul.bf16.gmra.mxu0 %v660
    %v770 = vpop.f32.mrf.mxu0
    %v771 = vadd.f32 0.0, %v770
    %v772 = vpop.f32.mrf.mxu0
    %v773 = vadd.f32 0.0, %v772
    %774 = vdwg.mxu0
    %v775 = vadd.f32 %v637, %v736
    %v776 = vadd.f32 %v638, %v738
    %v777 = vadd.f32 %v639, %v741
    %v778 = vadd.f32 %v640, %v743
    %v779 = vadd.f32 %v641, %v746
    %v780 = vadd.f32 %v642, %v748
    %v781 = vadd.f32 %v643, %v751
    %v782 = vadd.f32 %v644, %v753
    %v783 = vadd.f32 %v645, %v756
    %v784 = vadd.f32 %v646, %v758
    %v785 = vadd.f32 %v647, %v761
    %v786 = vadd.f32 %v648, %v763
    %v787 = vadd.f32 %v649, %v766
    %v788 = vadd.f32 %v650, %v768
    %v789 = vadd.f32 %v651, %v771
    %v790 = vadd.f32 %v652, %v773
    %v791 = vpack.c.bf16 %v504, %v503
    %v792 = vpack.c.bf16 %v514, %v513
    %s793 = scalar_lea.vmem %s1, 448
    %v794 = vld [vmem:[%s793] sm:$0xf]
    %v795 = vld [vmem:[%s793 + $0x4] sm:$0xf]
    %v796 = vld [vmem:[%s793 + $0x8] sm:$0xf]
    %v797 = vld [vmem:[%s793 + $0xc] sm:$0xf]
    %v798 = vld [vmem:[%s793 + $0x10] sm:$0xf]
    %v799 = vld [vmem:[%s793 + $0x14] sm:$0xf]
    %v800 = vld [vmem:[%s793 + $0x18] sm:$0xf]
    %v801 = vld [vmem:[%s793 + $0x1c] sm:$0xf]
    %v802 = vld [vmem:[%s793 + $0x20] sm:$0xf]
    %v803 = vld [vmem:[%s793 + $0x24] sm:$0xf]
    %v804 = vld [vmem:[%s793 + $0x28] sm:$0xf]
    %v805 = vld [vmem:[%s793 + $0x2c] sm:$0xf]
    %v806 = vld [vmem:[%s793 + $0x30] sm:$0xf]
    %v807 = vld [vmem:[%s793 + $0x34] sm:$0xf]
    %v808 = vld [vmem:[%s793 + $0x38] sm:$0xf]
    %v809 = vld [vmem:[%s793 + $0x3c] sm:$0xf]
    %v826 = vunpack.c.l.b16 %v794
    %v827 = vunpack.c.l.b16 %v795
    %v828 = vunpack.c.l.b16 %v796
    %v829 = vunpack.c.l.b16 %v797
    %v830 = vunpack.c.l.b16 %v798
    %v831 = vunpack.c.l.b16 %v799
    %v832 = vunpack.c.l.b16 %v800
    %v833 = vunpack.c.l.b16 %v801
    %v834 = vunpack.c.l.b16 %v802
    %v835 = vunpack.c.l.b16 %v803
    %v836 = vunpack.c.l.b16 %v804
    %v837 = vunpack.c.l.b16 %v805
    %v838 = vunpack.c.l.b16 %v806
    %v839 = vunpack.c.l.b16 %v807
    %v840 = vunpack.c.l.b16 %v808
    %v841 = vunpack.c.l.b16 %v809
    %v842 = vpack.c.b16 %v827, %v826
    %v843 = vpack.c.b16 %v829, %v828
    %v844 = vpack.c.b16 %v831, %v830
    %v845 = vpack.c.b16 %v833, %v832
    %v846 = vpack.c.b16 %v835, %v834
    %v847 = vpack.c.b16 %v837, %v836
    %v848 = vpack.c.b16 %v839, %v838
    %v849 = vpack.c.b16 %v841, %v840
    %858 = vmatpush.bf16.msra.mxu0 %v849
    %859 = vmatpush.bf16.msra.mxu0 %v848
    %860 = vmatpush.bf16.msra.mxu0 %v847
    %861 = vmatpush.bf16.msra.mxu0 %v846
    %862 = vmatpush.bf16.msra.mxu0 %v845
    %863 = vmatpush.bf16.msra.mxu0 %v844
    %864 = vmatpush.bf16.msra.mxu0 %v843
    %865 = vmatpush.bf16.msra.mxu0 %v842
    %866 = vmatmul.bf16.gmra.mxu0 %v516
    %v867 = vpop.f32.mrf.mxu0
    %v868 = vadd.f32 0.0, %v867
    %v869 = vpop.f32.mrf.mxu0
    %v870 = vadd.f32 0.0, %v869
    %871 = vmatmul.bf16.gmra.mxu0 %v517
    %v872 = vpop.f32.mrf.mxu0
    %v873 = vadd.f32 0.0, %v872
    %v874 = vpop.f32.mrf.mxu0
    %v875 = vadd.f32 0.0, %v874
    %876 = vmatmul.bf16.gmra.mxu0 %v518
    %v877 = vpop.f32.mrf.mxu0
    %v878 = vadd.f32 0.0, %v877
    %v879 = vpop.f32.mrf.mxu0
    %v880 = vadd.f32 0.0, %v879
    %881 = vmatmul.bf16.gmra.mxu0 %v791
    %v882 = vpop.f32.mrf.mxu0
    %v883 = vadd.f32 0.0, %v882
    %v884 = vpop.f32.mrf.mxu0
    %v885 = vadd.f32 0.0, %v884
    %886 = vmatmul.bf16.gmra.mxu0 %v520
    %v887 = vpop.f32.mrf.mxu0
    %v888 = vadd.f32 0.0, %v887
    %v889 = vpop.f32.mrf.mxu0
    %v890 = vadd.f32 0.0, %v889
    %891 = vmatmul.bf16.gmra.mxu0 %v521
    %v892 = vpop.f32.mrf.mxu0
    %v893 = vadd.f32 0.0, %v892
    %v894 = vpop.f32.mrf.mxu0
    %v895 = vadd.f32 0.0, %v894
    %896 = vmatmul.bf16.gmra.mxu0 %v522
    %v897 = vpop.f32.mrf.mxu0
    %v898 = vadd.f32 0.0, %v897
    %v899 = vpop.f32.mrf.mxu0
    %v900 = vadd.f32 0.0, %v899
    %901 = vmatmul.bf16.gmra.mxu0 %v792
    %v902 = vpop.f32.mrf.mxu0
    %v903 = vadd.f32 0.0, %v902
    %v904 = vpop.f32.mrf.mxu0
    %v905 = vadd.f32 0.0, %v904
    %906 = vdwg.mxu0
    %v907 = vadd.f32 %v775, %v868
    %v908 = vadd.f32 %v776, %v870
    %v909 = vadd.f32 %v777, %v873
    %v910 = vadd.f32 %v778, %v875
    %v911 = vadd.f32 %v779, %v878
    %v912 = vadd.f32 %v780, %v880
    %v913 = vadd.f32 %v781, %v883
    %v914 = vadd.f32 %v782, %v885
    %v915 = vadd.f32 %v783, %v888
    %v916 = vadd.f32 %v784, %v890
    %v917 = vadd.f32 %v785, %v893
    %v918 = vadd.f32 %v786, %v895
    %v919 = vadd.f32 %v787, %v898
    %v920 = vadd.f32 %v788, %v900
    %v921 = vadd.f32 %v789, %v903
    %v922 = vadd.f32 %v790, %v905
    %v923 = vld [vmem:[#allocation2 + $0x2] sm:$0xff]
    %v924 = vld [vmem:[#allocation2 + $0x12] sm:$0xff]
    %v925 = vld [vmem:[#allocation2 + $0x22] sm:$0xff]
    %v926 = vld [vmem:[#allocation2 + $0x32] sm:$0xff]
    %v927 = vld [vmem:[#allocation2 + $0x42] sm:$0xff]
    %v928 = vld [vmem:[#allocation2 + $0x52] sm:$0xff]
    %v929 = vld [vmem:[#allocation2 + $0x62] sm:$0xff]
    %v930 = vld [vmem:[#allocation2 + $0x72] sm:$0xff]
    %v931 = vld [vmem:[#allocation2 + $0x82] sm:$0xff]
    %v932 = vld [vmem:[#allocation2 + $0x92] sm:$0xff]
    %v933 = vld [vmem:[#allocation2 + $0xa2] sm:$0xff]
    %v934 = vld [vmem:[#allocation2 + $0xb2] sm:$0xff]
    %v935 = vld [vmem:[#allocation2 + $0xc2] sm:$0xff]
    %v936 = vld [vmem:[#allocation2 + $0xd2] sm:$0xff]
    %v937 = vld [vmem:[#allocation2 + $0xe2] sm:$0xff]
    %v938 = vld [vmem:[#allocation2 + $0xf2] sm:$0xff]
    %v939 = vld [vmem:[#allocation2 + $0x102] sm:$0xff]
    %v940 = vld [vmem:[#allocation2 + $0x112] sm:$0xff]
    %v941 = vld [vmem:[#allocation2 + $0x122] sm:$0xff]
    %v942 = vld [vmem:[#allocation2 + $0x132] sm:$0xff]
    %v943 = vpack.c.bf16 %v924, %v923
    %v944 = vpack.c.bf16 %v926, %v925
    %v945 = vpack.c.bf16 %v928, %v927
    %v946 = vpack.c.bf16 %v930, %v929
    %v947 = vpack.c.bf16 %v934, %v933
    %v948 = vpack.c.bf16 %v936, %v935
    %v949 = vpack.c.bf16 %v938, %v937
    %v950 = vpack.c.bf16 %v940, %v939
    %s951 = scalar_lea.vmem %s1, 128
    %v952 = vld [vmem:[%s951] sm:$0xf]
    %v953 = vld [vmem:[%s951 + $0x4] sm:$0xf]
    %v954 = vld [vmem:[%s951 + $0x8] sm:$0xf]
    %v955 = vld [vmem:[%s951 + $0xc] sm:$0xf]
    %v956 = vld [vmem:[%s951 + $0x10] sm:$0xf]
    %v957 = vld [vmem:[%s951 + $0x14] sm:$0xf]
    %v958 = vld [vmem:[%s951 + $0x18] sm:$0xf]
    %v959 = vld [vmem:[%s951 + $0x1c] sm:$0xf]
    %v960 = vld [vmem:[%s951 + $0x20] sm:$0xf]
    %v961 = vld [vmem:[%s951 + $0x24] sm:$0xf]
    %v962 = vld [vmem:[%s951 + $0x28] sm:$0xf]
    %v963 = vld [vmem:[%s951 + $0x2c] sm:$0xf]
    %v964 = vld [vmem:[%s951 + $0x30] sm:$0xf]
    %v965 = vld [vmem:[%s951 + $0x34] sm:$0xf]
    %v966 = vld [vmem:[%s951 + $0x38] sm:$0xf]
    %v967 = vld [vmem:[%s951 + $0x3c] sm:$0xf]
    %v984 = vunpack.c.l.b16 %v952
    %v985 = vunpack.c.l.b16 %v953
    %v986 = vunpack.c.l.b16 %v954
    %v987 = vunpack.c.l.b16 %v955
    %v988 = vunpack.c.l.b16 %v956
    %v989 = vunpack.c.l.b16 %v957
    %v990 = vunpack.c.l.b16 %v958
    %v991 = vunpack.c.l.b16 %v959
    %v992 = vunpack.c.l.b16 %v960
    %v993 = vunpack.c.l.b16 %v961
    %v994 = vunpack.c.l.b16 %v962
    %v995 = vunpack.c.l.b16 %v963
    %v996 = vunpack.c.l.b16 %v964
    %v997 = vunpack.c.l.b16 %v965
    %v998 = vunpack.c.l.b16 %v966
    %v999 = vunpack.c.l.b16 %v967
    %v1000 = vpack.c.b16 %v985, %v984
    %v1001 = vpack.c.b16 %v987, %v986
    %v1002 = vpack.c.b16 %v989, %v988
    %v1003 = vpack.c.b16 %v991, %v990
    %v1004 = vpack.c.b16 %v993, %v992
    %v1005 = vpack.c.b16 %v995, %v994
    %v1006 = vpack.c.b16 %v997, %v996
    %v1007 = vpack.c.b16 %v999, %v998
    %1016 = vmatpush.bf16.msra.mxu0 %v1007
    %1017 = vmatpush.bf16.msra.mxu0 %v1006
    %1018 = vmatpush.bf16.msra.mxu0 %v1005
    %1019 = vmatpush.bf16.msra.mxu0 %v1004
    %1020 = vmatpush.bf16.msra.mxu0 %v1003
    %1021 = vmatpush.bf16.msra.mxu0 %v1002
    %1022 = vmatpush.bf16.msra.mxu0 %v1001
    %1023 = vmatpush.bf16.msra.mxu0 %v1000
    %1024 = vmatmul.bf16.gmra.mxu0 %v943
    %v1025 = vpop.f32.mrf.mxu0
    %v1026 = vadd.f32 0.0, %v1025
    %v1027 = vpop.f32.mrf.mxu0
    %v1028 = vadd.f32 0.0, %v1027
    %1029 = vmatmul.bf16.gmra.mxu0 %v944
    %v1030 = vpop.f32.mrf.mxu0
    %v1031 = vadd.f32 0.0, %v1030
    %v1032 = vpop.f32.mrf.mxu0
    %v1033 = vadd.f32 0.0, %v1032
    %1034 = vmatmul.bf16.gmra.mxu0 %v945
    %v1035 = vpop.f32.mrf.mxu0
    %v1036 = vadd.f32 0.0, %v1035
    %v1037 = vpop.f32.mrf.mxu0
    %v1038 = vadd.f32 0.0, %v1037
    %1039 = vmatmul.bf16.gmra.mxu0 %v946
    %v1040 = vpop.f32.mrf.mxu0
    %v1041 = vadd.f32 0.0, %v1040
    %v1042 = vpop.f32.mrf.mxu0
    %v1043 = vadd.f32 0.0, %v1042
    %1044 = vmatmul.bf16.gmra.mxu0 %v947
    %v1045 = vpop.f32.mrf.mxu0
    %v1046 = vadd.f32 0.0, %v1045
    %v1047 = vpop.f32.mrf.mxu0
    %v1048 = vadd.f32 0.0, %v1047
    %1049 = vmatmul.bf16.gmra.mxu0 %v948
    %v1050 = vpop.f32.mrf.mxu0
    %v1051 = vadd.f32 0.0, %v1050
    %v1052 = vpop.f32.mrf.mxu0
    %v1053 = vadd.f32 0.0, %v1052
    %1054 = vmatmul.bf16.gmra.mxu0 %v949
    %v1055 = vpop.f32.mrf.mxu0
    %v1056 = vadd.f32 0.0, %v1055
    %v1057 = vpop.f32.mrf.mxu0
    %v1058 = vadd.f32 0.0, %v1057
    %1059 = vmatmul.bf16.gmra.mxu0 %v950
    %v1060 = vpop.f32.mrf.mxu0
    %v1061 = vadd.f32 0.0, %v1060
    %v1062 = vpop.f32.mrf.mxu0
    %v1063 = vadd.f32 0.0, %v1062
    %1064 = vdwg.mxu0
    %v1065 = vadd.f32 %v907, %v1026
    %v1066 = vadd.f32 %v908, %v1028
    %v1067 = vadd.f32 %v909, %v1031
    %v1068 = vadd.f32 %v910, %v1033
    %v1069 = vadd.f32 %v911, %v1036
    %v1070 = vadd.f32 %v912, %v1038
    %v1071 = vadd.f32 %v913, %v1041
    %v1072 = vadd.f32 %v914, %v1043
    %v1073 = vadd.f32 %v915, %v1046
    %v1074 = vadd.f32 %v916, %v1048
    %v1075 = vadd.f32 %v917, %v1051
    %v1076 = vadd.f32 %v918, %v1053
    %v1077 = vadd.f32 %v919, %v1056
    %v1078 = vadd.f32 %v920, %v1058
    %v1079 = vadd.f32 %v921, %v1061
    %v1080 = vadd.f32 %v922, %v1063
    %v1081 = vpack.c.bf16 %v925, %v924
    %v1082 = vpack.c.bf16 %v927, %v926
    %v1083 = vpack.c.bf16 %v929, %v928
    %v1084 = vpack.c.bf16 %v931, %v930
    %v1085 = vpack.c.bf16 %v935, %v934
    %v1086 = vpack.c.bf16 %v937, %v936
    %v1087 = vpack.c.bf16 %v939, %v938
    %v1088 = vpack.c.bf16 %v941, %v940
    %s1089 = scalar_lea.vmem %s1, 320
    %v1090 = vld [vmem:[%s1089] sm:$0xf]
    %v1091 = vld [vmem:[%s1089 + $0x4] sm:$0xf]
    %v1092 = vld [vmem:[%s1089 + $0x8] sm:$0xf]
    %v1093 = vld [vmem:[%s1089 + $0xc] sm:$0xf]
    %v1094 = vld [vmem:[%s1089 + $0x10] sm:$0xf]
    %v1095 = vld [vmem:[%s1089 + $0x14] sm:$0xf]
    %v1096 = vld [vmem:[%s1089 + $0x18] sm:$0xf]
    %v1097 = vld [vmem:[%s1089 + $0x1c] sm:$0xf]
    %v1098 = vld [vmem:[%s1089 + $0x20] sm:$0xf]
    %v1099 = vld [vmem:[%s1089 + $0x24] sm:$0xf]
    %v1100 = vld [vmem:[%s1089 + $0x28] sm:$0xf]
    %v1101 = vld [vmem:[%s1089 + $0x2c] sm:$0xf]
    %v1102 = vld [vmem:[%s1089 + $0x30] sm:$0xf]
    %v1103 = vld [vmem:[%s1089 + $0x34] sm:$0xf]
    %v1104 = vld [vmem:[%s1089 + $0x38] sm:$0xf]
    %v1105 = vld [vmem:[%s1089 + $0x3c] sm:$0xf]
    %v1122 = vunpack.c.l.b16 %v1090
    %v1123 = vunpack.c.l.b16 %v1091
    %v1124 = vunpack.c.l.b16 %v1092
    %v1125 = vunpack.c.l.b16 %v1093
    %v1126 = vunpack.c.l.b16 %v1094
    %v1127 = vunpack.c.l.b16 %v1095
    %v1128 = vunpack.c.l.b16 %v1096
    %v1129 = vunpack.c.l.b16 %v1097
    %v1130 = vunpack.c.l.b16 %v1098
    %v1131 = vunpack.c.l.b16 %v1099
    %v1132 = vunpack.c.l.b16 %v1100
    %v1133 = vunpack.c.l.b16 %v1101
    %v1134 = vunpack.c.l.b16 %v1102
    %v1135 = vunpack.c.l.b16 %v1103
    %v1136 = vunpack.c.l.b16 %v1104
    %v1137 = vunpack.c.l.b16 %v1105
    %v1138 = vpack.c.b16 %v1123, %v1122
    %v1139 = vpack.c.b16 %v1125, %v1124
    %v1140 = vpack.c.b16 %v1127, %v1126
    %v1141 = vpack.c.b16 %v1129, %v1128
    %v1142 = vpack.c.b16 %v1131, %v1130
    %v1143 = vpack.c.b16 %v1133, %v1132
    %v1144 = vpack.c.b16 %v1135, %v1134
    %v1145 = vpack.c.b16 %v1137, %v1136
    %1154 = vmatpush.bf16.msra.mxu0 %v1145
    %1155 = vmatpush.bf16.msra.mxu0 %v1144
    %1156 = vmatpush.bf16.msra.mxu0 %v1143
    %1157 = vmatpush.bf16.msra.mxu0 %v1142
    %1158 = vmatpush.bf16.msra.mxu0 %v1141
    %1159 = vmatpush.bf16.msra.mxu0 %v1140
    %1160 = vmatpush.bf16.msra.mxu0 %v1139
    %1161 = vmatpush.bf16.msra.mxu0 %v1138
    %1162 = vmatmul.bf16.gmra.mxu0 %v1081
    %v1163 = vpop.f32.mrf.mxu0
    %v1164 = vadd.f32 0.0, %v1163
    %v1165 = vpop.f32.mrf.mxu0
    %v1166 = vadd.f32 0.0, %v1165
    %1167 = vmatmul.bf16.gmra.mxu0 %v1082
    %v1168 = vpop.f32.mrf.mxu0
    %v1169 = vadd.f32 0.0, %v1168
    %v1170 = vpop.f32.mrf.mxu0
    %v1171 = vadd.f32 0.0, %v1170
    %1172 = vmatmul.bf16.gmra.mxu0 %v1083
    %v1173 = vpop.f32.mrf.mxu0
    %v1174 = vadd.f32 0.0, %v1173
    %v1175 = vpop.f32.mrf.mxu0
    %v1176 = vadd.f32 0.0, %v1175
    %1177 = vmatmul.bf16.gmra.mxu0 %v1084
    %v1178 = vpop.f32.mrf.mxu0
    %v1179 = vadd.f32 0.0, %v1178
    %v1180 = vpop.f32.mrf.mxu0
    %v1181 = vadd.f32 0.0, %v1180
    %1182 = vmatmul.bf16.gmra.mxu0 %v1085
    %v1183 = vpop.f32.mrf.mxu0
    %v1184 = vadd.f32 0.0, %v1183
    %v1185 = vpop.f32.mrf.mxu0
    %v1186 = vadd.f32 0.0, %v1185
    %1187 = vmatmul.bf16.gmra.mxu0 %v1086
    %v1188 = vpop.f32.mrf.mxu0
    %v1189 = vadd.f32 0.0, %v1188
    %v1190 = vpop.f32.mrf.mxu0
    %v1191 = vadd.f32 0.0, %v1190
    %1192 = vmatmul.bf16.gmra.mxu0 %v1087
    %v1193 = vpop.f32.mrf.mxu0
    %v1194 = vadd.f32 0.0, %v1193
    %v1195 = vpop.f32.mrf.mxu0
    %v1196 = vadd.f32 0.0, %v1195
    %1197 = vmatmul.bf16.gmra.mxu0 %v1088
    %v1198 = vpop.f32.mrf.mxu0
    %v1199 = vadd.f32 0.0, %v1198
    %v1200 = vpop.f32.mrf.mxu0
    %v1201 = vadd.f32 0.0, %v1200
    %1202 = vdwg.mxu0
    %v1203 = vadd.f32 %v1065, %v1164
    %v1204 = vadd.f32 %v1066, %v1166
    %v1205 = vadd.f32 %v1067, %v1169
    %v1206 = vadd.f32 %v1068, %v1171
    %v1207 = vadd.f32 %v1069, %v1174
    %v1208 = vadd.f32 %v1070, %v1176
    %v1209 = vadd.f32 %v1071, %v1179
    %v1210 = vadd.f32 %v1072, %v1181
    %v1211 = vadd.f32 %v1073, %v1184
    %v1212 = vadd.f32 %v1074, %v1186
    %v1213 = vadd.f32 %v1075, %v1189
    %v1214 = vadd.f32 %v1076, %v1191
    %v1215 = vadd.f32 %v1077, %v1194
    %v1216 = vadd.f32 %v1078, %v1196
    %v1217 = vadd.f32 %v1079, %v1199
    %v1218 = vadd.f32 %v1080, %v1201
    %v1219 = vpack.c.bf16 %v932, %v931
    %v1220 = vpack.c.bf16 %v942, %v941
    %s1221 = scalar_lea.vmem %s1, 512
    %v1222 = vld [vmem:[%s1221] sm:$0xf]
    %v1223 = vld [vmem:[%s1221 + $0x4] sm:$0xf]
    %v1224 = vld [vmem:[%s1221 + $0x8] sm:$0xf]
    %v1225 = vld [vmem:[%s1221 + $0xc] sm:$0xf]
    %v1226 = vld [vmem:[%s1221 + $0x10] sm:$0xf]
    %v1227 = vld [vmem:[%s1221 + $0x14] sm:$0xf]
    %v1228 = vld [vmem:[%s1221 + $0x18] sm:$0xf]
    %v1229 = vld [vmem:[%s1221 + $0x1c] sm:$0xf]
    %v1230 = vld [vmem:[%s1221 + $0x20] sm:$0xf]
    %v1231 = vld [vmem:[%s1221 + $0x24] sm:$0xf]
    %v1232 = vld [vmem:[%s1221 + $0x28] sm:$0xf]
    %v1233 = vld [vmem:[%s1221 + $0x2c] sm:$0xf]
    %v1234 = vld [vmem:[%s1221 + $0x30] sm:$0xf]
    %v1235 = vld [vmem:[%s1221 + $0x34] sm:$0xf]
    %v1236 = vld [vmem:[%s1221 + $0x38] sm:$0xf]
    %v1237 = vld [vmem:[%s1221 + $0x3c] sm:$0xf]
    %v1254 = vunpack.c.l.b16 %v1222
    %v1255 = vunpack.c.l.b16 %v1223
    %v1256 = vunpack.c.l.b16 %v1224
    %v1257 = vunpack.c.l.b16 %v1225
    %v1258 = vunpack.c.l.b16 %v1226
    %v1259 = vunpack.c.l.b16 %v1227
    %v1260 = vunpack.c.l.b16 %v1228
    %v1261 = vunpack.c.l.b16 %v1229
    %v1262 = vunpack.c.l.b16 %v1230
    %v1263 = vunpack.c.l.b16 %v1231
    %v1264 = vunpack.c.l.b16 %v1232
    %v1265 = vunpack.c.l.b16 %v1233
    %v1266 = vunpack.c.l.b16 %v1234
    %v1267 = vunpack.c.l.b16 %v1235
    %v1268 = vunpack.c.l.b16 %v1236
    %v1269 = vunpack.c.l.b16 %v1237
    %v1270 = vpack.c.b16 %v1255, %v1254
    %v1271 = vpack.c.b16 %v1257, %v1256
    %v1272 = vpack.c.b16 %v1259, %v1258
    %v1273 = vpack.c.b16 %v1261, %v1260
    %v1274 = vpack.c.b16 %v1263, %v1262
    %v1275 = vpack.c.b16 %v1265, %v1264
    %v1276 = vpack.c.b16 %v1267, %v1266
    %v1277 = vpack.c.b16 %v1269, %v1268
    %1286 = vmatpush.bf16.msra.mxu0 %v1277
    %1287 = vmatpush.bf16.msra.mxu0 %v1276
    %1288 = vmatpush.bf16.msra.mxu0 %v1275
    %1289 = vmatpush.bf16.msra.mxu0 %v1274
    %1290 = vmatpush.bf16.msra.mxu0 %v1273
    %1291 = vmatpush.bf16.msra.mxu0 %v1272
    %1292 = vmatpush.bf16.msra.mxu0 %v1271
    %1293 = vmatpush.bf16.msra.mxu0 %v1270
    %1294 = vmatmul.bf16.gmra.mxu0 %v944
    %v1295 = vpop.f32.mrf.mxu0
    %v1296 = vadd.f32 0.0, %v1295
    %v1297 = vpop.f32.mrf.mxu0
    %v1298 = vadd.f32 0.0, %v1297
    %1299 = vmatmul.bf16.gmra.mxu0 %v945
    %v1300 = vpop.f32.mrf.mxu0
    %v1301 = vadd.f32 0.0, %v1300
    %v1302 = vpop.f32.mrf.mxu0
    %v1303 = vadd.f32 0.0, %v1302
    %1304 = vmatmul.bf16.gmra.mxu0 %v946
    %v1305 = vpop.f32.mrf.mxu0
    %v1306 = vadd.f32 0.0, %v1305
    %v1307 = vpop.f32.mrf.mxu0
    %v1308 = vadd.f32 0.0, %v1307
    %1309 = vmatmul.bf16.gmra.mxu0 %v1219
    %v1310 = vpop.f32.mrf.mxu0
    %v1311 = vadd.f32 0.0, %v1310
    %v1312 = vpop.f32.mrf.mxu0
    %v1313 = vadd.f32 0.0, %v1312
    %1314 = vmatmul.bf16.gmra.mxu0 %v948
    %v1315 = vpop.f32.mrf.mxu0
    %v1316 = vadd.f32 0.0, %v1315
    %v1317 = vpop.f32.mrf.mxu0
    %v1318 = vadd.f32 0.0, %v1317
    %1319 = vmatmul.bf16.gmra.mxu0 %v949
    %v1320 = vpop.f32.mrf.mxu0
    %v1321 = vadd.f32 0.0, %v1320
    %v1322 = vpop.f32.mrf.mxu0
    %v1323 = vadd.f32 0.0, %v1322
    %1324 = vmatmul.bf16.gmra.mxu0 %v950
    %v1325 = vpop.f32.mrf.mxu0
    %v1326 = vadd.f32 0.0, %v1325
    %v1327 = vpop.f32.mrf.mxu0
    %v1328 = vadd.f32 0.0, %v1327
    %1329 = vmatmul.bf16.gmra.mxu0 %v1220
    %v1330 = vpop.f32.mrf.mxu0
    %v1331 = vadd.f32 0.0, %v1330
    %v1332 = vpop.f32.mrf.mxu0
    %v1333 = vadd.f32 0.0, %v1332
    %1334 = vdwg.mxu0
    %v1335 = vadd.f32 %v1203, %v1296
    %v1336 = vadd.f32 %v1204, %v1298
    %v1337 = vadd.f32 %v1205, %v1301
    %v1338 = vadd.f32 %v1206, %v1303
    %v1339 = vadd.f32 %v1207, %v1306
    %v1340 = vadd.f32 %v1208, %v1308
    %v1341 = vadd.f32 %v1209, %v1311
    %v1342 = vadd.f32 %v1210, %v1313
    %v1343 = vadd.f32 %v1211, %v1316
    %v1344 = vadd.f32 %v1212, %v1318
    %v1345 = vadd.f32 %v1213, %v1321
    %v1346 = vadd.f32 %v1214, %v1323
    %v1347 = vadd.f32 %v1215, %v1326
    %v1348 = vadd.f32 %v1216, %v1328
    %v1349 = vadd.f32 %v1217, %v1331
    %v1350 = vadd.f32 %v1218, %v1333
    %v1351 = vadd.f32 %v1335, %v1343
    %v1352 = vadd.f32 %v1336, %v1344
    %v1353 = vadd.f32 %v1337, %v1345
    %v1354 = vadd.f32 %v1338, %v1346
    %v1355 = vadd.f32 %v1339, %v1347
    %v1356 = vadd.f32 %v1340, %v1348
    %v1357 = vadd.f32 %v1341, %v1349
    %v1358 = vadd.f32 %v1342, %v1350
    %v1359 = vadd.f32 %v1351, %v1352
    %v1360 = vadd.f32 %v1359, %v1353
    %v1361 = vadd.f32 %v1360, %v1354
    %v1362 = vadd.f32 %v1361, %v1355
    %v1363 = vadd.f32 %v1362, %v1356
    %v1364 = vadd.f32 %v1363, %v1357
    %v1365 = vadd.f32 %v1364, %v1358
    %v1366 = vrot.slane %v1365, 4
    %v1367 = vadd.f32 %v1365, %v1366
    %v1368 = vrot.slane %v1367, 2
    %v1369 = vadd.f32 %v1367, %v1368
    %v1370 = vrot.slane %v1369, 1
    %v1371 = vadd.f32 %v1369, %v1370
    %v1372 = vrcp.pop 128.0
    %v1373 = vmul.f32 128.0, %v1372
    %v1374 = vsub.f32 1.0, %v1373
    %v1375 = vmul.f32 %v1372, %v1374
    %v1376 = vadd.f32 %v1372, %v1375
    %vm1377 = vweird.f32 %v1372
    %v1378 = vsel %vm1377, %v1372, %v1376
    %v1379 = vmul.f32 %v1371, %v1378
    %v1380 = vsub.f32 %v1335, %v1379
    %v1381 = vsub.f32 %v1336, %v1379
    %v1382 = vsub.f32 %v1337, %v1379
    %v1383 = vsub.f32 %v1338, %v1379
    %v1384 = vsub.f32 %v1339, %v1379
    %v1385 = vsub.f32 %v1340, %v1379
    %v1386 = vsub.f32 %v1341, %v1379
    %v1387 = vsub.f32 %v1342, %v1379
    %v1388 = vsub.f32 %v1343, %v1379
    %v1389 = vsub.f32 %v1344, %v1379
    %v1390 = vsub.f32 %v1345, %v1379
    %v1391 = vsub.f32 %v1346, %v1379
    %v1392 = vsub.f32 %v1347, %v1379
    %v1393 = vsub.f32 %v1348, %v1379
    %v1394 = vsub.f32 %v1349, %v1379
    %v1395 = vsub.f32 %v1350, %v1379
    %v1396 = vmul.f32 %v1380, %v1380
    %v1397 = vmul.f32 %v1381, %v1381
    %v1398 = vmul.f32 %v1382, %v1382
    %v1399 = vmul.f32 %v1383, %v1383
    %v1400 = vmul.f32 %v1384, %v1384
    %v1401 = vmul.f32 %v1385, %v1385
    %v1402 = vmul.f32 %v1386, %v1386
    %v1403 = vmul.f32 %v1387, %v1387
    %v1404 = vmul.f32 %v1388, %v1388
    %v1405 = vmul.f32 %v1389, %v1389
    %v1406 = vmul.f32 %v1390, %v1390
    %v1407 = vmul.f32 %v1391, %v1391
    %v1408 = vmul.f32 %v1392, %v1392
    %v1409 = vmul.f32 %v1393, %v1393
    %v1410 = vmul.f32 %v1394, %v1394
    %v1411 = vmul.f32 %v1395, %v1395
    %v1412 = vadd.f32 %v1396, %v1404
    %v1413 = vadd.f32 %v1397, %v1405
    %v1414 = vadd.f32 %v1398, %v1406
    %v1415 = vadd.f32 %v1399, %v1407
    %v1416 = vadd.f32 %v1400, %v1408
    %v1417 = vadd.f32 %v1401, %v1409
    %v1418 = vadd.f32 %v1402, %v1410
    %v1419 = vadd.f32 %v1403, %v1411
    %v1420 = vadd.f32 %v1412, %v1413
    %v1421 = vadd.f32 %v1420, %v1414
    %v1422 = vadd.f32 %v1421, %v1415
    %v1423 = vadd.f32 %v1422, %v1416
    %v1424 = vadd.f32 %v1423, %v1417
    %v1425 = vadd.f32 %v1424, %v1418
    %v1426 = vadd.f32 %v1425, %v1419
    %v1427 = vrot.slane %v1426, 4
    %v1428 = vadd.f32 %v1426, %v1427
    %v1429 = vrot.slane %v1428, 2
    %v1430 = vadd.f32 %v1428, %v1429
    %v1431 = vrot.slane %v1430, 1
    %v1432 = vadd.f32 %v1430, %v1431
    %v1433 = vmul.f32 %v1432, %v1378
    %v1434 = vld [vmem:[%s2] sm:$0x1]
    %v1435 = vadd.f32 %v1433, 1e-05
    %v1436 = vrsqrt.pop %v1435
    %v1437 = vmul.f32 %v1436, %v1435
    %v1438 = vmul.f32 %v1437, %v1436
    %v1439 = vmul.f32 0.5, %v1438
    %v1440 = vsub.f32 1.5, %v1439
    %v1441 = vmul.f32 %v1436, %v1440
    %vm1442 = vweird.f32 %v1435
    %vm1443 = vweird.f32 %v1436
    %vm1444 = vmor %vm1442, %vm1443
    %v1445 = vsel %vm1444, %v1436, %v1441
    %v1446 = vmul.f32 %v1434, %v1445
    %v1447 = vld [vmem:[%s3] sm:$0x1]
    %v1448 = vmul.f32 %v1379, %v1446
    %v1449 = vsub.f32 %v1447, %v1448
    %v1451 = vperm.slane %v1446, 0
    %v1453 = vmul.f32 %v1335, %v1451
    %v1454 = vmul.f32 %v1336, %v1451
    %v1455 = vmul.f32 %v1337, %v1451
    %v1456 = vmul.f32 %v1338, %v1451
    %v1457 = vmul.f32 %v1339, %v1451
    %v1458 = vmul.f32 %v1340, %v1451
    %v1459 = vmul.f32 %v1341, %v1451
    %v1460 = vmul.f32 %v1342, %v1451
    %v1461 = vmul.f32 %v1343, %v1451
    %v1462 = vmul.f32 %v1344, %v1451
    %v1463 = vmul.f32 %v1345, %v1451
    %v1464 = vmul.f32 %v1346, %v1451
    %v1465 = vmul.f32 %v1347, %v1451
    %v1466 = vmul.f32 %v1348, %v1451
    %v1467 = vmul.f32 %v1349, %v1451
    %v1468 = vmul.f32 %v1350, %v1451
    %v1470 = vperm.slane %v1449, 0
    %v1472 = vadd.f32 %v1453, %v1470
    %v1473 = vadd.f32 %v1454, %v1470
    %v1474 = vadd.f32 %v1455, %v1470
    %v1475 = vadd.f32 %v1456, %v1470
    %v1476 = vadd.f32 %v1457, %v1470
    %v1477 = vadd.f32 %v1458, %v1470
    %v1478 = vadd.f32 %v1459, %v1470
    %v1479 = vadd.f32 %v1460, %v1470
    %v1480 = vadd.f32 %v1461, %v1470
    %v1481 = vadd.f32 %v1462, %v1470
    %v1482 = vadd.f32 %v1463, %v1470
    %v1483 = vadd.f32 %v1464, %v1470
    %v1484 = vadd.f32 %v1465, %v1470
    %v1485 = vadd.f32 %v1466, %v1470
    %v1486 = vadd.f32 %v1467, %v1470
    %v1487 = vadd.f32 %v1468, %v1470
    %v1488 = vmax.f32 %v1472, 0.0
    %v1489 = vmax.f32 %v1473, 0.0
    %v1490 = vmax.f32 %v1474, 0.0
    %v1491 = vmax.f32 %v1475, 0.0
    %v1492 = vmax.f32 %v1476, 0.0
    %v1493 = vmax.f32 %v1477, 0.0
    %v1494 = vmax.f32 %v1478, 0.0
    %v1495 = vmax.f32 %v1479, 0.0
    %v1496 = vmax.f32 %v1480, 0.0
    %v1497 = vmax.f32 %v1481, 0.0
    %v1498 = vmax.f32 %v1482, 0.0
    %v1499 = vmax.f32 %v1483, 0.0
    %v1500 = vmax.f32 %v1484, 0.0
    %v1501 = vmax.f32 %v1485, 0.0
    %v1502 = vmax.f32 %v1486, 0.0
    %v1503 = vmax.f32 %v1487, 0.0
    %1504 = vst [vmem:[%s83 + $0x1] sm:$0xff] %v1488
    %1505 = vst [vmem:[%s83 + $0x11] sm:$0xff] %v1489
    %1506 = vst [vmem:[%s83 + $0x21] sm:$0xff] %v1490
    %1507 = vst [vmem:[%s83 + $0x31] sm:$0xff] %v1491
    %1508 = vst [vmem:[%s83 + $0x41] sm:$0xff] %v1492
    %1509 = vst [vmem:[%s83 + $0x51] sm:$0xff] %v1493
    %1510 = vst [vmem:[%s83 + $0x61] sm:$0xff] %v1494
    %1511 = vst [vmem:[%s83 + $0x71] sm:$0xff] %v1495
    %1512 = vst [vmem:[%s83 + $0xa1] sm:$0xff] %v1496
    %1513 = vst [vmem:[%s83 + $0xb1] sm:$0xff] %v1497
    %1514 = vst [vmem:[%s83 + $0xc1] sm:$0xff] %v1498
    %1515 = vst [vmem:[%s83 + $0xd1] sm:$0xff] %v1499
    %1516 = vst [vmem:[%s83 + $0xe1] sm:$0xff] %v1500
    %1517 = vst [vmem:[%s83 + $0xf1] sm:$0xff] %v1501
    %1518 = vst [vmem:[%s83 + $0x101] sm:$0xff] %v1502
    %1519 = vst [vmem:[%s83 + $0x111] sm:$0xff] %v1503
    %v1520 = vld [vmem:[#allocation2] sm:$0xff]
    %v1521 = vld [vmem:[#allocation2 + $0x10] sm:$0xff]
    %v1522 = vld [vmem:[#allocation2 + $0x20] sm:$0xff]
    %v1523 = vld [vmem:[#allocation2 + $0x30] sm:$0xff]
    %v1524 = vld [vmem:[#allocation2 + $0x40] sm:$0xff]
    %v1525 = vld [vmem:[#allocation2 + $0x50] sm:$0xff]
    %v1526 = vld [vmem:[#allocation2 + $0x60] sm:$0xff]
    %v1527 = vld [vmem:[#allocation2 + $0x70] sm:$0xff]
    %v1528 = vld [vmem:[#allocation2 + $0x80] sm:$0xff]
    %v1529 = vld [vmem:[#allocation2 + $0x90] sm:$0xff]
    %v1530 = vld [vmem:[#allocation2 + $0xa0] sm:$0xff]
    %v1531 = vld [vmem:[#allocation2 + $0xb0] sm:$0xff]
    %v1532 = vld [vmem:[#allocation2 + $0xc0] sm:$0xff]
    %v1533 = vld [vmem:[#allocation2 + $0xd0] sm:$0xff]
    %v1534 = vld [vmem:[#allocation2 + $0xe0] sm:$0xff]
    %v1535 = vld [vmem:[#allocation2 + $0xf0] sm:$0xff]
    %v1536 = vld [vmem:[#allocation2 + $0x100] sm:$0xff]
    %v1537 = vld [vmem:[#allocation2 + $0x110] sm:$0xff]
    %v1538 = vld [vmem:[#allocation2 + $0x120] sm:$0xff]
    %v1539 = vld [vmem:[#allocation2 + $0x130] sm:$0xff]
    %v1540 = vpack.c.bf16 %v1521, %v1520
    %v1541 = vpack.c.bf16 %v1523, %v1522
    %v1542 = vpack.c.bf16 %v1525, %v1524
    %v1543 = vpack.c.bf16 %v1527, %v1526
    %v1544 = vpack.c.bf16 %v1531, %v1530
    %v1545 = vpack.c.bf16 %v1533, %v1532
    %v1546 = vpack.c.bf16 %v1535, %v1534
    %v1547 = vpack.c.bf16 %v1537, %v1536
    %v1548 = vld [vmem:[%s4] sm:$0xf]
    %v1549 = vld [vmem:[%s4 + $0x4] sm:$0xf]
    %v1550 = vld [vmem:[%s4 + $0x8] sm:$0xf]
    %v1551 = vld [vmem:[%s4 + $0xc] sm:$0xf]
    %v1552 = vld [vmem:[%s4 + $0x10] sm:$0xf]
    %v1553 = vld [vmem:[%s4 + $0x14] sm:$0xf]
    %v1554 = vld [vmem:[%s4 + $0x18] sm:$0xf]
    %v1555 = vld [vmem:[%s4 + $0x1c] sm:$0xf]
    %v1556 = vld [vmem:[%s4 + $0x20] sm:$0xf]
    %v1557 = vld [vmem:[%s4 + $0x24] sm:$0xf]
    %v1558 = vld [vmem:[%s4 + $0x28] sm:$0xf]
    %v1559 = vld [vmem:[%s4 + $0x2c] sm:$0xf]
    %v1560 = vld [vmem:[%s4 + $0x30] sm:$0xf]
    %v1561 = vld [vmem:[%s4 + $0x34] sm:$0xf]
    %v1562 = vld [vmem:[%s4 + $0x38] sm:$0xf]
    %v1563 = vld [vmem:[%s4 + $0x3c] sm:$0xf]
    %v1564 = vpack.c.bf16 %v1522, %v1521
    %v1565 = vpack.c.bf16 %v1524, %v1523
    %v1566 = vpack.c.bf16 %v1526, %v1525
    %v1567 = vpack.c.bf16 %v1528, %v1527
    %v1568 = vpack.c.bf16 %v1532, %v1531
    %v1569 = vpack.c.bf16 %v1534, %v1533
    %v1570 = vpack.c.bf16 %v1536, %v1535
    %v1571 = vpack.c.bf16 %v1538, %v1537
    %s1572 = scalar_lea.vmem %s4, 192
    %v1573 = vld [vmem:[%s1572] sm:$0xf]
    %v1574 = vld [vmem:[%s1572 + $0x4] sm:$0xf]
    %v1575 = vld [vmem:[%s1572 + $0x8] sm:$0xf]
    %v1576 = vld [vmem:[%s1572 + $0xc] sm:$0xf]
    %v1577 = vld [vmem:[%s1572 + $0x10] sm:$0xf]
    %v1578 = vld [vmem:[%s1572 + $0x14] sm:$0xf]
    %v1579 = vld [vmem:[%s1572 + $0x18] sm:$0xf]
    %v1580 = vld [vmem:[%s1572 + $0x1c] sm:$0xf]
    %v1581 = vld [vmem:[%s1572 + $0x20] sm:$0xf]
    %v1582 = vld [vmem:[%s1572 + $0x24] sm:$0xf]
    %v1583 = vld [vmem:[%s1572 + $0x28] sm:$0xf]
    %v1584 = vld [vmem:[%s1572 + $0x2c] sm:$0xf]
    %v1585 = vld [vmem:[%s1572 + $0x30] sm:$0xf]
    %v1586 = vld [vmem:[%s1572 + $0x34] sm:$0xf]
    %v1587 = vld [vmem:[%s1572 + $0x38] sm:$0xf]
    %v1588 = vld [vmem:[%s1572 + $0x3c] sm:$0xf]
    %v1605 = vunpack.c.l.b16 %v1573
    %v1606 = vunpack.c.l.b16 %v1574
    %v1607 = vunpack.c.l.b16 %v1575
    %v1608 = vunpack.c.l.b16 %v1576
    %v1609 = vunpack.c.l.b16 %v1577
    %v1610 = vunpack.c.l.b16 %v1578
    %v1611 = vunpack.c.l.b16 %v1579
    %v1612 = vunpack.c.l.b16 %v1580
    %v1613 = vunpack.c.l.b16 %v1581
    %v1614 = vunpack.c.l.b16 %v1582
    %v1615 = vunpack.c.l.b16 %v1583
    %v1616 = vunpack.c.l.b16 %v1584
    %v1617 = vunpack.c.l.b16 %v1585
    %v1618 = vunpack.c.l.b16 %v1586
    %v1619 = vunpack.c.l.b16 %v1587
    %v1620 = vunpack.c.l.b16 %v1588
    %v1621 = vpack.c.b16 %v1606, %v1605
    %v1622 = vpack.c.b16 %v1608, %v1607
    %v1623 = vpack.c.b16 %v1610, %v1609
    %v1624 = vpack.c.b16 %v1612, %v1611
    %v1625 = vpack.c.b16 %v1614, %v1613
    %v1626 = vpack.c.b16 %v1616, %v1615
    %v1627 = vpack.c.b16 %v1618, %v1617
    %v1628 = vpack.c.b16 %v1620, %v1619
    %1637 = vmatpush.bf16.msra.mxu0 %v1628
    %1638 = vmatpush.bf16.msra.mxu0 %v1627
    %1639 = vmatpush.bf16.msra.mxu0 %v1626
    %1640 = vmatpush.bf16.msra.mxu0 %v1625
    %1641 = vmatpush.bf16.msra.mxu0 %v1624
    %1642 = vmatpush.bf16.msra.mxu0 %v1623
    %1643 = vmatpush.bf16.msra.mxu0 %v1622
    %1644 = vmatpush.bf16.msra.mxu0 %v1621
    %1645 = vmatmul.bf16.gmra.mxu0 %v1564
    %v1646 = vpop.f32.mrf.mxu0
    %v1647 = vadd.f32 0.0, %v1646
    %v1648 = vpop.f32.mrf.mxu0
    %v1649 = vadd.f32 0.0, %v1648
    %1650 = vmatmul.bf16.gmra.mxu0 %v1565
    %v1651 = vpop.f32.mrf.mxu0
    %v1652 = vadd.f32 0.0, %v1651
    %v1653 = vpop.f32.mrf.mxu0
    %v1654 = vadd.f32 0.0, %v1653
    %1655 = vmatmul.bf16.gmra.mxu0 %v1566
    %v1656 = vpop.f32.mrf.mxu0
    %v1657 = vadd.f32 0.0, %v1656
    %v1658 = vpop.f32.mrf.mxu0
    %v1659 = vadd.f32 0.0, %v1658
    %1660 = vmatmul.bf16.gmra.mxu0 %v1567
    %v1661 = vpop.f32.mrf.mxu0
    %v1662 = vadd.f32 0.0, %v1661
    %v1663 = vpop.f32.mrf.mxu0
    %v1664 = vadd.f32 0.0, %v1663
    %1665 = vmatmul.bf16.gmra.mxu0 %v1568
    %v1666 = vpop.f32.mrf.mxu0
    %v1667 = vadd.f32 0.0, %v1666
    %v1668 = vpop.f32.mrf.mxu0
    %v1669 = vadd.f32 0.0, %v1668
    %1670 = vmatmul.bf16.gmra.mxu0 %v1569
    %v1671 = vpop.f32.mrf.mxu0
    %v1672 = vadd.f32 0.0, %v1671
    %v1673 = vpop.f32.mrf.mxu0
    %v1674 = vadd.f32 0.0, %v1673
    %1675 = vmatmul.bf16.gmra.mxu0 %v1570
    %v1676 = vpop.f32.mrf.mxu0
    %v1677 = vadd.f32 0.0, %v1676
    %v1678 = vpop.f32.mrf.mxu0
    %v1679 = vadd.f32 0.0, %v1678
    %1680 = vmatmul.bf16.gmra.mxu0 %v1571
    %v1681 = vpop.f32.mrf.mxu0
    %v1682 = vadd.f32 0.0, %v1681
    %v1683 = vpop.f32.mrf.mxu0
    %v1684 = vadd.f32 0.0, %v1683
    %1685 = vdwg.mxu0
    %v1702 = vunpack.c.l.b16 %v1548
    %v1703 = vunpack.c.l.b16 %v1549
    %v1704 = vunpack.c.l.b16 %v1550
    %v1705 = vunpack.c.l.b16 %v1551
    %v1706 = vunpack.c.l.b16 %v1552
    %v1707 = vunpack.c.l.b16 %v1553
    %v1708 = vunpack.c.l.b16 %v1554
    %v1709 = vunpack.c.l.b16 %v1555
    %v1710 = vunpack.c.l.b16 %v1556
    %v1711 = vunpack.c.l.b16 %v1557
    %v1712 = vunpack.c.l.b16 %v1558
    %v1713 = vunpack.c.l.b16 %v1559
    %v1714 = vunpack.c.l.b16 %v1560
    %v1715 = vunpack.c.l.b16 %v1561
    %v1716 = vunpack.c.l.b16 %v1562
    %v1717 = vunpack.c.l.b16 %v1563
    %v1718 = vpack.c.b16 %v1703, %v1702
    %v1719 = vpack.c.b16 %v1705, %v1704
    %v1720 = vpack.c.b16 %v1707, %v1706
    %v1721 = vpack.c.b16 %v1709, %v1708
    %v1722 = vpack.c.b16 %v1711, %v1710
    %v1723 = vpack.c.b16 %v1713, %v1712
    %v1724 = vpack.c.b16 %v1715, %v1714
    %v1725 = vpack.c.b16 %v1717, %v1716
    %1734 = vmatpush.bf16.msra.mxu0 %v1725
    %1735 = vmatpush.bf16.msra.mxu0 %v1724
    %1736 = vmatpush.bf16.msra.mxu0 %v1723
    %1737 = vmatpush.bf16.msra.mxu0 %v1722
    %1738 = vmatpush.bf16.msra.mxu0 %v1721
    %1739 = vmatpush.bf16.msra.mxu0 %v1720
    %1740 = vmatpush.bf16.msra.mxu0 %v1719
    %1741 = vmatpush.bf16.msra.mxu0 %v1718
    %1742 = vmatmul.bf16.gmra.mxu0 %v1540
    %v1743 = vpop.f32.mrf.mxu0
    %v1744 = vadd.f32 %v1647, %v1743
    %v1745 = vpop.f32.mrf.mxu0
    %v1746 = vadd.f32 %v1649, %v1745
    %1747 = vmatmul.bf16.gmra.mxu0 %v1541
    %v1748 = vpop.f32.mrf.mxu0
    %v1749 = vadd.f32 %v1652, %v1748
    %v1750 = vpop.f32.mrf.mxu0
    %v1751 = vadd.f32 %v1654, %v1750
    %1752 = vmatmul.bf16.gmra.mxu0 %v1542
    %v1753 = vpop.f32.mrf.mxu0
    %v1754 = vadd.f32 %v1657, %v1753
    %v1755 = vpop.f32.mrf.mxu0
    %v1756 = vadd.f32 %v1659, %v1755
    %1757 = vmatmul.bf16.gmra.mxu0 %v1543
    %v1758 = vpop.f32.mrf.mxu0
    %v1759 = vadd.f32 %v1662, %v1758
    %v1760 = vpop.f32.mrf.mxu0
    %v1761 = vadd.f32 %v1664, %v1760
    %1762 = vmatmul.bf16.gmra.mxu0 %v1544
    %v1763 = vpop.f32.mrf.mxu0
    %v1764 = vadd.f32 %v1667, %v1763
    %v1765 = vpop.f32.mrf.mxu0
    %v1766 = vadd.f32 %v1669, %v1765
    %1767 = vmatmul.bf16.gmra.mxu0 %v1545
    %v1768 = vpop.f32.mrf.mxu0
    %v1769 = vadd.f32 %v1672, %v1768
    %v1770 = vpop.f32.mrf.mxu0
    %v1771 = vadd.f32 %v1674, %v1770
    %1772 = vmatmul.bf16.gmra.mxu0 %v1546
    %v1773 = vpop.f32.mrf.mxu0
    %v1774 = vadd.f32 %v1677, %v1773
    %v1775 = vpop.f32.mrf.mxu0
    %v1776 = vadd.f32 %v1679, %v1775
    %1777 = vmatmul.bf16.gmra.mxu0 %v1547
    %v1778 = vpop.f32.mrf.mxu0
    %v1779 = vadd.f32 %v1682, %v1778
    %v1780 = vpop.f32.mrf.mxu0
    %v1781 = vadd.f32 %v1684, %v1780
    %1782 = vdwg.mxu0
    %v1783 = vpack.c.bf16 %v1529, %v1528
    %v1784 = vpack.c.bf16 %v1539, %v1538
    %s1785 = scalar_lea.vmem %s4, 384
    %v1786 = vld [vmem:[%s1785] sm:$0xf]
    %v1787 = vld [vmem:[%s1785 + $0x4] sm:$0xf]
    %v1788 = vld [vmem:[%s1785 + $0x8] sm:$0xf]
    %v1789 = vld [vmem:[%s1785 + $0xc] sm:$0xf]
    %v1790 = vld [vmem:[%s1785 + $0x10] sm:$0xf]
    %v1791 = vld [vmem:[%s1785 + $0x14] sm:$0xf]
    %v1792 = vld [vmem:[%s1785 + $0x18] sm:$0xf]
    %v1793 = vld [vmem:[%s1785 + $0x1c] sm:$0xf]
    %v1794 = vld [vmem:[%s1785 + $0x20] sm:$0xf]
    %v1795 = vld [vmem:[%s1785 + $0x24] sm:$0xf]
    %v1796 = vld [vmem:[%s1785 + $0x28] sm:$0xf]
    %v1797 = vld [vmem:[%s1785 + $0x2c] sm:$0xf]
    %v1798 = vld [vmem:[%s1785 + $0x30] sm:$0xf]
    %v1799 = vld [vmem:[%s1785 + $0x34] sm:$0xf]
    %v1800 = vld [vmem:[%s1785 + $0x38] sm:$0xf]
    %v1801 = vld [vmem:[%s1785 + $0x3c] sm:$0xf]
    %v1818 = vunpack.c.l.b16 %v1786
    %v1819 = vunpack.c.l.b16 %v1787
    %v1820 = vunpack.c.l.b16 %v1788
    %v1821 = vunpack.c.l.b16 %v1789
    %v1822 = vunpack.c.l.b16 %v1790
    %v1823 = vunpack.c.l.b16 %v1791
    %v1824 = vunpack.c.l.b16 %v1792
    %v1825 = vunpack.c.l.b16 %v1793
    %v1826 = vunpack.c.l.b16 %v1794
    %v1827 = vunpack.c.l.b16 %v1795
    %v1828 = vunpack.c.l.b16 %v1796
    %v1829 = vunpack.c.l.b16 %v1797
    %v1830 = vunpack.c.l.b16 %v1798
    %v1831 = vunpack.c.l.b16 %v1799
    %v1832 = vunpack.c.l.b16 %v1800
    %v1833 = vunpack.c.l.b16 %v1801
    %v1834 = vpack.c.b16 %v1819, %v1818
    %v1835 = vpack.c.b16 %v1821, %v1820
    %v1836 = vpack.c.b16 %v1823, %v1822
    %v1837 = vpack.c.b16 %v1825, %v1824
    %v1838 = vpack.c.b16 %v1827, %v1826
    %v1839 = vpack.c.b16 %v1829, %v1828
    %v1840 = vpack.c.b16 %v1831, %v1830
    %v1841 = vpack.c.b16 %v1833, %v1832
    %1850 = vmatpush.bf16.msra.mxu0 %v1841
    %1851 = vmatpush.bf16.msra.mxu0 %v1840
    %1852 = vmatpush.bf16.msra.mxu0 %v1839
    %1853 = vmatpush.bf16.msra.mxu0 %v1838
    %1854 = vmatpush.bf16.msra.mxu0 %v1837
    %1855 = vmatpush.bf16.msra.mxu0 %v1836
    %1856 = vmatpush.bf16.msra.mxu0 %v1835
    %1857 = vmatpush.bf16.msra.mxu0 %v1834
    %1858 = vmatmul.bf16.gmra.mxu0 %v1541
    %v1859 = vpop.f32.mrf.mxu0
    %v1860 = vadd.f32 0.0, %v1859
    %v1861 = vpop.f32.mrf.mxu0
    %v1862 = vadd.f32 0.0, %v1861
    %1863 = vmatmul.bf16.gmra.mxu0 %v1542
    %v1864 = vpop.f32.mrf.mxu0
    %v1865 = vadd.f32 0.0, %v1864
    %v1866 = vpop.f32.mrf.mxu0
    %v1867 = vadd.f32 0.0, %v1866
    %1868 = vmatmul.bf16.gmra.mxu0 %v1543
    %v1869 = vpop.f32.mrf.mxu0
    %v1870 = vadd.f32 0.0, %v1869
    %v1871 = vpop.f32.mrf.mxu0
    %v1872 = vadd.f32 0.0, %v1871
    %1873 = vmatmul.bf16.gmra.mxu0 %v1783
    %v1874 = vpop.f32.mrf.mxu0
    %v1875 = vadd.f32 0.0, %v1874
    %v1876 = vpop.f32.mrf.mxu0
    %v1877 = vadd.f32 0.0, %v1876
    %1878 = vmatmul.bf16.gmra.mxu0 %v1545
    %v1879 = vpop.f32.mrf.mxu0
    %v1880 = vadd.f32 0.0, %v1879
    %v1881 = vpop.f32.mrf.mxu0
    %v1882 = vadd.f32 0.0, %v1881
    %1883 = vmatmul.bf16.gmra.mxu0 %v1546
    %v1884 = vpop.f32.mrf.mxu0
    %v1885 = vadd.f32 0.0, %v1884
    %v1886 = vpop.f32.mrf.mxu0
    %v1887 = vadd.f32 0.0, %v1886
    %1888 = vmatmul.bf16.gmra.mxu0 %v1547
    %v1889 = vpop.f32.mrf.mxu0
    %v1890 = vadd.f32 0.0, %v1889
    %v1891 = vpop.f32.mrf.mxu0
    %v1892 = vadd.f32 0.0, %v1891
    %1893 = vmatmul.bf16.gmra.mxu0 %v1784
    %v1894 = vpop.f32.mrf.mxu0
    %v1895 = vadd.f32 0.0, %v1894
    %v1896 = vpop.f32.mrf.mxu0
    %v1897 = vadd.f32 0.0, %v1896
    %1898 = vdwg.mxu0
    %v1899 = vadd.f32 %v1744, %v1860
    %v1900 = vadd.f32 %v1746, %v1862
    %v1901 = vadd.f32 %v1749, %v1865
    %v1902 = vadd.f32 %v1751, %v1867
    %v1903 = vadd.f32 %v1754, %v1870
    %v1904 = vadd.f32 %v1756, %v1872
    %v1905 = vadd.f32 %v1759, %v1875
    %v1906 = vadd.f32 %v1761, %v1877
    %v1907 = vadd.f32 %v1764, %v1880
    %v1908 = vadd.f32 %v1766, %v1882
    %v1909 = vadd.f32 %v1769, %v1885
    %v1910 = vadd.f32 %v1771, %v1887
    %v1911 = vadd.f32 %v1774, %v1890
    %v1912 = vadd.f32 %v1776, %v1892
    %v1913 = vadd.f32 %v1779, %v1895
    %v1914 = vadd.f32 %v1781, %v1897
    %v1915 = vld [vmem:[#allocation2 + $0x1] sm:$0xff]
    %v1916 = vld [vmem:[#allocation2 + $0x11] sm:$0xff]
    %v1917 = vld [vmem:[#allocation2 + $0x21] sm:$0xff]
    %v1918 = vld [vmem:[#allocation2 + $0x31] sm:$0xff]
    %v1919 = vld [vmem:[#allocation2 + $0x41] sm:$0xff]
    %v1920 = vld [vmem:[#allocation2 + $0x51] sm:$0xff]
    %v1921 = vld [vmem:[#allocation2 + $0x61] sm:$0xff]
    %v1922 = vld [vmem:[#allocation2 + $0x71] sm:$0xff]
    %v1923 = vld [vmem:[#allocation2 + $0x81] sm:$0xff]
    %v1924 = vld [vmem:[#allocation2 + $0x91] sm:$0xff]
    %v1925 = vld [vmem:[#allocation2 + $0xa1] sm:$0xff]
    %v1926 = vld [vmem:[#allocation2 + $0xb1] sm:$0xff]
    %v1927 = vld [vmem:[#allocation2 + $0xc1] sm:$0xff]
    %v1928 = vld [vmem:[#allocation2 + $0xd1] sm:$0xff]
    %v1929 = vld [vmem:[#allocation2 + $0xe1] sm:$0xff]
    %v1930 = vld [vmem:[#allocation2 + $0xf1] sm:$0xff]
    %v1931 = vld [vmem:[#allocation2 + $0x101] sm:$0xff]
    %v1932 = vld [vmem:[#allocation2 + $0x111] sm:$0xff]
    %v1933 = vld [vmem:[#allocation2 + $0x121] sm:$0xff]
    %v1934 = vld [vmem:[#allocation2 + $0x131] sm:$0xff]
    %v1935 = vpack.c.bf16 %v1916, %v1915
    %v1936 = vpack.c.bf16 %v1918, %v1917
    %v1937 = vpack.c.bf16 %v1920, %v1919
    %v1938 = vpack.c.bf16 %v1922, %v1921
    %v1939 = vpack.c.bf16 %v1926, %v1925
    %v1940 = vpack.c.bf16 %v1928, %v1927
    %v1941 = vpack.c.bf16 %v1930, %v1929
    %v1942 = vpack.c.bf16 %v1932, %v1931
    %s1943 = scalar_lea.vmem %s4, 64
    %v1944 = vld [vmem:[%s1943] sm:$0xf]
    %v1945 = vld [vmem:[%s1943 + $0x4] sm:$0xf]
    %v1946 = vld [vmem:[%s1943 + $0x8] sm:$0xf]
    %v1947 = vld [vmem:[%s1943 + $0xc] sm:$0xf]
    %v1948 = vld [vmem:[%s1943 + $0x10] sm:$0xf]
    %v1949 = vld [vmem:[%s1943 + $0x14] sm:$0xf]
    %v1950 = vld [vmem:[%s1943 + $0x18] sm:$0xf]
    %v1951 = vld [vmem:[%s1943 + $0x1c] sm:$0xf]
    %v1952 = vld [vmem:[%s1943 + $0x20] sm:$0xf]
    %v1953 = vld [vmem:[%s1943 + $0x24] sm:$0xf]
    %v1954 = vld [vmem:[%s1943 + $0x28] sm:$0xf]
    %v1955 = vld [vmem:[%s1943 + $0x2c] sm:$0xf]
    %v1956 = vld [vmem:[%s1943 + $0x30] sm:$0xf]
    %v1957 = vld [vmem:[%s1943 + $0x34] sm:$0xf]
    %v1958 = vld [vmem:[%s1943 + $0x38] sm:$0xf]
    %v1959 = vld [vmem:[%s1943 + $0x3c] sm:$0xf]
    %v1976 = vunpack.c.l.b16 %v1944
    %v1977 = vunpack.c.l.b16 %v1945
    %v1978 = vunpack.c.l.b16 %v1946
    %v1979 = vunpack.c.l.b16 %v1947
    %v1980 = vunpack.c.l.b16 %v1948
    %v1981 = vunpack.c.l.b16 %v1949
    %v1982 = vunpack.c.l.b16 %v1950
    %v1983 = vunpack.c.l.b16 %v1951
    %v1984 = vunpack.c.l.b16 %v1952
    %v1985 = vunpack.c.l.b16 %v1953
    %v1986 = vunpack.c.l.b16 %v1954
    %v1987 = vunpack.c.l.b16 %v1955
    %v1988 = vunpack.c.l.b16 %v1956
    %v1989 = vunpack.c.l.b16 %v1957
    %v1990 = vunpack.c.l.b16 %v1958
    %v1991 = vunpack.c.l.b16 %v1959
    %v1992 = vpack.c.b16 %v1977, %v1976
    %v1993 = vpack.c.b16 %v1979, %v1978
    %v1994 = vpack.c.b16 %v1981, %v1980
    %v1995 = vpack.c.b16 %v1983, %v1982
    %v1996 = vpack.c.b16 %v1985, %v1984
    %v1997 = vpack.c.b16 %v1987, %v1986
    %v1998 = vpack.c.b16 %v1989, %v1988
    %v1999 = vpack.c.b16 %v1991, %v1990
    %2008 = vmatpush.bf16.msra.mxu0 %v1999
    %2009 = vmatpush.bf16.msra.mxu0 %v1998
    %2010 = vmatpush.bf16.msra.mxu0 %v1997
    %2011 = vmatpush.bf16.msra.mxu0 %v1996
    %2012 = vmatpush.bf16.msra.mxu0 %v1995
    %2013 = vmatpush.bf16.msra.mxu0 %v1994
    %2014 = vmatpush.bf16.msra.mxu0 %v1993
    %2015 = vmatpush.bf16.msra.mxu0 %v1992
    %2016 = vmatmul.bf16.gmra.mxu0 %v1935
    %v2017 = vpop.f32.mrf.mxu0
    %v2018 = vadd.f32 0.0, %v2017
    %v2019 = vpop.f32.mrf.mxu0
    %v2020 = vadd.f32 0.0, %v2019
    %2021 = vmatmul.bf16.gmra.mxu0 %v1936
    %v2022 = vpop.f32.mrf.mxu0
    %v2023 = vadd.f32 0.0, %v2022
    %v2024 = vpop.f32.mrf.mxu0
    %v2025 = vadd.f32 0.0, %v2024
    %2026 = vmatmul.bf16.gmra.mxu0 %v1937
    %v2027 = vpop.f32.mrf.mxu0
    %v2028 = vadd.f32 0.0, %v2027
    %v2029 = vpop.f32.mrf.mxu0
    %v2030 = vadd.f32 0.0, %v2029
    %2031 = vmatmul.bf16.gmra.mxu0 %v1938
    %v2032 = vpop.f32.mrf.mxu0
    %v2033 = vadd.f32 0.0, %v2032
    %v2034 = vpop.f32.mrf.mxu0
    %v2035 = vadd.f32 0.0, %v2034
    %2036 = vmatmul.bf16.gmra.mxu0 %v1939
    %v2037 = vpop.f32.mrf.mxu0
    %v2038 = vadd.f32 0.0, %v2037
    %v2039 = vpop.f32.mrf.mxu0
    %v2040 = vadd.f32 0.0, %v2039
    %2041 = vmatmul.bf16.gmra.mxu0 %v1940
    %v2042 = vpop.f32.mrf.mxu0
    %v2043 = vadd.f32 0.0, %v2042
    %v2044 = vpop.f32.mrf.mxu0
    %v2045 = vadd.f32 0.0, %v2044
    %2046 = vmatmul.bf16.gmra.mxu0 %v1941
    %v2047 = vpop.f32.mrf.mxu0
    %v2048 = vadd.f32 0.0, %v2047
    %v2049 = vpop.f32.mrf.mxu0
    %v2050 = vadd.f32 0.0, %v2049
    %2051 = vmatmul.bf16.gmra.mxu0 %v1942
    %v2052 = vpop.f32.mrf.mxu0
    %v2053 = vadd.f32 0.0, %v2052
    %v2054 = vpop.f32.mrf.mxu0
    %v2055 = vadd.f32 0.0, %v2054
    %2056 = vdwg.mxu0
    %v2057 = vadd.f32 %v1899, %v2018
    %v2058 = vadd.f32 %v1900, %v2020
    %v2059 = vadd.f32 %v1901, %v2023
    %v2060 = vadd.f32 %v1902, %v2025
    %v2061 = vadd.f32 %v1903, %v2028
    %v2062 = vadd.f32 %v1904, %v2030
    %v2063 = vadd.f32 %v1905, %v2033
    %v2064 = vadd.f32 %v1906, %v2035
    %v2065 = vadd.f32 %v1907, %v2038
    %v2066 = vadd.f32 %v1908, %v2040
    %v2067 = vadd.f32 %v1909, %v2043
    %v2068 = vadd.f32 %v1910, %v2045
    %v2069 = vadd.f32 %v1911, %v2048
    %v2070 = vadd.f32 %v1912, %v2050
    %v2071 = vadd.f32 %v1913, %v2053
    %v2072 = vadd.f32 %v1914, %v2055
    %v2073 = vpack.c.bf16 %v1917, %v1916
    %v2074 = vpack.c.bf16 %v1919, %v1918
    %v2075 = vpack.c.bf16 %v1921, %v1920
    %v2076 = vpack.c.bf16 %v1923, %v1922
    %v2077 = vpack.c.bf16 %v1927, %v1926
    %v2078 = vpack.c.bf16 %v1929, %v1928
    %v2079 = vpack.c.bf16 %v1931, %v1930
    %v2080 = vpack.c.bf16 %v1933, %v1932
    %s2081 = scalar_lea.vmem %s4, 256
    %v2082 = vld [vmem:[%s2081] sm:$0xf]
    %v2083 = vld [vmem:[%s2081 + $0x4] sm:$0xf]
    %v2084 = vld [vmem:[%s2081 + $0x8] sm:$0xf]
    %v2085 = vld [vmem:[%s2081 + $0xc] sm:$0xf]
    %v2086 = vld [vmem:[%s2081 + $0x10] sm:$0xf]
    %v2087 = vld [vmem:[%s2081 + $0x14] sm:$0xf]
    %v2088 = vld [vmem:[%s2081 + $0x18] sm:$0xf]
    %v2089 = vld [vmem:[%s2081 + $0x1c] sm:$0xf]
    %v2090 = vld [vmem:[%s2081 + $0x20] sm:$0xf]
    %v2091 = vld [vmem:[%s2081 + $0x24] sm:$0xf]
    %v2092 = vld [vmem:[%s2081 + $0x28] sm:$0xf]
    %v2093 = vld [vmem:[%s2081 + $0x2c] sm:$0xf]
    %v2094 = vld [vmem:[%s2081 + $0x30] sm:$0xf]
    %v2095 = vld [vmem:[%s2081 + $0x34] sm:$0xf]
    %v2096 = vld [vmem:[%s2081 + $0x38] sm:$0xf]
    %v2097 = vld [vmem:[%s2081 + $0x3c] sm:$0xf]
    %v2114 = vunpack.c.l.b16 %v2082
    %v2115 = vunpack.c.l.b16 %v2083
    %v2116 = vunpack.c.l.b16 %v2084
    %v2117 = vunpack.c.l.b16 %v2085
    %v2118 = vunpack.c.l.b16 %v2086
    %v2119 = vunpack.c.l.b16 %v2087
    %v2120 = vunpack.c.l.b16 %v2088
    %v2121 = vunpack.c.l.b16 %v2089
    %v2122 = vunpack.c.l.b16 %v2090
    %v2123 = vunpack.c.l.b16 %v2091
    %v2124 = vunpack.c.l.b16 %v2092
    %v2125 = vunpack.c.l.b16 %v2093
    %v2126 = vunpack.c.l.b16 %v2094
    %v2127 = vunpack.c.l.b16 %v2095
    %v2128 = vunpack.c.l.b16 %v2096
    %v2129 = vunpack.c.l.b16 %v2097
    %v2130 = vpack.c.b16 %v2115, %v2114
    %v2131 = vpack.c.b16 %v2117, %v2116
    %v2132 = vpack.c.b16 %v2119, %v2118
    %v2133 = vpack.c.b16 %v2121, %v2120
    %v2134 = vpack.c.b16 %v2123, %v2122
    %v2135 = vpack.c.b16 %v2125, %v2124
    %v2136 = vpack.c.b16 %v2127, %v2126
    %v2137 = vpack.c.b16 %v2129, %v2128
    %2146 = vmatpush.bf16.msra.mxu0 %v2137
    %2147 = vmatpush.bf16.msra.mxu0 %v2136
    %2148 = vmatpush.bf16.msra.mxu0 %v2135
    %2149 = vmatpush.bf16.msra.mxu0 %v2134
    %2150 = vmatpush.bf16.msra.mxu0 %v2133
    %2151 = vmatpush.bf16.msra.mxu0 %v2132
    %2152 = vmatpush.bf16.msra.mxu0 %v2131
    %2153 = vmatpush.bf16.msra.mxu0 %v2130
    %2154 = vmatmul.bf16.gmra.mxu0 %v2073
    %v2155 = vpop.f32.mrf.mxu0
    %v2156 = vadd.f32 0.0, %v2155
    %v2157 = vpop.f32.mrf.mxu0
    %v2158 = vadd.f32 0.0, %v2157
    %2159 = vmatmul.bf16.gmra.mxu0 %v2074
    %v2160 = vpop.f32.mrf.mxu0
    %v2161 = vadd.f32 0.0, %v2160
    %v2162 = vpop.f32.mrf.mxu0
    %v2163 = vadd.f32 0.0, %v2162
    %2164 = vmatmul.bf16.gmra.mxu0 %v2075
    %v2165 = vpop.f32.mrf.mxu0
    %v2166 = vadd.f32 0.0, %v2165
    %v2167 = vpop.f32.mrf.mxu0
    %v2168 = vadd.f32 0.0, %v2167
    %2169 = vmatmul.bf16.gmra.mxu0 %v2076
    %v2170 = vpop.f32.mrf.mxu0
    %v2171 = vadd.f32 0.0, %v2170
    %v2172 = vpop.f32.mrf.mxu0
    %v2173 = vadd.f32 0.0, %v2172
    %2174 = vmatmul.bf16.gmra.mxu0 %v2077
    %v2175 = vpop.f32.mrf.mxu0
    %v2176 = vadd.f32 0.0, %v2175
    %v2177 = vpop.f32.mrf.mxu0
    %v2178 = vadd.f32 0.0, %v2177
    %2179 = vmatmul.bf16.gmra.mxu0 %v2078
    %v2180 = vpop.f32.mrf.mxu0
    %v2181 = vadd.f32 0.0, %v2180
    %v2182 = vpop.f32.mrf.mxu0
    %v2183 = vadd.f32 0.0, %v2182
    %2184 = vmatmul.bf16.gmra.mxu0 %v2079
    %v2185 = vpop.f32.mrf.mxu0
    %v2186 = vadd.f32 0.0, %v2185
    %v2187 = vpop.f32.mrf.mxu0
    %v2188 = vadd.f32 0.0, %v2187
    %2189 = vmatmul.bf16.gmra.mxu0 %v2080
    %v2190 = vpop.f32.mrf.mxu0
    %v2191 = vadd.f32 0.0, %v2190
    %v2192 = vpop.f32.mrf.mxu0
    %v2193 = vadd.f32 0.0, %v2192
    %2194 = vdwg.mxu0
    %v2195 = vadd.f32 %v2057, %v2156
    %v2196 = vadd.f32 %v2058, %v2158
    %v2197 = vadd.f32 %v2059, %v2161
    %v2198 = vadd.f32 %v2060, %v2163
    %v2199 = vadd.f32 %v2061, %v2166
    %v2200 = vadd.f32 %v2062, %v2168
    %v2201 = vadd.f32 %v2063, %v2171
    %v2202 = vadd.f32 %v2064, %v2173
    %v2203 = vadd.f32 %v2065, %v2176
    %v2204 = vadd.f32 %v2066, %v2178
    %v2205 = vadd.f32 %v2067, %v2181
    %v2206 = vadd.f32 %v2068, %v2183
    %v2207 = vadd.f32 %v2069, %v2186
    %v2208 = vadd.f32 %v2070, %v2188
    %v2209 = vadd.f32 %v2071, %v2191
    %v2210 = vadd.f32 %v2072, %v2193
    %v2211 = vpack.c.bf16 %v1924, %v1923
    %v2212 = vpack.c.bf16 %v1934, %v1933
    %s2213 = scalar_lea.vmem %s4, 448
    %v2214 = vld [vmem:[%s2213] sm:$0xf]
    %v2215 = vld [vmem:[%s2213 + $0x4] sm:$0xf]
    %v2216 = vld [vmem:[%s2213 + $0x8] sm:$0xf]
    %v2217 = vld [vmem:[%s2213 + $0xc] sm:$0xf]
    %v2218 = vld [vmem:[%s2213 + $0x10] sm:$0xf]
    %v2219 = vld [vmem:[%s2213 + $0x14] sm:$0xf]
    %v2220 = vld [vmem:[%s2213 + $0x18] sm:$0xf]
    %v2221 = vld [vmem:[%s2213 + $0x1c] sm:$0xf]
    %v2222 = vld [vmem:[%s2213 + $0x20] sm:$0xf]
    %v2223 = vld [vmem:[%s2213 + $0x24] sm:$0xf]
    %v2224 = vld [vmem:[%s2213 + $0x28] sm:$0xf]
    %v2225 = vld [vmem:[%s2213 + $0x2c] sm:$0xf]
    %v2226 = vld [vmem:[%s2213 + $0x30] sm:$0xf]
    %v2227 = vld [vmem:[%s2213 + $0x34] sm:$0xf]
    %v2228 = vld [vmem:[%s2213 + $0x38] sm:$0xf]
    %v2229 = vld [vmem:[%s2213 + $0x3c] sm:$0xf]
    %v2246 = vunpack.c.l.b16 %v2214
    %v2247 = vunpack.c.l.b16 %v2215
    %v2248 = vunpack.c.l.b16 %v2216
    %v2249 = vunpack.c.l.b16 %v2217
    %v2250 = vunpack.c.l.b16 %v2218
    %v2251 = vunpack.c.l.b16 %v2219
    %v2252 = vunpack.c.l.b16 %v2220
    %v2253 = vunpack.c.l.b16 %v2221
    %v2254 = vunpack.c.l.b16 %v2222
    %v2255 = vunpack.c.l.b16 %v2223
    %v2256 = vunpack.c.l.b16 %v2224
    %v2257 = vunpack.c.l.b16 %v2225
    %v2258 = vunpack.c.l.b16 %v2226
    %v2259 = vunpack.c.l.b16 %v2227
    %v2260 = vunpack.c.l.b16 %v2228
    %v2261 = vunpack.c.l.b16 %v2229
    %v2262 = vpack.c.b16 %v2247, %v2246
    %v2263 = vpack.c.b16 %v2249, %v2248
    %v2264 = vpack.c.b16 %v2251, %v2250
    %v2265 = vpack.c.b16 %v2253, %v2252
    %v2266 = vpack.c.b16 %v2255, %v2254
    %v2267 = vpack.c.b16 %v2257, %v2256
    %v2268 = vpack.c.b16 %v2259, %v2258
    %v2269 = vpack.c.b16 %v2261, %v2260
    %2278 = vmatpush.bf16.msra.mxu0 %v2269
    %2279 = vmatpush.bf16.msra.mxu0 %v2268
    %2280 = vmatpush.bf16.msra.mxu0 %v2267
    %2281 = vmatpush.bf16.msra.mxu0 %v2266
    %2282 = vmatpush.bf16.msra.mxu0 %v2265
    %2283 = vmatpush.bf16.msra.mxu0 %v2264
    %2284 = vmatpush.bf16.msra.mxu0 %v2263
    %2285 = vmatpush.bf16.msra.mxu0 %v2262
    %2286 = vmatmul.bf16.gmra.mxu0 %v1936
    %v2287 = vpop.f32.mrf.mxu0
    %v2288 = vadd.f32 0.0, %v2287
    %v2289 = vpop.f32.mrf.mxu0
    %v2290 = vadd.f32 0.0, %v2289
    %2291 = vmatmul.bf16.gmra.mxu0 %v1937
    %v2292 = vpop.f32.mrf.mxu0
    %v2293 = vadd.f32 0.0, %v2292
    %v2294 = vpop.f32.mrf.mxu0
    %v2295 = vadd.f32 0.0, %v2294
    %2296 = vmatmul.bf16.gmra.mxu0 %v1938
    %v2297 = vpop.f32.mrf.mxu0
    %v2298 = vadd.f32 0.0, %v2297
    %v2299 = vpop.f32.mrf.mxu0
    %v2300 = vadd.f32 0.0, %v2299
    %2301 = vmatmul.bf16.gmra.mxu0 %v2211
    %v2302 = vpop.f32.mrf.mxu0
    %v2303 = vadd.f32 0.0, %v2302
    %v2304 = vpop.f32.mrf.mxu0
    %v2305 = vadd.f32 0.0, %v2304
    %2306 = vmatmul.bf16.gmra.mxu0 %v1940
    %v2307 = vpop.f32.mrf.mxu0
    %v2308 = vadd.f32 0.0, %v2307
    %v2309 = vpop.f32.mrf.mxu0
    %v2310 = vadd.f32 0.0, %v2309
    %2311 = vmatmul.bf16.gmra.mxu0 %v1941
    %v2312 = vpop.f32.mrf.mxu0
    %v2313 = vadd.f32 0.0, %v2312
    %v2314 = vpop.f32.mrf.mxu0
    %v2315 = vadd.f32 0.0, %v2314
    %2316 = vmatmul.bf16.gmra.mxu0 %v1942
    %v2317 = vpop.f32.mrf.mxu0
    %v2318 = vadd.f32 0.0, %v2317
    %v2319 = vpop.f32.mrf.mxu0
    %v2320 = vadd.f32 0.0, %v2319
    %2321 = vmatmul.bf16.gmra.mxu0 %v2212
    %v2322 = vpop.f32.mrf.mxu0
    %v2323 = vadd.f32 0.0, %v2322
    %v2324 = vpop.f32.mrf.mxu0
    %v2325 = vadd.f32 0.0, %v2324
    %2326 = vdwg.mxu0
    %v2327 = vadd.f32 %v2195, %v2288
    %v2328 = vadd.f32 %v2196, %v2290
    %v2329 = vadd.f32 %v2197, %v2293
    %v2330 = vadd.f32 %v2198, %v2295
    %v2331 = vadd.f32 %v2199, %v2298
    %v2332 = vadd.f32 %v2200, %v2300
    %v2333 = vadd.f32 %v2201, %v2303
    %v2334 = vadd.f32 %v2202, %v2305
    %v2335 = vadd.f32 %v2203, %v2308
    %v2336 = vadd.f32 %v2204, %v2310
    %v2337 = vadd.f32 %v2205, %v2313
    %v2338 = vadd.f32 %v2206, %v2315
    %v2339 = vadd.f32 %v2207, %v2318
    %v2340 = vadd.f32 %v2208, %v2320
    %v2341 = vadd.f32 %v2209, %v2323
    %v2342 = vadd.f32 %v2210, %v2325
    %v2343 = vld [vmem:[#allocation2 + $0x2] sm:$0xff]
    %v2344 = vld [vmem:[#allocation2 + $0x12] sm:$0xff]
    %v2345 = vld [vmem:[#allocation2 + $0x22] sm:$0xff]
    %v2346 = vld [vmem:[#allocation2 + $0x32] sm:$0xff]
    %v2347 = vld [vmem:[#allocation2 + $0x42] sm:$0xff]
    %v2348 = vld [vmem:[#allocation2 + $0x52] sm:$0xff]
    %v2349 = vld [vmem:[#allocation2 + $0x62] sm:$0xff]
    %v2350 = vld [vmem:[#allocation2 + $0x72] sm:$0xff]
    %v2351 = vld [vmem:[#allocation2 + $0x82] sm:$0xff]
    %v2352 = vld [vmem:[#allocation2 + $0x92] sm:$0xff]
    %v2353 = vld [vmem:[#allocation2 + $0xa2] sm:$0xff]
    %v2354 = vld [vmem:[#allocation2 + $0xb2] sm:$0xff]
    %v2355 = vld [vmem:[#allocation2 + $0xc2] sm:$0xff]
    %v2356 = vld [vmem:[#allocation2 + $0xd2] sm:$0xff]
    %v2357 = vld [vmem:[#allocation2 + $0xe2] sm:$0xff]
    %v2358 = vld [vmem:[#allocation2 + $0xf2] sm:$0xff]
    %v2359 = vld [vmem:[#allocation2 + $0x102] sm:$0xff]
    %v2360 = vld [vmem:[#allocation2 + $0x112] sm:$0xff]
    %v2361 = vld [vmem:[#allocation2 + $0x122] sm:$0xff]
    %v2362 = vld [vmem:[#allocation2 + $0x132] sm:$0xff]
    %v2363 = vpack.c.bf16 %v2344, %v2343
    %v2364 = vpack.c.bf16 %v2346, %v2345
    %v2365 = vpack.c.bf16 %v2348, %v2347
    %v2366 = vpack.c.bf16 %v2350, %v2349
    %v2367 = vpack.c.bf16 %v2354, %v2353
    %v2368 = vpack.c.bf16 %v2356, %v2355
    %v2369 = vpack.c.bf16 %v2358, %v2357
    %v2370 = vpack.c.bf16 %v2360, %v2359
    %s2371 = scalar_lea.vmem %s4, 128
    %v2372 = vld [vmem:[%s2371] sm:$0xf]
    %v2373 = vld [vmem:[%s2371 + $0x4] sm:$0xf]
    %v2374 = vld [vmem:[%s2371 + $0x8] sm:$0xf]
    %v2375 = vld [vmem:[%s2371 + $0xc] sm:$0xf]
    %v2376 = vld [vmem:[%s2371 + $0x10] sm:$0xf]
    %v2377 = vld [vmem:[%s2371 + $0x14] sm:$0xf]
    %v2378 = vld [vmem:[%s2371 + $0x18] sm:$0xf]
    %v2379 = vld [vmem:[%s2371 + $0x1c] sm:$0xf]
    %v2380 = vld [vmem:[%s2371 + $0x20] sm:$0xf]
    %v2381 = vld [vmem:[%s2371 + $0x24] sm:$0xf]
    %v2382 = vld [vmem:[%s2371 + $0x28] sm:$0xf]
    %v2383 = vld [vmem:[%s2371 + $0x2c] sm:$0xf]
    %v2384 = vld [vmem:[%s2371 + $0x30] sm:$0xf]
    %v2385 = vld [vmem:[%s2371 + $0x34] sm:$0xf]
    %v2386 = vld [vmem:[%s2371 + $0x38] sm:$0xf]
    %v2387 = vld [vmem:[%s2371 + $0x3c] sm:$0xf]
    %v2404 = vunpack.c.l.b16 %v2372
    %v2405 = vunpack.c.l.b16 %v2373
    %v2406 = vunpack.c.l.b16 %v2374
    %v2407 = vunpack.c.l.b16 %v2375
    %v2408 = vunpack.c.l.b16 %v2376
    %v2409 = vunpack.c.l.b16 %v2377
    %v2410 = vunpack.c.l.b16 %v2378
    %v2411 = vunpack.c.l.b16 %v2379
    %v2412 = vunpack.c.l.b16 %v2380
    %v2413 = vunpack.c.l.b16 %v2381
    %v2414 = vunpack.c.l.b16 %v2382
    %v2415 = vunpack.c.l.b16 %v2383
    %v2416 = vunpack.c.l.b16 %v2384
    %v2417 = vunpack.c.l.b16 %v2385
    %v2418 = vunpack.c.l.b16 %v2386
    %v2419 = vunpack.c.l.b16 %v2387
    %v2420 = vpack.c.b16 %v2405, %v2404
    %v2421 = vpack.c.b16 %v2407, %v2406
    %v2422 = vpack.c.b16 %v2409, %v2408
    %v2423 = vpack.c.b16 %v2411, %v2410
    %v2424 = vpack.c.b16 %v2413, %v2412
    %v2425 = vpack.c.b16 %v2415, %v2414
    %v2426 = vpack.c.b16 %v2417, %v2416
    %v2427 = vpack.c.b16 %v2419, %v2418
    %2436 = vmatpush.bf16.msra.mxu0 %v2427
    %2437 = vmatpush.bf16.msra.mxu0 %v2426
    %2438 = vmatpush.bf16.msra.mxu0 %v2425
    %2439 = vmatpush.bf16.msra.mxu0 %v2424
    %2440 = vmatpush.bf16.msra.mxu0 %v2423
    %2441 = vmatpush.bf16.msra.mxu0 %v2422
    %2442 = vmatpush.bf16.msra.mxu0 %v2421
    %2443 = vmatpush.bf16.msra.mxu0 %v2420
    %2444 = vmatmul.bf16.gmra.mxu0 %v2363
    %v2445 = vpop.f32.mrf.mxu0
    %v2446 = vadd.f32 0.0, %v2445
    %v2447 = vpop.f32.mrf.mxu0
    %v2448 = vadd.f32 0.0, %v2447
    %2449 = vmatmul.bf16.gmra.mxu0 %v2364
    %v2450 = vpop.f32.mrf.mxu0
    %v2451 = vadd.f32 0.0, %v2450
    %v2452 = vpop.f32.mrf.mxu0
    %v2453 = vadd.f32 0.0, %v2452
    %2454 = vmatmul.bf16.gmra.mxu0 %v2365
    %v2455 = vpop.f32.mrf.mxu0
    %v2456 = vadd.f32 0.0, %v2455
    %v2457 = vpop.f32.mrf.mxu0
    %v2458 = vadd.f32 0.0, %v2457
    %2459 = vmatmul.bf16.gmra.mxu0 %v2366
    %v2460 = vpop.f32.mrf.mxu0
    %v2461 = vadd.f32 0.0, %v2460
    %v2462 = vpop.f32.mrf.mxu0
    %v2463 = vadd.f32 0.0, %v2462
    %2464 = vmatmul.bf16.gmra.mxu0 %v2367
    %v2465 = vpop.f32.mrf.mxu0
    %v2466 = vadd.f32 0.0, %v2465
    %v2467 = vpop.f32.mrf.mxu0
    %v2468 = vadd.f32 0.0, %v2467
    %2469 = vmatmul.bf16.gmra.mxu0 %v2368
    %v2470 = vpop.f32.mrf.mxu0
    %v2471 = vadd.f32 0.0, %v2470
    %v2472 = vpop.f32.mrf.mxu0
    %v2473 = vadd.f32 0.0, %v2472
    %2474 = vmatmul.bf16.gmra.mxu0 %v2369
    %v2475 = vpop.f32.mrf.mxu0
    %v2476 = vadd.f32 0.0, %v2475
    %v2477 = vpop.f32.mrf.mxu0
    %v2478 = vadd.f32 0.0, %v2477
    %2479 = vmatmul.bf16.gmra.mxu0 %v2370
    %v2480 = vpop.f32.mrf.mxu0
    %v2481 = vadd.f32 0.0, %v2480
    %v2482 = vpop.f32.mrf.mxu0
    %v2483 = vadd.f32 0.0, %v2482
    %2484 = vdwg.mxu0
    %v2485 = vadd.f32 %v2327, %v2446
    %v2486 = vadd.f32 %v2328, %v2448
    %v2487 = vadd.f32 %v2329, %v2451
    %v2488 = vadd.f32 %v2330, %v2453
    %v2489 = vadd.f32 %v2331, %v2456
    %v2490 = vadd.f32 %v2332, %v2458
    %v2491 = vadd.f32 %v2333, %v2461
    %v2492 = vadd.f32 %v2334, %v2463
    %v2493 = vadd.f32 %v2335, %v2466
    %v2494 = vadd.f32 %v2336, %v2468
    %v2495 = vadd.f32 %v2337, %v2471
    %v2496 = vadd.f32 %v2338, %v2473
    %v2497 = vadd.f32 %v2339, %v2476
    %v2498 = vadd.f32 %v2340, %v2478
    %v2499 = vadd.f32 %v2341, %v2481
    %v2500 = vadd.f32 %v2342, %v2483
    %v2501 = vpack.c.bf16 %v2345, %v2344
    %v2502 = vpack.c.bf16 %v2347, %v2346
    %v2503 = vpack.c.bf16 %v2349, %v2348
    %v2504 = vpack.c.bf16 %v2351, %v2350
    %v2505 = vpack.c.bf16 %v2355, %v2354
    %v2506 = vpack.c.bf16 %v2357, %v2356
    %v2507 = vpack.c.bf16 %v2359, %v2358
    %v2508 = vpack.c.bf16 %v2361, %v2360
    %s2509 = scalar_lea.vmem %s4, 320
    %v2510 = vld [vmem:[%s2509] sm:$0xf]
    %v2511 = vld [vmem:[%s2509 + $0x4] sm:$0xf]
    %v2512 = vld [vmem:[%s2509 + $0x8] sm:$0xf]
    %v2513 = vld [vmem:[%s2509 + $0xc] sm:$0xf]
    %v2514 = vld [vmem:[%s2509 + $0x10] sm:$0xf]
    %v2515 = vld [vmem:[%s2509 + $0x14] sm:$0xf]
    %v2516 = vld [vmem:[%s2509 + $0x18] sm:$0xf]
    %v2517 = vld [vmem:[%s2509 + $0x1c] sm:$0xf]
    %v2518 = vld [vmem:[%s2509 + $0x20] sm:$0xf]
    %v2519 = vld [vmem:[%s2509 + $0x24] sm:$0xf]
    %v2520 = vld [vmem:[%s2509 + $0x28] sm:$0xf]
    %v2521 = vld [vmem:[%s2509 + $0x2c] sm:$0xf]
    %v2522 = vld [vmem:[%s2509 + $0x30] sm:$0xf]
    %v2523 = vld [vmem:[%s2509 + $0x34] sm:$0xf]
    %v2524 = vld [vmem:[%s2509 + $0x38] sm:$0xf]
    %v2525 = vld [vmem:[%s2509 + $0x3c] sm:$0xf]
    %v2542 = vunpack.c.l.b16 %v2510
    %v2543 = vunpack.c.l.b16 %v2511
    %v2544 = vunpack.c.l.b16 %v2512
    %v2545 = vunpack.c.l.b16 %v2513
    %v2546 = vunpack.c.l.b16 %v2514
    %v2547 = vunpack.c.l.b16 %v2515
    %v2548 = vunpack.c.l.b16 %v2516
    %v2549 = vunpack.c.l.b16 %v2517
    %v2550 = vunpack.c.l.b16 %v2518
    %v2551 = vunpack.c.l.b16 %v2519
    %v2552 = vunpack.c.l.b16 %v2520
    %v2553 = vunpack.c.l.b16 %v2521
    %v2554 = vunpack.c.l.b16 %v2522
    %v2555 = vunpack.c.l.b16 %v2523
    %v2556 = vunpack.c.l.b16 %v2524
    %v2557 = vunpack.c.l.b16 %v2525
    %v2558 = vpack.c.b16 %v2543, %v2542
    %v2559 = vpack.c.b16 %v2545, %v2544
    %v2560 = vpack.c.b16 %v2547, %v2546
    %v2561 = vpack.c.b16 %v2549, %v2548
    %v2562 = vpack.c.b16 %v2551, %v2550
    %v2563 = vpack.c.b16 %v2553, %v2552
    %v2564 = vpack.c.b16 %v2555, %v2554
    %v2565 = vpack.c.b16 %v2557, %v2556
    %2574 = vmatpush.bf16.msra.mxu0 %v2565
    %2575 = vmatpush.bf16.msra.mxu0 %v2564
    %2576 = vmatpush.bf16.msra.mxu0 %v2563
    %2577 = vmatpush.bf16.msra.mxu0 %v2562
    %2578 = vmatpush.bf16.msra.mxu0 %v2561
    %2579 = vmatpush.bf16.msra.mxu0 %v2560
    %2580 = vmatpush.bf16.msra.mxu0 %v2559
    %2581 = vmatpush.bf16.msra.mxu0 %v2558
    %2582 = vmatmul.bf16.gmra.mxu0 %v2501
    %v2583 = vpop.f32.mrf.mxu0
    %v2584 = vadd.f32 0.0, %v2583
    %v2585 = vpop.f32.mrf.mxu0
    %v2586 = vadd.f32 0.0, %v2585
    %2587 = vmatmul.bf16.gmra.mxu0 %v2502
    %v2588 = vpop.f32.mrf.mxu0
    %v2589 = vadd.f32 0.0, %v2588
    %v2590 = vpop.f32.mrf.mxu0
    %v2591 = vadd.f32 0.0, %v2590
    %2592 = vmatmul.bf16.gmra.mxu0 %v2503
    %v2593 = vpop.f32.mrf.mxu0
    %v2594 = vadd.f32 0.0, %v2593
    %v2595 = vpop.f32.mrf.mxu0
    %v2596 = vadd.f32 0.0, %v2595
    %2597 = vmatmul.bf16.gmra.mxu0 %v2504
    %v2598 = vpop.f32.mrf.mxu0
    %v2599 = vadd.f32 0.0, %v2598
    %v2600 = vpop.f32.mrf.mxu0
    %v2601 = vadd.f32 0.0, %v2600
    %2602 = vmatmul.bf16.gmra.mxu0 %v2505
    %v2603 = vpop.f32.mrf.mxu0
    %v2604 = vadd.f32 0.0, %v2603
    %v2605 = vpop.f32.mrf.mxu0
    %v2606 = vadd.f32 0.0, %v2605
    %2607 = vmatmul.bf16.gmra.mxu0 %v2506
    %v2608 = vpop.f32.mrf.mxu0
    %v2609 = vadd.f32 0.0, %v2608
    %v2610 = vpop.f32.mrf.mxu0
    %v2611 = vadd.f32 0.0, %v2610
    %2612 = vmatmul.bf16.gmra.mxu0 %v2507
    %v2613 = vpop.f32.mrf.mxu0
    %v2614 = vadd.f32 0.0, %v2613
    %v2615 = vpop.f32.mrf.mxu0
    %v2616 = vadd.f32 0.0, %v2615
    %2617 = vmatmul.bf16.gmra.mxu0 %v2508
    %v2618 = vpop.f32.mrf.mxu0
    %v2619 = vadd.f32 0.0, %v2618
    %v2620 = vpop.f32.mrf.mxu0
    %v2621 = vadd.f32 0.0, %v2620
    %2622 = vdwg.mxu0
    %v2623 = vadd.f32 %v2485, %v2584
    %v2624 = vadd.f32 %v2486, %v2586
    %v2625 = vadd.f32 %v2487, %v2589
    %v2626 = vadd.f32 %v2488, %v2591
    %v2627 = vadd.f32 %v2489, %v2594
    %v2628 = vadd.f32 %v2490, %v2596
    %v2629 = vadd.f32 %v2491, %v2599
    %v2630 = vadd.f32 %v2492, %v2601
    %v2631 = vadd.f32 %v2493, %v2604
    %v2632 = vadd.f32 %v2494, %v2606
    %v2633 = vadd.f32 %v2495, %v2609
    %v2634 = vadd.f32 %v2496, %v2611
    %v2635 = vadd.f32 %v2497, %v2614
    %v2636 = vadd.f32 %v2498, %v2616
    %v2637 = vadd.f32 %v2499, %v2619
    %v2638 = vadd.f32 %v2500, %v2621
    %v2639 = vpack.c.bf16 %v2352, %v2351
    %v2640 = vpack.c.bf16 %v2362, %v2361
    %s2641 = scalar_lea.vmem %s4, 512
    %v2642 = vld [vmem:[%s2641] sm:$0xf]
    %v2643 = vld [vmem:[%s2641 + $0x4] sm:$0xf]
    %v2644 = vld [vmem:[%s2641 + $0x8] sm:$0xf]
    %v2645 = vld [vmem:[%s2641 + $0xc] sm:$0xf]
    %v2646 = vld [vmem:[%s2641 + $0x10] sm:$0xf]
    %v2647 = vld [vmem:[%s2641 + $0x14] sm:$0xf]
    %v2648 = vld [vmem:[%s2641 + $0x18] sm:$0xf]
    %v2649 = vld [vmem:[%s2641 + $0x1c] sm:$0xf]
    %v2650 = vld [vmem:[%s2641 + $0x20] sm:$0xf]
    %v2651 = vld [vmem:[%s2641 + $0x24] sm:$0xf]
    %v2652 = vld [vmem:[%s2641 + $0x28] sm:$0xf]
    %v2653 = vld [vmem:[%s2641 + $0x2c] sm:$0xf]
    %v2654 = vld [vmem:[%s2641 + $0x30] sm:$0xf]
    %v2655 = vld [vmem:[%s2641 + $0x34] sm:$0xf]
    %v2656 = vld [vmem:[%s2641 + $0x38] sm:$0xf]
    %v2657 = vld [vmem:[%s2641 + $0x3c] sm:$0xf]
    %v2674 = vunpack.c.l.b16 %v2642
    %v2675 = vunpack.c.l.b16 %v2643
    %v2676 = vunpack.c.l.b16 %v2644
    %v2677 = vunpack.c.l.b16 %v2645
    %v2678 = vunpack.c.l.b16 %v2646
    %v2679 = vunpack.c.l.b16 %v2647
    %v2680 = vunpack.c.l.b16 %v2648
    %v2681 = vunpack.c.l.b16 %v2649
    %v2682 = vunpack.c.l.b16 %v2650
    %v2683 = vunpack.c.l.b16 %v2651
    %v2684 = vunpack.c.l.b16 %v2652
    %v2685 = vunpack.c.l.b16 %v2653
    %v2686 = vunpack.c.l.b16 %v2654
    %v2687 = vunpack.c.l.b16 %v2655
    %v2688 = vunpack.c.l.b16 %v2656
    %v2689 = vunpack.c.l.b16 %v2657
    %v2690 = vpack.c.b16 %v2675, %v2674
    %v2691 = vpack.c.b16 %v2677, %v2676
    %v2692 = vpack.c.b16 %v2679, %v2678
    %v2693 = vpack.c.b16 %v2681, %v2680
    %v2694 = vpack.c.b16 %v2683, %v2682
    %v2695 = vpack.c.b16 %v2685, %v2684
    %v2696 = vpack.c.b16 %v2687, %v2686
    %v2697 = vpack.c.b16 %v2689, %v2688
    %2706 = vmatpush.bf16.msra.mxu0 %v2697
    %2707 = vmatpush.bf16.msra.mxu0 %v2696
    %2708 = vmatpush.bf16.msra.mxu0 %v2695
    %2709 = vmatpush.bf16.msra.mxu0 %v2694
    %2710 = vmatpush.bf16.msra.mxu0 %v2693
    %2711 = vmatpush.bf16.msra.mxu0 %v2692
    %2712 = vmatpush.bf16.msra.mxu0 %v2691
    %2713 = vmatpush.bf16.msra.mxu0 %v2690
    %2714 = vmatmul.bf16.gmra.mxu0 %v2364
    %v2715 = vpop.f32.mrf.mxu0
    %v2716 = vadd.f32 0.0, %v2715
    %v2717 = vpop.f32.mrf.mxu0
    %v2718 = vadd.f32 0.0, %v2717
    %2719 = vmatmul.bf16.gmra.mxu0 %v2365
    %v2720 = vpop.f32.mrf.mxu0
    %v2721 = vadd.f32 0.0, %v2720
    %v2722 = vpop.f32.mrf.mxu0
    %v2723 = vadd.f32 0.0, %v2722
    %2724 = vmatmul.bf16.gmra.mxu0 %v2366
    %v2725 = vpop.f32.mrf.mxu0
    %v2726 = vadd.f32 0.0, %v2725
    %v2727 = vpop.f32.mrf.mxu0
    %v2728 = vadd.f32 0.0, %v2727
    %2729 = vmatmul.bf16.gmra.mxu0 %v2639
    %v2730 = vpop.f32.mrf.mxu0
    %v2731 = vadd.f32 0.0, %v2730
    %v2732 = vpop.f32.mrf.mxu0
    %v2733 = vadd.f32 0.0, %v2732
    %2734 = vmatmul.bf16.gmra.mxu0 %v2368
    %v2735 = vpop.f32.mrf.mxu0
    %v2736 = vadd.f32 0.0, %v2735
    %v2737 = vpop.f32.mrf.mxu0
    %v2738 = vadd.f32 0.0, %v2737
    %2739 = vmatmul.bf16.gmra.mxu0 %v2369
    %v2740 = vpop.f32.mrf.mxu0
    %v2741 = vadd.f32 0.0, %v2740
    %v2742 = vpop.f32.mrf.mxu0
    %v2743 = vadd.f32 0.0, %v2742
    %2744 = vmatmul.bf16.gmra.mxu0 %v2370
    %v2745 = vpop.f32.mrf.mxu0
    %v2746 = vadd.f32 0.0, %v2745
    %v2747 = vpop.f32.mrf.mxu0
    %v2748 = vadd.f32 0.0, %v2747
    %2749 = vmatmul.bf16.gmra.mxu0 %v2640
    %v2750 = vpop.f32.mrf.mxu0
    %v2751 = vadd.f32 0.0, %v2750
    %v2752 = vpop.f32.mrf.mxu0
    %v2753 = vadd.f32 0.0, %v2752
    %2754 = vdwg.mxu0
    %v2755 = vadd.f32 %v2623, %v2716
    %v2756 = vadd.f32 %v2624, %v2718
    %v2757 = vadd.f32 %v2625, %v2721
    %v2758 = vadd.f32 %v2626, %v2723
    %v2759 = vadd.f32 %v2627, %v2726
    %v2760 = vadd.f32 %v2628, %v2728
    %v2761 = vadd.f32 %v2629, %v2731
    %v2762 = vadd.f32 %v2630, %v2733
    %v2763 = vadd.f32 %v2631, %v2736
    %v2764 = vadd.f32 %v2632, %v2738
    %v2765 = vadd.f32 %v2633, %v2741
    %v2766 = vadd.f32 %v2634, %v2743
    %v2767 = vadd.f32 %v2635, %v2746
    %v2768 = vadd.f32 %v2636, %v2748
    %v2769 = vadd.f32 %v2637, %v2751
    %v2770 = vadd.f32 %v2638, %v2753
    %v2771 = vadd.f32 %v2755, %v2763
    %v2772 = vadd.f32 %v2756, %v2764
    %v2773 = vadd.f32 %v2757, %v2765
    %v2774 = vadd.f32 %v2758, %v2766
    %v2775 = vadd.f32 %v2759, %v2767
    %v2776 = vadd.f32 %v2760, %v2768
    %v2777 = vadd.f32 %v2761, %v2769
    %v2778 = vadd.f32 %v2762, %v2770
    %v2779 = vadd.f32 %v2771, %v2772
    %v2780 = vadd.f32 %v2779, %v2773
    %v2781 = vadd.f32 %v2780, %v2774
    %v2782 = vadd.f32 %v2781, %v2775
    %v2783 = vadd.f32 %v2782, %v2776
    %v2784 = vadd.f32 %v2783, %v2777
    %v2785 = vadd.f32 %v2784, %v2778
    %v2786 = vrot.slane %v2785, 4
    %v2787 = vadd.f32 %v2785, %v2786
    %v2788 = vrot.slane %v2787, 2
    %v2789 = vadd.f32 %v2787, %v2788
    %v2790 = vrot.slane %v2789, 1
    %v2791 = vadd.f32 %v2789, %v2790
    %v2792 = vmul.f32 %v2791, %v1378
    %v2793 = vsub.f32 %v2755, %v2792
    %v2794 = vsub.f32 %v2756, %v2792
    %v2795 = vsub.f32 %v2757, %v2792
    %v2796 = vsub.f32 %v2758, %v2792
    %v2797 = vsub.f32 %v2759, %v2792
    %v2798 = vsub.f32 %v2760, %v2792
    %v2799 = vsub.f32 %v2761, %v2792
    %v2800 = vsub.f32 %v2762, %v2792
    %v2801 = vsub.f32 %v2763, %v2792
    %v2802 = vsub.f32 %v2764, %v2792
    %v2803 = vsub.f32 %v2765, %v2792
    %v2804 = vsub.f32 %v2766, %v2792
    %v2805 = vsub.f32 %v2767, %v2792
    %v2806 = vsub.f32 %v2768, %v2792
    %v2807 = vsub.f32 %v2769, %v2792
    %v2808 = vsub.f32 %v2770, %v2792
    %v2809 = vmul.f32 %v2793, %v2793
    %v2810 = vmul.f32 %v2794, %v2794
    %v2811 = vmul.f32 %v2795, %v2795
    %v2812 = vmul.f32 %v2796, %v2796
    %v2813 = vmul.f32 %v2797, %v2797
    %v2814 = vmul.f32 %v2798, %v2798
    %v2815 = vmul.f32 %v2799, %v2799
    %v2816 = vmul.f32 %v2800, %v2800
    %v2817 = vmul.f32 %v2801, %v2801
    %v2818 = vmul.f32 %v2802, %v2802
    %v2819 = vmul.f32 %v2803, %v2803
    %v2820 = vmul.f32 %v2804, %v2804
    %v2821 = vmul.f32 %v2805, %v2805
    %v2822 = vmul.f32 %v2806, %v2806
    %v2823 = vmul.f32 %v2807, %v2807
    %v2824 = vmul.f32 %v2808, %v2808
    %v2825 = vadd.f32 %v2809, %v2817
    %v2826 = vadd.f32 %v2810, %v2818
    %v2827 = vadd.f32 %v2811, %v2819
    %v2828 = vadd.f32 %v2812, %v2820
    %v2829 = vadd.f32 %v2813, %v2821
    %v2830 = vadd.f32 %v2814, %v2822
    %v2831 = vadd.f32 %v2815, %v2823
    %v2832 = vadd.f32 %v2816, %v2824
    %v2833 = vadd.f32 %v2825, %v2826
    %v2834 = vadd.f32 %v2833, %v2827
    %v2835 = vadd.f32 %v2834, %v2828
    %v2836 = vadd.f32 %v2835, %v2829
    %v2837 = vadd.f32 %v2836, %v2830
    %v2838 = vadd.f32 %v2837, %v2831
    %v2839 = vadd.f32 %v2838, %v2832
    %v2840 = vrot.slane %v2839, 4
    %v2841 = vadd.f32 %v2839, %v2840
    %v2842 = vrot.slane %v2841, 2
    %v2843 = vadd.f32 %v2841, %v2842
    %v2844 = vrot.slane %v2843, 1
    %v2845 = vadd.f32 %v2843, %v2844
    %v2846 = vmul.f32 %v2845, %v1378
    %v2847 = vld [vmem:[%s5] sm:$0x1]
    %v2848 = vadd.f32 %v2846, 1e-05
    %v2849 = vrsqrt.pop %v2848
    %v2850 = vmul.f32 %v2849, %v2848
    %v2851 = vmul.f32 %v2850, %v2849
    %v2852 = vmul.f32 0.5, %v2851
    %v2853 = vsub.f32 1.5, %v2852
    %v2854 = vmul.f32 %v2849, %v2853
    %vm2855 = vweird.f32 %v2848
    %vm2856 = vweird.f32 %v2849
    %vm2857 = vmor %vm2855, %vm2856
    %v2858 = vsel %vm2857, %v2849, %v2854
    %v2859 = vmul.f32 %v2847, %v2858
    %v2860 = vld [vmem:[%s6] sm:$0x1]
    %v2861 = vmul.f32 %v2792, %v2859
    %v2862 = vsub.f32 %v2860, %v2861
    %v2864 = vperm.slane %v2859, 0
    %v2866 = vmul.f32 %v2755, %v2864
    %v2867 = vmul.f32 %v2756, %v2864
    %v2868 = vmul.f32 %v2757, %v2864
    %v2869 = vmul.f32 %v2758, %v2864
    %v2870 = vmul.f32 %v2759, %v2864
    %v2871 = vmul.f32 %v2760, %v2864
    %v2872 = vmul.f32 %v2761, %v2864
    %v2873 = vmul.f32 %v2762, %v2864
    %v2874 = vmul.f32 %v2763, %v2864
    %v2875 = vmul.f32 %v2764, %v2864
    %v2876 = vmul.f32 %v2765, %v2864
    %v2877 = vmul.f32 %v2766, %v2864
    %v2878 = vmul.f32 %v2767, %v2864
    %v2879 = vmul.f32 %v2768, %v2864
    %v2880 = vmul.f32 %v2769, %v2864
    %v2881 = vmul.f32 %v2770, %v2864
    %v2883 = vperm.slane %v2862, 0
    %v2885 = vadd.f32 %v2866, %v2883
    %v2886 = vadd.f32 %v2867, %v2883
    %v2887 = vadd.f32 %v2868, %v2883
    %v2888 = vadd.f32 %v2869, %v2883
    %v2889 = vadd.f32 %v2870, %v2883
    %v2890 = vadd.f32 %v2871, %v2883
    %v2891 = vadd.f32 %v2872, %v2883
    %v2892 = vadd.f32 %v2873, %v2883
    %v2893 = vadd.f32 %v2874, %v2883
    %v2894 = vadd.f32 %v2875, %v2883
    %v2895 = vadd.f32 %v2876, %v2883
    %v2896 = vadd.f32 %v2877, %v2883
    %v2897 = vadd.f32 %v2878, %v2883
    %v2898 = vadd.f32 %v2879, %v2883
    %v2899 = vadd.f32 %v2880, %v2883
    %v2900 = vadd.f32 %v2881, %v2883
    %v2901 = vld [vmem:[%s0] sm:$0xff]
    %v2902 = vld [vmem:[%s0 + $0x8] sm:$0xff]
    %v2903 = vld [vmem:[%s0 + $0x10] sm:$0xff]
    %v2904 = vld [vmem:[%s0 + $0x18] sm:$0xff]
    %v2905 = vld [vmem:[%s0 + $0x20] sm:$0xff]
    %v2906 = vld [vmem:[%s0 + $0x28] sm:$0xff]
    %v2907 = vld [vmem:[%s0 + $0x30] sm:$0xff]
    %v2908 = vld [vmem:[%s0 + $0x38] sm:$0xff]
    %v2909 = vld [vmem:[%s0 + $0x40] sm:$0xff]
    %v2910 = vld [vmem:[%s0 + $0x48] sm:$0xff]
    %v2911 = vld [vmem:[%s0 + $0x50] sm:$0xff]
    %v2912 = vld [vmem:[%s0 + $0x58] sm:$0xff]
    %v2913 = vld [vmem:[%s0 + $0x60] sm:$0xff]
    %v2914 = vld [vmem:[%s0 + $0x68] sm:$0xff]
    %v2915 = vld [vmem:[%s0 + $0x70] sm:$0xff]
    %v2916 = vld [vmem:[%s0 + $0x78] sm:$0xff]
    %v2917 = vadd.f32 %v2885, %v2901
    %v2918 = vadd.f32 %v2886, %v2902
    %v2919 = vadd.f32 %v2887, %v2903
    %v2920 = vadd.f32 %v2888, %v2904
    %v2921 = vadd.f32 %v2889, %v2905
    %v2922 = vadd.f32 %v2890, %v2906
    %v2923 = vadd.f32 %v2891, %v2907
    %v2924 = vadd.f32 %v2892, %v2908
    %v2925 = vadd.f32 %v2893, %v2909
    %v2926 = vadd.f32 %v2894, %v2910
    %v2927 = vadd.f32 %v2895, %v2911
    %v2928 = vadd.f32 %v2896, %v2912
    %v2929 = vadd.f32 %v2897, %v2913
    %v2930 = vadd.f32 %v2898, %v2914
    %v2931 = vadd.f32 %v2899, %v2915
    %v2932 = vadd.f32 %v2900, %v2916
    %v2933 = vmax.f32 %v2917, 0.0
    %v2934 = vmax.f32 %v2918, 0.0
    %v2935 = vmax.f32 %v2919, 0.0
    %v2936 = vmax.f32 %v2920, 0.0
    %v2937 = vmax.f32 %v2921, 0.0
    %v2938 = vmax.f32 %v2922, 0.0
    %v2939 = vmax.f32 %v2923, 0.0
    %v2940 = vmax.f32 %v2924, 0.0
    %v2941 = vmax.f32 %v2925, 0.0
    %v2942 = vmax.f32 %v2926, 0.0
    %v2943 = vmax.f32 %v2927, 0.0
    %v2944 = vmax.f32 %v2928, 0.0
    %v2945 = vmax.f32 %v2929, 0.0
    %v2946 = vmax.f32 %v2930, 0.0
    %v2947 = vmax.f32 %v2931, 0.0
    %v2948 = vmax.f32 %v2932, 0.0
    %2949 = vst [vmem:[#allocation3] sm:$0xff] %v2933
    %2950 = vst [vmem:[#allocation3 + $0x8] sm:$0xff] %v2934
    %2951 = vst [vmem:[#allocation3 + $0x10] sm:$0xff] %v2935
    %2952 = vst [vmem:[#allocation3 + $0x18] sm:$0xff] %v2936
    %2953 = vst [vmem:[#allocation3 + $0x20] sm:$0xff] %v2937
    %2954 = vst [vmem:[#allocation3 + $0x28] sm:$0xff] %v2938
    %2955 = vst [vmem:[#allocation3 + $0x30] sm:$0xff] %v2939
    %2956 = vst [vmem:[#allocation3 + $0x38] sm:$0xff] %v2940
    %2957 = vst [vmem:[#allocation3 + $0x40] sm:$0xff] %v2941
    %2958 = vst [vmem:[#allocation3 + $0x48] sm:$0xff] %v2942
    %2959 = vst [vmem:[#allocation3 + $0x50] sm:$0xff] %v2943
    %2960 = vst [vmem:[#allocation3 + $0x58] sm:$0xff] %v2944
    %2961 = vst [vmem:[#allocation3 + $0x60] sm:$0xff] %v2945
    %2962 = vst [vmem:[#allocation3 + $0x68] sm:$0xff] %v2946
    %2963 = vst [vmem:[#allocation3 + $0x70] sm:$0xff] %v2947
    %2964 = vst [vmem:[#allocation3 + $0x78] sm:$0xff] %v2948
    // Predicated region
    $region30: #{basic_block.1} parent=1 // pred_check
      _
    $region31: #{basic_block.1} parent=1 // pred_check_branch
      %2966 = sbr.rel (0) target = $region33
    $region32: #{basic_block.1} parent=1 // pred_region
      %2968 = vsyncadd [#allocation4], 0
      %s2969 = sshll.u32 [#allocation3], 4
      %s2970 = int_to_ptr.vmem [resolvable:$true] %s2969
      %s2971 = sshll.u32 %s7, 4
      %s2972 = int_to_ptr.hbm [resolvable:$true] %s2971
      %2977 = dma.vmem_to_hbm [thread:$0]  %s2970, 2048, %s2972, [#allocation4], 128, 128, 8
    $region33: #{basic_block.1} parent=1 // pred_fallthru
      _
    // Predicated region
    $region34: #{basic_block.1} parent=1 // pred_check
      _
    $region35: #{basic_block.1} parent=1 // pred_check_branch
      %2979 = sbr.rel (0) target = $region37
    $region36: #{basic_block.1} parent=1 // pred_region
      %2981 = dma.done [#allocation4], 2048
    $region37: #{basic_block.1} parent=1 // pred_fallthru
      _
    %2982 = vsyncpa [#allocation4], 1

</llo_original>
